<compile_context>
chip_gen: v6e
topology: v6e:2x2x1
jax: 0.10.0
libtpu: 0.0.40
codegen_flags: <defaults>
</compile_context>

<pallas_src>
import jax
import jax.numpy as jnp
from jax.experimental import pallas as pl
from jax.experimental.pallas import tpu as pltpu

NUM_POKEMON_PER_TEAM = 6
MAX_MOVES = 4
INPUT_SIZE = NUM_POKEMON_PER_TEAM * NUM_POKEMON_PER_TEAM * MAX_MOVES  # 144
HIDDEN = 4
NUM_CLASSES = MAX_MOVES

# Small-parameter slab: (4, 17) f32, columns:
#   0      : b1
#   1:5    : W2 (out, in)
#   5      : b2
#   6:10   : W3
#   10     : b3
#   11:15  : W4
#   15     : b4
#   16     : legal-move mask (filled per call from num_moves)
SLAB_COLS = 17
_C_B1, _C_W2, _C_B2, _C_W3, _C_B3, _C_W4, _C_B4, _C_MASK = 0, 1, 5, 6, 10, 11, 15, 16


def _dense_small_t(h, w, b):
    """(W @ h + b) on the VPU, transposed layout.

    h: (4, Bt) activations, samples on lanes.
    w: (4, 4) torch layout (out, in).
    b: (4, 1) bias column.
    """
    out = b + w[:, 0:1] * h[0:1, :]
    out = out + w[:, 1:2] * h[1:2, :]
    out = out + w[:, 2:3] * h[2:3, :]
    out = out + w[:, 3:4] * h[3:4, :]
    return out


def _fennekin_kernel(x_ref,      # VMEM (Bt, 144)
                     w1t_ref,    # VMEM (144, 4)   W1 pre-transposed
                     slab_ref,   # VMEM (4, 17)    small params + mask column
                     o_ref):     # VMEM (4, Bt)    transposed, lane-dense
    x = x_ref[...]                                   # (Bt, 144)
    w1t = w1t_ref[...]                               # (144, 4)
    slab = slab_ref[...]                             # (4, 17)

    # Layer 1 on the MXU: plain [M,K]@[K,N] -> no transpose of the big x block.
    h_bt = jnp.dot(x, w1t, preferred_element_type=jnp.float32)   # (Bt, 4)

    # Transpose only the tiny activation into lane-dense (classes, samples).
    h = h_bt.T                                        # (4, Bt)
    h = jax.nn.sigmoid(h + slab[:, _C_B1:_C_B1 + 1])

    # Hidden 4x4 layers stay on the VPU (broadcast multiply-adds).
    h = jax.nn.sigmoid(_dense_small_t(h, slab[:, _C_W2:_C_W2 + 4],
                                      slab[:, _C_B2:_C_B2 + 1]))
    h = jax.nn.sigmoid(_dense_small_t(h, slab[:, _C_W3:_C_W3 + 4],
                                      slab[:, _C_B3:_C_B3 + 1]))
    logits = _dense_small_t(h, slab[:, _C_W4:_C_W4 + 4],
                            slab[:, _C_B4:_C_B4 + 1])              # (4, Bt)

    # Softmax over the class axis (== torch Softmax(dim=0) on the 1-D pred).
    m = jnp.max(logits, axis=0, keepdims=True)
    e = jnp.exp(logits - m)
    probs = e / jnp.sum(e, axis=0, keepdims=True)

    # Legal-move mask (applied after softmax, no renorm — matches the spec).
    o_ref[...] = probs * slab[:, _C_MASK:_C_MASK + 1]


def _round_up(v, m):
    return ((v + m - 1) // m) * m


def fennekin_forward(x, packed_params, num_moves, *, batch_tile=None):
    """Forward pass.

    x: (6, 6, 4) / (144,) single sample, or (B, 6, 6, 4) / (B, 144) batch.
    packed_params: (w1t, slab) from pack_params().
    num_moves: python int / int32 scalar (stand-in for len(get_possible_moves(active))).
    Returns (4,) for a single sample or (B, 4) for a batch.
    """
    w1t, slab_base = packed_params
    x = jnp.asarray(x, jnp.float32)
    single = x.ndim in (1, 3)
    xb = x.reshape(1, INPUT_SIZE) if single else x.reshape(x.shape[0], INPUT_SIZE)
    b = xb.shape[0]

    if batch_tile is None:
        # Big enough to amortize per-step overhead / be HBM-bound, small enough
        # for every generation's default scoped VMEM, and (when the batch
        # allows) >=2 grid steps so v7x can use both TensorCores.
        half = _round_up(pl.cdiv(b, 2), 128)
        batch_tile = max(128, min(2048, half))
    bt = batch_tile

    b_pad = _round_up(b, bt)
    if b_pad != b:
        xb = jnp.pad(xb, ((0, b_pad - b), (0, 0)))

    # Bake the legal-move mask into the slab's last column.
    mask = (jnp.arange(NUM_CLASSES) < num_moves).astype(jnp.float32)
    slab = slab_base.at[:, _C_MASK].set(mask)

    # Raise the scoped-VMEM limit only for very large (v7x-style) tiles;
    # the x block pads 144 -> 256 lanes and is double-buffered.
    vmem_limit = None
    if bt > 2048:
        vmem_limit = int(2 * bt * 256 * 4 + (4 << 20))

    out_t = pl.pallas_call(
        _fennekin_kernel,
        out_shape=jax.ShapeDtypeStruct((NUM_CLASSES, b_pad), jnp.float32),
        grid_spec=pltpu.PrefetchScalarGridSpec(
            num_scalar_prefetch=0,
            grid=(b_pad // bt,),
            in_specs=[
                pl.BlockSpec((bt, INPUT_SIZE), lambda i: (i, 0)),
                # Resident parameter operands (constant index_map).
                pl.BlockSpec((INPUT_SIZE, HIDDEN), lambda i: (0, 0)),
                pl.BlockSpec((HIDDEN, SLAB_COLS), lambda i: (0, 0)),
            ],
            out_specs=pl.BlockSpec((NUM_CLASSES, bt), lambda i: (0, i)),
        ),
        compiler_params=pltpu.CompilerParams(
            dimension_semantics=("parallel",),
            vmem_limit_bytes=vmem_limit),
    )(xb, w1t, slab)

    out = out_t[:, :b].T                      # (B, 4)
    return out[0] if single else out


def init_params(key):
    """Deterministic params in torch nn.Linear layout: W (out, in), b (out,)."""
    ks = jax.random.split(key, 8)

    def lin(kw, kb, fan_in, fan_out):
        bound = 1.0 / jnp.sqrt(jnp.asarray(fan_in, jnp.float32))
        w = jax.random.uniform(kw, (fan_out, fan_in), jnp.float32, -bound, bound)
        b = jax.random.uniform(kb, (fan_out,), jnp.float32, -bound, bound)
        return w, b

    W1, b1 = lin(ks[0], ks[1], INPUT_SIZE, HIDDEN)
    W2, b2 = lin(ks[2], ks[3], HIDDEN, HIDDEN)
    W3, b3 = lin(ks[4], ks[5], HIDDEN, HIDDEN)
    W4, b4 = lin(ks[6], ks[7], HIDDEN, NUM_CLASSES)
    return {"W1": W1, "b1": b1, "W2": W2, "b2": b2,
            "W3": W3, "b3": b3, "W4": W4, "b4": b4}


def pack_params(p):
    """Pack params: W1 pre-transposed (144,4) + a (4,17) small-layer slab."""
    w1t = jnp.asarray(p["W1"], jnp.float32).T               # (144, 4)
    slab = jnp.zeros((HIDDEN, SLAB_COLS), jnp.float32)
    slab = slab.at[:, _C_B1].set(p["b1"])
    slab = slab.at[:, _C_W2:_C_W2 + 4].set(p["W2"])
    slab = slab.at[:, _C_B2].set(p["b2"])
    slab = slab.at[:, _C_W3:_C_W3 + 4].set(p["W3"])
    slab = slab.at[:, _C_B3].set(p["b3"])
    slab = slab.at[:, _C_W4:_C_W4 + 4].set(p["W4"])
    slab = slab.at[:, _C_B4].set(p["b4"])
    return w1t, slab


def _reference(xb, p, num_moves):
    """Pure-JAX reference matching the torch module, batched over rows of xb."""
    h = jax.nn.sigmoid(xb @ p["W1"].T + p["b1"])
    h = jax.nn.sigmoid(h @ p["W2"].T + p["b2"])
    h = jax.nn.sigmoid(h @ p["W3"].T + p["b3"])
    logits = h @ p["W4"].T + p["b4"]
    probs = jax.nn.softmax(logits, axis=-1)
    mask = (jnp.arange(NUM_CLASSES) < num_moves).astype(jnp.float32)
    return probs * mask


if __name__ == "__main__":
    key = jax.random.PRNGKey(0)
    kx, kp = jax.random.split(key)

    # Big enough that the auto tile picker lands on the recommended 2048-row
    # tile with 2 grid steps (one per TensorCore on v7x); still only ~2.3 MB.
    B = 4096
    x = jax.random.normal(
        kx, (B, NUM_POKEMON_PER_TEAM, NUM_POKEMON_PER_TEAM, MAX_MOVES), jnp.float32)
    params = init_params(kp)
    packed = pack_params(params)

    num_moves = 3  # deterministic stand-in for len(get_possible_moves(active))
    # TODO(synk): the POKEDEX lookup in get_possible_moves has no tensor/Pallas
    # equivalent; the resulting move count is passed in as a scalar.

    # Batched forward (auto batch_tile -> 2048, 2 grid steps).
    pred = fennekin_forward(x, packed, num_moves)
    pred = jax.block_until_ready(pred)
    ref = _reference(x.reshape(B, INPUT_SIZE), params, num_moves)
    assert pred.shape == (B, MAX_MOVES)
    assert jnp.allclose(pred, ref, atol=1e-5, rtol=1e-4), \
        float(jnp.max(jnp.abs(pred - ref)))

    # Single-sample path (mirrors the torch forward(active, x) signature).
    pred1 = fennekin_forward(x[0], packed, num_moves)
    pred1 = jax.block_until_ready(pred1)
    assert pred1.shape == (MAX_MOVES,)
    assert jnp.allclose(pred1, ref[0], atol=1e-5, rtol=1e-4)

    print("KERNEL_OK")
</pallas_src>

<mosaic_0001>
module attributes {stable_mosaic.version = 11 : i64} {
  func.func @_fennekin_kernel(%arg0: i32, %arg1: memref<2048x144xf32, #tpu.memory_space<vmem>>, %arg2: memref<144x4xf32, #tpu.memory_space<vmem>>, %arg3: memref<4x17xf32, #tpu.memory_space<vmem>>, %arg4: memref<4x2048xf32, #tpu.memory_space<vmem>>) attributes {dimension_semantics = [#tpu.dimension_semantics<parallel>], iteration_bounds = array<i64: 2>, scalar_prefetch = 0 : i64, scratch_operands = 0 : i64, tpu.core_type = #tpu.core_type<tc>, window_params = [{transform_indices = @transform_0, window_bounds = array<i64: 2048, 144>}, {pipeline_mode = #tpu.pipeline_mode<synchronous>, transform_indices = @transform_1, window_bounds = array<i64: 144, 4>}, {pipeline_mode = #tpu.pipeline_mode<synchronous>, transform_indices = @transform_2, window_bounds = array<i64: 4, 17>}, {transform_indices = @transform_3, window_bounds = array<i64: 4, 2048>}]} {
    %c0 = arith.constant 0 : index
    %c0_0 = arith.constant 0 : index
    %0 = vector.load %arg1[%c0, %c0_0] : memref<2048x144xf32, #tpu.memory_space<vmem>>, vector<2048x144xf32>
    %c0_1 = arith.constant 0 : index
    %c0_2 = arith.constant 0 : index
    %1 = vector.load %arg2[%c0_1, %c0_2] : memref<144x4xf32, #tpu.memory_space<vmem>>, vector<144x4xf32>
    %c0_3 = arith.constant 0 : index
    %c0_4 = arith.constant 0 : index
    %2 = vector.load %arg3[%c0_3, %c0_4] : memref<4x17xf32, #tpu.memory_space<vmem>>, vector<4x17xf32>
    %cst = arith.constant dense<0.000000e+00> : vector<2048x4xf32>
    %3 = tpu.matmul %0, %1, %cst {dimension_numbers = #tpu.dot_dimension_numbers<[1], [0], [0], [1], [0, 0, 1, 1], [], []>} : vector<2048x144xf32>, vector<144x4xf32>, vector<2048x4xf32> -> vector<2048x4xf32>
    %4 = tpu.transpose %3, [1, 0] : vector<2048x4xf32> -> vector<4x2048xf32>
    %5 = vector.extract_strided_slice %2 {offsets = [0, 0], sizes = [4, 1], strides = [1, 1]} : vector<4x17xf32> to vector<4x1xf32>
    %6 = vector.broadcast %5 : vector<4x1xf32> to vector<4x2048xf32>
    %7 = arith.addf %4, %6 : vector<4x2048xf32>
    %8 = arith.negf %7 : vector<4x2048xf32>
    %9 = math.exp %8 : vector<4x2048xf32>
    %cst_5 = arith.constant 1.000000e+00 : f32
    %10 = vector.broadcast %cst_5 : f32 to vector<4x2048xf32>
    %11 = arith.addf %10, %9 : vector<4x2048xf32>
    %12 = arith.divf %10, %11 : vector<4x2048xf32>
    %13 = vector.extract_strided_slice %2 {offsets = [0, 1], sizes = [4, 4], strides = [1, 1]} : vector<4x17xf32> to vector<4x4xf32>
    %14 = vector.extract_strided_slice %2 {offsets = [0, 5], sizes = [4, 1], strides = [1, 1]} : vector<4x17xf32> to vector<4x1xf32>
    %15 = vector.extract_strided_slice %13 {offsets = [0, 0], sizes = [4, 1], strides = [1, 1]} : vector<4x4xf32> to vector<4x1xf32>
    %16 = vector.extract_strided_slice %12 {offsets = [0, 0], sizes = [1, 2048], strides = [1, 1]} : vector<4x2048xf32> to vector<1x2048xf32>
    %17 = vector.broadcast %15 : vector<4x1xf32> to vector<4x2048xf32>
    %18 = vector.broadcast %16 : vector<1x2048xf32> to vector<4x2048xf32>
    %19 = arith.mulf %17, %18 : vector<4x2048xf32>
    %20 = vector.broadcast %14 : vector<4x1xf32> to vector<4x2048xf32>
    %21 = arith.addf %20, %19 : vector<4x2048xf32>
    %22 = vector.extract_strided_slice %13 {offsets = [0, 1], sizes = [4, 1], strides = [1, 1]} : vector<4x4xf32> to vector<4x1xf32>
    %23 = vector.extract_strided_slice %12 {offsets = [1, 0], sizes = [1, 2048], strides = [1, 1]} : vector<4x2048xf32> to vector<1x2048xf32>
    %24 = vector.broadcast %22 : vector<4x1xf32> to vector<4x2048xf32>
    %25 = vector.broadcast %23 : vector<1x2048xf32> to vector<4x2048xf32>
    %26 = arith.mulf %24, %25 : vector<4x2048xf32>
    %27 = arith.addf %21, %26 : vector<4x2048xf32>
    %28 = vector.extract_strided_slice %13 {offsets = [0, 2], sizes = [4, 1], strides = [1, 1]} : vector<4x4xf32> to vector<4x1xf32>
    %29 = vector.extract_strided_slice %12 {offsets = [2, 0], sizes = [1, 2048], strides = [1, 1]} : vector<4x2048xf32> to vector<1x2048xf32>
    %30 = vector.broadcast %28 : vector<4x1xf32> to vector<4x2048xf32>
    %31 = vector.broadcast %29 : vector<1x2048xf32> to vector<4x2048xf32>
    %32 = arith.mulf %30, %31 : vector<4x2048xf32>
    %33 = arith.addf %27, %32 : vector<4x2048xf32>
    %34 = vector.extract_strided_slice %13 {offsets = [0, 3], sizes = [4, 1], strides = [1, 1]} : vector<4x4xf32> to vector<4x1xf32>
    %35 = vector.extract_strided_slice %12 {offsets = [3, 0], sizes = [1, 2048], strides = [1, 1]} : vector<4x2048xf32> to vector<1x2048xf32>
    %36 = vector.broadcast %34 : vector<4x1xf32> to vector<4x2048xf32>
    %37 = vector.broadcast %35 : vector<1x2048xf32> to vector<4x2048xf32>
    %38 = arith.mulf %36, %37 : vector<4x2048xf32>
    %39 = arith.addf %33, %38 : vector<4x2048xf32>
    %40 = arith.negf %39 : vector<4x2048xf32>
    %41 = math.exp %40 : vector<4x2048xf32>
    %cst_6 = arith.constant 1.000000e+00 : f32
    %42 = vector.broadcast %cst_6 : f32 to vector<4x2048xf32>
    %43 = arith.addf %42, %41 : vector<4x2048xf32>
    %44 = arith.divf %42, %43 : vector<4x2048xf32>
    %45 = vector.extract_strided_slice %2 {offsets = [0, 6], sizes = [4, 4], strides = [1, 1]} : vector<4x17xf32> to vector<4x4xf32>
    %46 = vector.extract_strided_slice %2 {offsets = [0, 10], sizes = [4, 1], strides = [1, 1]} : vector<4x17xf32> to vector<4x1xf32>
    %47 = vector.extract_strided_slice %45 {offsets = [0, 0], sizes = [4, 1], strides = [1, 1]} : vector<4x4xf32> to vector<4x1xf32>
    %48 = vector.extract_strided_slice %44 {offsets = [0, 0], sizes = [1, 2048], strides = [1, 1]} : vector<4x2048xf32> to vector<1x2048xf32>
    %49 = vector.broadcast %47 : vector<4x1xf32> to vector<4x2048xf32>
    %50 = vector.broadcast %48 : vector<1x2048xf32> to vector<4x2048xf32>
    %51 = arith.mulf %49, %50 : vector<4x2048xf32>
    %52 = vector.broadcast %46 : vector<4x1xf32> to vector<4x2048xf32>
    %53 = arith.addf %52, %51 : vector<4x2048xf32>
    %54 = vector.extract_strided_slice %45 {offsets = [0, 1], sizes = [4, 1], strides = [1, 1]} : vector<4x4xf32> to vector<4x1xf32>
    %55 = vector.extract_strided_slice %44 {offsets = [1, 0], sizes = [1, 2048], strides = [1, 1]} : vector<4x2048xf32> to vector<1x2048xf32>
    %56 = vector.broadcast %54 : vector<4x1xf32> to vector<4x2048xf32>
    %57 = vector.broadcast %55 : vector<1x2048xf32> to vector<4x2048xf32>
    %58 = arith.mulf %56, %57 : vector<4x2048xf32>
    %59 = arith.addf %53, %58 : vector<4x2048xf32>
    %60 = vector.extract_strided_slice %45 {offsets = [0, 2], sizes = [4, 1], strides = [1, 1]} : vector<4x4xf32> to vector<4x1xf32>
    %61 = vector.extract_strided_slice %44 {offsets = [2, 0], sizes = [1, 2048], strides = [1, 1]} : vector<4x2048xf32> to vector<1x2048xf32>
    %62 = vector.broadcast %60 : vector<4x1xf32> to vector<4x2048xf32>
    %63 = vector.broadcast %61 : vector<1x2048xf32> to vector<4x2048xf32>
    %64 = arith.mulf %62, %63 : vector<4x2048xf32>
    %65 = arith.addf %59, %64 : vector<4x2048xf32>
    %66 = vector.extract_strided_slice %45 {offsets = [0, 3], sizes = [4, 1], strides = [1, 1]} : vector<4x4xf32> to vector<4x1xf32>
    %67 = vector.extract_strided_slice %44 {offsets = [3, 0], sizes = [1, 2048], strides = [1, 1]} : vector<4x2048xf32> to vector<1x2048xf32>
    %68 = vector.broadcast %66 : vector<4x1xf32> to vector<4x2048xf32>
    %69 = vector.broadcast %67 : vector<1x2048xf32> to vector<4x2048xf32>
    %70 = arith.mulf %68, %69 : vector<4x2048xf32>
    %71 = arith.addf %65, %70 : vector<4x2048xf32>
    %72 = arith.negf %71 : vector<4x2048xf32>
    %73 = math.exp %72 : vector<4x2048xf32>
    %cst_7 = arith.constant 1.000000e+00 : f32
    %74 = vector.broadcast %cst_7 : f32 to vector<4x2048xf32>
    %75 = arith.addf %74, %73 : vector<4x2048xf32>
    %76 = arith.divf %74, %75 : vector<4x2048xf32>
    %77 = vector.extract_strided_slice %2 {offsets = [0, 11], sizes = [4, 4], strides = [1, 1]} : vector<4x17xf32> to vector<4x4xf32>
    %78 = vector.extract_strided_slice %2 {offsets = [0, 15], sizes = [4, 1], strides = [1, 1]} : vector<4x17xf32> to vector<4x1xf32>
    %79 = vector.extract_strided_slice %77 {offsets = [0, 0], sizes = [4, 1], strides = [1, 1]} : vector<4x4xf32> to vector<4x1xf32>
    %80 = vector.extract_strided_slice %76 {offsets = [0, 0], sizes = [1, 2048], strides = [1, 1]} : vector<4x2048xf32> to vector<1x2048xf32>
    %81 = vector.broadcast %79 : vector<4x1xf32> to vector<4x2048xf32>
    %82 = vector.broadcast %80 : vector<1x2048xf32> to vector<4x2048xf32>
    %83 = arith.mulf %81, %82 : vector<4x2048xf32>
    %84 = vector.broadcast %78 : vector<4x1xf32> to vector<4x2048xf32>
    %85 = arith.addf %84, %83 : vector<4x2048xf32>
    %86 = vector.extract_strided_slice %77 {offsets = [0, 1], sizes = [4, 1], strides = [1, 1]} : vector<4x4xf32> to vector<4x1xf32>
    %87 = vector.extract_strided_slice %76 {offsets = [1, 0], sizes = [1, 2048], strides = [1, 1]} : vector<4x2048xf32> to vector<1x2048xf32>
    %88 = vector.broadcast %86 : vector<4x1xf32> to vector<4x2048xf32>
    %89 = vector.broadcast %87 : vector<1x2048xf32> to vector<4x2048xf32>
    %90 = arith.mulf %88, %89 : vector<4x2048xf32>
    %91 = arith.addf %85, %90 : vector<4x2048xf32>
    %92 = vector.extract_strided_slice %77 {offsets = [0, 2], sizes = [4, 1], strides = [1, 1]} : vector<4x4xf32> to vector<4x1xf32>
    %93 = vector.extract_strided_slice %76 {offsets = [2, 0], sizes = [1, 2048], strides = [1, 1]} : vector<4x2048xf32> to vector<1x2048xf32>
    %94 = vector.broadcast %92 : vector<4x1xf32> to vector<4x2048xf32>
    %95 = vector.broadcast %93 : vector<1x2048xf32> to vector<4x2048xf32>
    %96 = arith.mulf %94, %95 : vector<4x2048xf32>
    %97 = arith.addf %91, %96 : vector<4x2048xf32>
    %98 = vector.extract_strided_slice %77 {offsets = [0, 3], sizes = [4, 1], strides = [1, 1]} : vector<4x4xf32> to vector<4x1xf32>
    %99 = vector.extract_strided_slice %76 {offsets = [3, 0], sizes = [1, 2048], strides = [1, 1]} : vector<4x2048xf32> to vector<1x2048xf32>
    %100 = vector.broadcast %98 : vector<4x1xf32> to vector<4x2048xf32>
    %101 = vector.broadcast %99 : vector<1x2048xf32> to vector<4x2048xf32>
    %102 = arith.mulf %100, %101 : vector<4x2048xf32>
    %103 = arith.addf %97, %102 : vector<4x2048xf32>
    %cst_8 = arith.constant dense<0xFF800000> : vector<2048xf32>
    %104 = vector.multi_reduction <maximumf>, %103, %cst_8 [0] : vector<4x2048xf32> to vector<2048xf32>
    %105 = vector.shape_cast %104 : vector<2048xf32> to vector<1x2048xf32>
    %106 = vector.broadcast %105 : vector<1x2048xf32> to vector<4x2048xf32>
    %107 = arith.subf %103, %106 : vector<4x2048xf32>
    %108 = math.exp %107 : vector<4x2048xf32>
    %cst_9 = arith.constant dense<0.000000e+00> : vector<2048xf32>
    %109 = vector.multi_reduction <add>, %108, %cst_9 [0] : vector<4x2048xf32> to vector<2048xf32>
    %110 = vector.shape_cast %109 : vector<2048xf32> to vector<1x2048xf32>
    %111 = vector.broadcast %110 : vector<1x2048xf32> to vector<4x2048xf32>
    %112 = arith.divf %108, %111 : vector<4x2048xf32>
    %113 = vector.extract_strided_slice %2 {offsets = [0, 16], sizes = [4, 1], strides = [1, 1]} : vector<4x17xf32> to vector<4x1xf32>
    %114 = vector.broadcast %113 : vector<4x1xf32> to vector<4x2048xf32>
    %115 = arith.mulf %112, %114 : vector<4x2048xf32>
    %c0_10 = arith.constant 0 : index
    %c0_11 = arith.constant 0 : index
    %116 = vector.load %arg4[%c0_10, %c0_11] : memref<4x2048xf32, #tpu.memory_space<vmem>>, vector<4x2048xf32>
    tpu.vector_store %arg4[%c0_10, %c0_11], %115 {strides = array<i32>} : memref<4x2048xf32, #tpu.memory_space<vmem>>, vector<4x2048xf32>,
    return
  }
  func.func @transform_0(%arg0: i32) -> (i32, i32) {
    %c0_i32 = arith.constant 0 : i32
    %c0_i32_0 = arith.constant 0 : i32
    return %arg0, %c0_i32 : i32, i32
  }
  func.func @transform_1(%arg0: i32) -> (i32, i32) {
    %c0_i32 = arith.constant 0 : i32
    %c0_i32_0 = arith.constant 0 : i32
    %c0_i32_1 = arith.constant 0 : i32
    return %c0_i32, %c0_i32_0 : i32, i32
  }
  func.func @transform_2(%arg0: i32) -> (i32, i32) {
    %c0_i32 = arith.constant 0 : i32
    %c0_i32_0 = arith.constant 0 : i32
    %c0_i32_1 = arith.constant 0 : i32
    return %c0_i32, %c0_i32_0 : i32, i32
  }
  func.func @transform_3(%arg0: i32) -> (i32, i32) {
    %c0_i32 = arith.constant 0 : i32
    %c0_i32_0 = arith.constant 0 : i32
    return %c0_i32, %arg0 : i32, i32
  }
}

</mosaic_0001>

<llo_original>
// kernel: tpu_custom_call.1
$region0: #{tpu_custom_call.1}
  #allocation0 [shape = 'u32[]', space=smem, size = 0x4, offset = 0x4, fixed_abs, tag = 'smem constant byte address 0x4 - core index']
  #allocation1 [shape = 'u32[144,128]{1,0:T(1,128)}', space=vmem, size = 0x12000, scoped, tag = 'internal scratch']
  %s0 = inlined_call_operand.vmem [shape: f32[4096,144], index: 0, kind: input, shape index: {}]
  %s1 = inlined_call_operand.vmem [shape: f32[144,4], index: 1, kind: input, shape index: {}]
  %s2 = inlined_call_operand.vmem [shape: f32[4,17], index: 2, kind: input, shape index: {}]
  %s3 = inlined_call_operand.hbm [shape: f32[4,4096], index: 3, kind: output, shape index: {}]
  %s4 = sld [smem:[#allocation0]]
  $region45: #{tpu_custom_call.1} parent=0
    _
  %s6 = ssub.s32 1, %s4
  %s7 = scalar_select 0, %s6, %s4
  $region1: #{tpu_custom_call.1} parent=0
    #allocation2 [shape = 'u8[65536]{0}', space=vmem, size = 0x10000, scoped, tag = 'output window, operand 0']
    #allocation3 [shape = 's32[2]{0}', space=sflag, size = 0x8, scoped, tag = 'scoped memory for tpu_custom_call.1']
    %8 = vsyncpa [#allocation3], 0
    %s9 = scalar_lea.sflag [#allocation3], 1
    %10 = vsyncpa %s9, 0
    loop: start=0, step=1, limit=4
    $region2: #{tpu_custom_call.1} parent=1 // loop_pre_header
      _
    $region3: #{tpu_custom_call.1} parent=1 // loop_header
      %s12 = sphi 0, %s16
      %p13 = scmp.ge.s32.totalorder %s12, 4
      %s22 = sphi 0, %s24
      %s25 = sphi 0, %s22
      %s26 = sphi 0, %s25
      %s42 = sphi 0, %s26
      %s46 = sphi 0, %s46
      %s48 = sphi 0, %s46
      %s49 = sphi 0, %s48
      %s63 = sphi 0, %s49
      %s67 = sphi 0, %s67
      %s69 = sphi 0, %s67
      %s70 = sphi 0, %s69
      %s84 = sphi 0, %s70
      %s90 = sphi 0, %s92
      %s93 = sphi 0, %s90
      %s94 = sphi 0, %s93
      %s110 = sphi 0, %s94
    $region4: #{tpu_custom_call.1} parent=1 // loop_header_branch
      %15 = sbr.rel (%p13) target = $region8
    $region5: #{tpu_custom_call.1} parent=1 // loop_body
      %s17 = ssub.s32 %s12, 1
      %s18 = ssub.s32 %s12, 2
      %s19 = sadd.s32 %s12, 1
      %s20 = ssub.s32 %s12, %s19
      %p21 = scmp.eq.s32.totalorder %s20, 0
      %s23 = sadd.s32 %s22, 1
      %s24 = scalar_select %p21, %s22, %s23
      %p27 = pneg %p21
      %p28 = scmp.eq.s32.totalorder %s12, 1
      %p29 = por %p27, %p28
      %p30 = scmp.ne.s32.totalorder %s22, %s25
      %p31 = scmp.eq.s32.totalorder %s12, 0
      %p32 = por %p30, %p31
      %p33 = scmp.ne.s32.totalorder %s22, %s25
      %p34 = scmp.eq.s32.totalorder %s17, 1
      %p35 = por %p33, %p34
      %p36 = scmp.ne.s32.totalorder %s25, %s26
      %p37 = scmp.eq.s32.totalorder %s17, 0
      %p38 = por %p36, %p37
      %p39 = scmp.ne.s32.totalorder %s25, %s26
      %p40 = scmp.eq.s32.totalorder %s18, 1
      %p41 = por %p39, %p40
      %p43 = scmp.ne.s32.totalorder %s26, %s42
      %p44 = scmp.eq.s32.totalorder %s18, 0
      %p45 = por %p43, %p44
      %s47 = sadd.s32 %s46, 1
      %p50 = scmp.eq.s32.totalorder %s12, 1
      %p51 = scmp.ne.s32.totalorder %s46, %s48
      %p52 = scmp.eq.s32.totalorder %s12, 0
      %p53 = por %p51, %p52
      %p54 = scmp.ne.s32.totalorder %s46, %s48
      %p55 = scmp.eq.s32.totalorder %s17, 1
      %p56 = por %p54, %p55
      %p57 = scmp.ne.s32.totalorder %s48, %s49
      %p58 = scmp.eq.s32.totalorder %s17, 0
      %p59 = por %p57, %p58
      %p60 = scmp.ne.s32.totalorder %s48, %s49
      %p61 = scmp.eq.s32.totalorder %s18, 1
      %p62 = por %p60, %p61
      %p64 = scmp.ne.s32.totalorder %s49, %s63
      %p65 = scmp.eq.s32.totalorder %s18, 0
      %p66 = por %p64, %p65
      %s68 = sadd.s32 %s67, 1
      %p71 = scmp.eq.s32.totalorder %s12, 1
      %p72 = scmp.ne.s32.totalorder %s67, %s69
      %p73 = scmp.eq.s32.totalorder %s12, 0
      %p74 = por %p72, %p73
      %p75 = scmp.ne.s32.totalorder %s67, %s69
      %p76 = scmp.eq.s32.totalorder %s17, 1
      %p77 = por %p75, %p76
      %p78 = scmp.ne.s32.totalorder %s69, %s70
      %p79 = scmp.eq.s32.totalorder %s17, 0
      %p80 = por %p78, %p79
      %p81 = scmp.ne.s32.totalorder %s69, %s70
      %p82 = scmp.eq.s32.totalorder %s18, 1
      %p83 = por %p81, %p82
      %p85 = scmp.ne.s32.totalorder %s70, %s84
      %p86 = scmp.eq.s32.totalorder %s18, 0
      %p87 = por %p85, %p86
      %s88 = ssub.s32 %s12, %s19
      %p89 = scmp.eq.s32.totalorder %s88, 0
      %s91 = sadd.s32 %s90, 1
      %s92 = scalar_select %p89, %s90, %s91
      %p95 = pneg %p89
      %p96 = scmp.eq.s32.totalorder %s12, 1
      %p97 = por %p95, %p96
      %p98 = scmp.ne.s32.totalorder %s90, %s93
      %p99 = scmp.eq.s32.totalorder %s12, 0
      %p100 = por %p98, %p99
      %p101 = scmp.ne.s32.totalorder %s90, %s93
      %p102 = scmp.eq.s32.totalorder %s17, 1
      %p103 = por %p101, %p102
      %p104 = scmp.ne.s32.totalorder %s93, %s94
      %p105 = scmp.eq.s32.totalorder %s17, 0
      %p106 = por %p104, %p105
      %p107 = scmp.ne.s32.totalorder %s93, %s94
      %p108 = scmp.eq.s32.totalorder %s18, 1
      %p109 = por %p107, %p108
      %p111 = scmp.ne.s32.totalorder %s94, %s110
      %p112 = scmp.eq.s32.totalorder %s18, 0
      %p113 = por %p111, %p112
      %p114 = scmp.le.s32.totalorder 1, %s12
      %p115 = scmp.lt.s32.totalorder %s12, 3
      %p116 = pnand %p114, %p115
      %p117 = pneg %p116
      // Predicated region
      $region9: #{tpu_custom_call.1} parent=5 // pred_check
        _
      $region10: #{tpu_custom_call.1} parent=5 // pred_check_branch
        %119 = sbr.rel (%p116) target = $region12
      $region11: #{tpu_custom_call.1} parent=5 // pred_region
        %s120 = ssub.s32 %s12, 1
        // Predicated region
        $region13: #{tpu_custom_call.1} parent=11 // pred_check
          %p121 = pneg %p59
        $region14: #{tpu_custom_call.1} parent=11 // pred_check_branch
          %123 = sbr.rel (%p121) target = $region16
        $region15: #{tpu_custom_call.1} parent=11 // pred_region
          _
        $region16: #{tpu_custom_call.1} parent=11 // pred_fallthru
          _
        // Predicated region
        $region17: #{tpu_custom_call.1} parent=11 // pred_check
          %p124 = pneg %p80
        $region18: #{tpu_custom_call.1} parent=11 // pred_check_branch
          %126 = sbr.rel (%p124) target = $region20
        $region19: #{tpu_custom_call.1} parent=11 // pred_region
          _
        $region20: #{tpu_custom_call.1} parent=11 // pred_fallthru
          _
      $region12: #{tpu_custom_call.1} parent=5 // pred_fallthru
        _
      %p127 = scmp.lt.s32.totalorder %s12, 2
      // Predicated region
      $region21: #{tpu_custom_call.1} parent=5 // pred_check
        %p128 = pneg %p127
      $region22: #{tpu_custom_call.1} parent=5 // pred_check_branch
        %130 = sbr.rel (%p128) target = $region24
      $region23: #{tpu_custom_call.1} parent=5 // pred_region
        // Predicated region
        $region25: #{tpu_custom_call.1} parent=23 // pred_check
          %p131 = pneg %p32
        $region26: #{tpu_custom_call.1} parent=23 // pred_check_branch
          %133 = sbr.rel (%p131) target = $region28
        $region27: #{tpu_custom_call.1} parent=23 // pred_region
          %s134 = smul.u32 256, %s12
          %p135 = scmp.lt.s32.totalorder %s134, 511
          %s136 = scalar_select %p135, %s134, 511
          %s137 = smul.addr %s136, 2
          %s138 = smul.addr %s137, 8
          %s139 = scalar_lea.vmem %s0, %s138
          %s140 = smul.u32 256, %s12
        $region28: #{tpu_custom_call.1} parent=23 // pred_fallthru
          _
      $region24: #{tpu_custom_call.1} parent=5 // pred_fallthru
        _
      %p141 = scmp.le.s32.totalorder 1, %s12
      %p142 = scmp.lt.s32.totalorder %s12, 3
      %p143 = pnand %p141, %p142
      %p144 = pneg %p143
      // Predicated region
      $region29: #{tpu_custom_call.1} parent=5 // pred_check
        _
      $region30: #{tpu_custom_call.1} parent=5 // pred_check_branch
        %146 = sbr.rel (%p143) target = $region32
      $region31: #{tpu_custom_call.1} parent=5 // pred_region
        %s147 = ssub.s32 %s12, 1
        %s148 = smul.u32 256, %s17
        %p149 = scmp.lt.s32.totalorder %s148, 511
        %s150 = scalar_select %p149, %s148, 511
        %s151 = smul.addr %s150, 2
        %s152 = smul.addr %s151, 8
        %s153 = scalar_lea.vmem %s0, %s152
        %p154 = pneg %p38
        %p155 = pneg %p35
        %p156 = pneg %p59
        %p157 = pneg %p56
        %p158 = pneg %p80
        %p159 = pneg %p77
        %p160 = pneg %p106
        %p161 = pneg %p103
        %s162 = sand.u32 %s93, 1
        %s163 = scalar_lea.sflag [#allocation3], %s162
        %s164 = sand.u32 %s93, 1
        %s165 = smul.addr %s164, 64
        %s166 = scalar_lea.vmem [#allocation2], %s165
        %s167 = smul.u32 256, %s17
        %p168 = scmp.lt.s32.totalorder %s167, 511
        %s169 = scalar_select %p168, %s167, 511
        %s170 = smul.addr %s169, 2
        %s171 = smul.addr %s170, 8
        %s172 = scalar_lea.vmem %s0, %s171
        %s173 = smul.u32 256, %s17
        %s174 = smul.u32 16, %s17
        %v175 = vld [vmem:[%s172] sm:$0xff]
        %v176 = vld [vmem:[%s172 + $0x8] sm:$0xff]
        %v177 = vld [vmem:[%s172 + $0x10] sm:$0xff]
        %v178 = vld [vmem:[%s172 + $0x18] sm:$0xff]
        %v179 = vld [vmem:[%s172 + $0x20] sm:$0xff]
        %v180 = vld [vmem:[%s172 + $0x28] sm:$0xff]
        %v181 = vld [vmem:[%s172 + $0x30] sm:$0xff]
        %v182 = vld [vmem:[%s172 + $0x38] sm:$0xff]
        %v183 = vld [vmem:[%s172 + $0x40] sm:$0xff]
        %v184 = vld [vmem:[%s172 + $0x48] sm:$0xff]
        %v185 = vld [vmem:[%s172 + $0x50] sm:$0xff]
        %v186 = vld [vmem:[%s172 + $0x58] sm:$0xff]
        %v187 = vld [vmem:[%s172 + $0x60] sm:$0xff]
        %v188 = vld [vmem:[%s172 + $0x68] sm:$0xff]
        %v189 = vld [vmem:[%s172 + $0x70] sm:$0xff]
        %v190 = vld [vmem:[%s172 + $0x78] sm:$0xff]
        %v191 = vld [vmem:[%s172 + $0x80] sm:$0xff]
        %v192 = vld [vmem:[%s172 + $0x88] sm:$0xff]
        %v193 = vld [vmem:[%s172 + $0x90] sm:$0xff]
        %v194 = vld [vmem:[%s172 + $0x98] sm:$0xff]
        %v195 = vld [vmem:[%s172 + $0xa0] sm:$0xff]
        %v196 = vld [vmem:[%s172 + $0xa8] sm:$0xff]
        %v197 = vld [vmem:[%s172 + $0xb0] sm:$0xff]
        %v198 = vld [vmem:[%s172 + $0xb8] sm:$0xff]
        %v199 = vld [vmem:[%s172 + $0xc0] sm:$0xff]
        %v200 = vld [vmem:[%s172 + $0xc8] sm:$0xff]
        %v201 = vld [vmem:[%s172 + $0xd0] sm:$0xff]
        %v202 = vld [vmem:[%s172 + $0xd8] sm:$0xff]
        %v203 = vld [vmem:[%s172 + $0xe0] sm:$0xff]
        %v204 = vld [vmem:[%s172 + $0xe8] sm:$0xff]
        %v205 = vld [vmem:[%s172 + $0xf0] sm:$0xff]
        %v206 = vld [vmem:[%s172 + $0xf8] sm:$0xff]
        %v207 = vld [vmem:[%s172 + $0x100] sm:$0xff]
        %v208 = vld [vmem:[%s172 + $0x108] sm:$0xff]
        %v209 = vld [vmem:[%s172 + $0x110] sm:$0xff]
        %v210 = vld [vmem:[%s172 + $0x118] sm:$0xff]
        %v211 = vld [vmem:[%s172 + $0x120] sm:$0xff]
        %v212 = vld [vmem:[%s172 + $0x128] sm:$0xff]
        %v213 = vld [vmem:[%s172 + $0x130] sm:$0xff]
        %v214 = vld [vmem:[%s172 + $0x138] sm:$0xff]
        %v215 = vld [vmem:[%s172 + $0x140] sm:$0xff]
        %v216 = vld [vmem:[%s172 + $0x148] sm:$0xff]
        %v217 = vld [vmem:[%s172 + $0x150] sm:$0xff]
        %v218 = vld [vmem:[%s172 + $0x158] sm:$0xff]
        %v219 = vld [vmem:[%s172 + $0x160] sm:$0xff]
        %v220 = vld [vmem:[%s172 + $0x168] sm:$0xff]
        %v221 = vld [vmem:[%s172 + $0x170] sm:$0xff]
        %v222 = vld [vmem:[%s172 + $0x178] sm:$0xff]
        %v223 = vld [vmem:[%s172 + $0x180] sm:$0xff]
        %v224 = vld [vmem:[%s172 + $0x188] sm:$0xff]
        %v225 = vld [vmem:[%s172 + $0x190] sm:$0xff]
        %v226 = vld [vmem:[%s172 + $0x198] sm:$0xff]
        %v227 = vld [vmem:[%s172 + $0x1a0] sm:$0xff]
        %v228 = vld [vmem:[%s172 + $0x1a8] sm:$0xff]
        %v229 = vld [vmem:[%s172 + $0x1b0] sm:$0xff]
        %v230 = vld [vmem:[%s172 + $0x1b8] sm:$0xff]
        %v231 = vld [vmem:[%s172 + $0x1c0] sm:$0xff]
        %v232 = vld [vmem:[%s172 + $0x1c8] sm:$0xff]
        %v233 = vld [vmem:[%s172 + $0x1d0] sm:$0xff]
        %v234 = vld [vmem:[%s172 + $0x1d8] sm:$0xff]
        %v235 = vld [vmem:[%s172 + $0x1e0] sm:$0xff]
        %v236 = vld [vmem:[%s172 + $0x1e8] sm:$0xff]
        %v237 = vld [vmem:[%s172 + $0x1f0] sm:$0xff]
        %v238 = vld [vmem:[%s172 + $0x1f8] sm:$0xff]
        %v239 = vld [vmem:[%s172 + $0x200] sm:$0xff]
        %v240 = vld [vmem:[%s172 + $0x208] sm:$0xff]
        %v241 = vld [vmem:[%s172 + $0x210] sm:$0xff]
        %v242 = vld [vmem:[%s172 + $0x218] sm:$0xff]
        %v243 = vld [vmem:[%s172 + $0x220] sm:$0xff]
        %v244 = vld [vmem:[%s172 + $0x228] sm:$0xff]
        %v245 = vld [vmem:[%s172 + $0x230] sm:$0xff]
        %v246 = vld [vmem:[%s172 + $0x238] sm:$0xff]
        %v247 = vld [vmem:[%s172 + $0x240] sm:$0xff]
        %v248 = vld [vmem:[%s172 + $0x248] sm:$0xff]
        %v249 = vld [vmem:[%s172 + $0x250] sm:$0xff]
        %v250 = vld [vmem:[%s172 + $0x258] sm:$0xff]
        %v251 = vld [vmem:[%s172 + $0x260] sm:$0xff]
        %v252 = vld [vmem:[%s172 + $0x268] sm:$0xff]
        %v253 = vld [vmem:[%s172 + $0x270] sm:$0xff]
        %v254 = vld [vmem:[%s172 + $0x278] sm:$0xff]
        %v255 = vld [vmem:[%s172 + $0x280] sm:$0xff]
        %v256 = vld [vmem:[%s172 + $0x288] sm:$0xff]
        %v257 = vld [vmem:[%s172 + $0x290] sm:$0xff]
        %v258 = vld [vmem:[%s172 + $0x298] sm:$0xff]
        %v259 = vld [vmem:[%s172 + $0x2a0] sm:$0xff]
        %v260 = vld [vmem:[%s172 + $0x2a8] sm:$0xff]
        %v261 = vld [vmem:[%s172 + $0x2b0] sm:$0xff]
        %v262 = vld [vmem:[%s172 + $0x2b8] sm:$0xff]
        %v263 = vld [vmem:[%s172 + $0x2c0] sm:$0xff]
        %v264 = vld [vmem:[%s172 + $0x2c8] sm:$0xff]
        %v265 = vld [vmem:[%s172 + $0x2d0] sm:$0xff]
        %v266 = vld [vmem:[%s172 + $0x2d8] sm:$0xff]
        %v267 = vld [vmem:[%s172 + $0x2e0] sm:$0xff]
        %v268 = vld [vmem:[%s172 + $0x2e8] sm:$0xff]
        %v269 = vld [vmem:[%s172 + $0x2f0] sm:$0xff]
        %v270 = vld [vmem:[%s172 + $0x2f8] sm:$0xff]
        %v271 = vld [vmem:[%s172 + $0x300] sm:$0xff]
        %v272 = vld [vmem:[%s172 + $0x308] sm:$0xff]
        %v273 = vld [vmem:[%s172 + $0x310] sm:$0xff]
        %v274 = vld [vmem:[%s172 + $0x318] sm:$0xff]
        %v275 = vld [vmem:[%s172 + $0x320] sm:$0xff]
        %v276 = vld [vmem:[%s172 + $0x328] sm:$0xff]
        %v277 = vld [vmem:[%s172 + $0x330] sm:$0xff]
        %v278 = vld [vmem:[%s172 + $0x338] sm:$0xff]
        %v279 = vld [vmem:[%s172 + $0x340] sm:$0xff]
        %v280 = vld [vmem:[%s172 + $0x348] sm:$0xff]
        %v281 = vld [vmem:[%s172 + $0x350] sm:$0xff]
        %v282 = vld [vmem:[%s172 + $0x358] sm:$0xff]
        %v283 = vld [vmem:[%s172 + $0x360] sm:$0xff]
        %v284 = vld [vmem:[%s172 + $0x368] sm:$0xff]
        %v285 = vld [vmem:[%s172 + $0x370] sm:$0xff]
        %v286 = vld [vmem:[%s172 + $0x378] sm:$0xff]
        %v287 = vld [vmem:[%s172 + $0x380] sm:$0xff]
        %v288 = vld [vmem:[%s172 + $0x388] sm:$0xff]
        %v289 = vld [vmem:[%s172 + $0x390] sm:$0xff]
        %v290 = vld [vmem:[%s172 + $0x398] sm:$0xff]
        %v291 = vld [vmem:[%s172 + $0x3a0] sm:$0xff]
        %v292 = vld [vmem:[%s172 + $0x3a8] sm:$0xff]
        %v293 = vld [vmem:[%s172 + $0x3b0] sm:$0xff]
        %v294 = vld [vmem:[%s172 + $0x3b8] sm:$0xff]
        %v295 = vld [vmem:[%s172 + $0x3c0] sm:$0xff]
        %v296 = vld [vmem:[%s172 + $0x3c8] sm:$0xff]
        %v297 = vld [vmem:[%s172 + $0x3d0] sm:$0xff]
        %v298 = vld [vmem:[%s172 + $0x3d8] sm:$0xff]
        %v299 = vld [vmem:[%s172 + $0x3e0] sm:$0xff]
        %v300 = vld [vmem:[%s172 + $0x3e8] sm:$0xff]
        %v301 = vld [vmem:[%s172 + $0x3f0] sm:$0xff]
        %v302 = vld [vmem:[%s172 + $0x3f8] sm:$0xff]
        %v303 = vld [vmem:[%s172 + $0x400] sm:$0xff]
        %v304 = vld [vmem:[%s172 + $0x408] sm:$0xff]
        %v305 = vld [vmem:[%s172 + $0x410] sm:$0xff]
        %v306 = vld [vmem:[%s172 + $0x418] sm:$0xff]
        %v307 = vld [vmem:[%s172 + $0x420] sm:$0xff]
        %v308 = vld [vmem:[%s172 + $0x428] sm:$0xff]
        %v309 = vld [vmem:[%s172 + $0x430] sm:$0xff]
        %v310 = vld [vmem:[%s172 + $0x438] sm:$0xff]
        %v311 = vld [vmem:[%s172 + $0x440] sm:$0xff]
        %v312 = vld [vmem:[%s172 + $0x448] sm:$0xff]
        %v313 = vld [vmem:[%s172 + $0x450] sm:$0xff]
        %v314 = vld [vmem:[%s172 + $0x458] sm:$0xff]
        %v315 = vld [vmem:[%s172 + $0x460] sm:$0xff]
        %v316 = vld [vmem:[%s172 + $0x468] sm:$0xff]
        %v317 = vld [vmem:[%s172 + $0x470] sm:$0xff]
        %v318 = vld [vmem:[%s172 + $0x478] sm:$0xff]
        %v319 = vld [vmem:[%s172 + $0x480] sm:$0xff]
        %v320 = vld [vmem:[%s172 + $0x488] sm:$0xff]
        %v321 = vld [vmem:[%s172 + $0x490] sm:$0xff]
        %v322 = vld [vmem:[%s172 + $0x498] sm:$0xff]
        %v323 = vld [vmem:[%s172 + $0x4a0] sm:$0xff]
        %v324 = vld [vmem:[%s172 + $0x4a8] sm:$0xff]
        %v325 = vld [vmem:[%s172 + $0x4b0] sm:$0xff]
        %v326 = vld [vmem:[%s172 + $0x4b8] sm:$0xff]
        %v327 = vld [vmem:[%s172 + $0x4c0] sm:$0xff]
        %v328 = vld [vmem:[%s172 + $0x4c8] sm:$0xff]
        %v329 = vld [vmem:[%s172 + $0x4d0] sm:$0xff]
        %v330 = vld [vmem:[%s172 + $0x4d8] sm:$0xff]
        %v331 = vld [vmem:[%s172 + $0x4e0] sm:$0xff]
        %v332 = vld [vmem:[%s172 + $0x4e8] sm:$0xff]
        %v333 = vld [vmem:[%s172 + $0x4f0] sm:$0xff]
        %v334 = vld [vmem:[%s172 + $0x4f8] sm:$0xff]
        %v335 = vld [vmem:[%s172 + $0x500] sm:$0xff]
        %v336 = vld [vmem:[%s172 + $0x508] sm:$0xff]
        %v337 = vld [vmem:[%s172 + $0x510] sm:$0xff]
        %v338 = vld [vmem:[%s172 + $0x518] sm:$0xff]
        %v339 = vld [vmem:[%s172 + $0x520] sm:$0xff]
        %v340 = vld [vmem:[%s172 + $0x528] sm:$0xff]
        %v341 = vld [vmem:[%s172 + $0x530] sm:$0xff]
        %v342 = vld [vmem:[%s172 + $0x538] sm:$0xff]
        %v343 = vld [vmem:[%s172 + $0x540] sm:$0xff]
        %v344 = vld [vmem:[%s172 + $0x548] sm:$0xff]
        %v345 = vld [vmem:[%s172 + $0x550] sm:$0xff]
        %v346 = vld [vmem:[%s172 + $0x558] sm:$0xff]
        %v347 = vld [vmem:[%s172 + $0x560] sm:$0xff]
        %v348 = vld [vmem:[%s172 + $0x568] sm:$0xff]
        %v349 = vld [vmem:[%s172 + $0x570] sm:$0xff]
        %v350 = vld [vmem:[%s172 + $0x578] sm:$0xff]
        %v351 = vld [vmem:[%s172 + $0x580] sm:$0xff]
        %v352 = vld [vmem:[%s172 + $0x588] sm:$0xff]
        %v353 = vld [vmem:[%s172 + $0x590] sm:$0xff]
        %v354 = vld [vmem:[%s172 + $0x598] sm:$0xff]
        %v355 = vld [vmem:[%s172 + $0x5a0] sm:$0xff]
        %v356 = vld [vmem:[%s172 + $0x5a8] sm:$0xff]
        %v357 = vld [vmem:[%s172 + $0x5b0] sm:$0xff]
        %v358 = vld [vmem:[%s172 + $0x5b8] sm:$0xff]
        %v359 = vld [vmem:[%s172 + $0x5c0] sm:$0xff]
        %v360 = vld [vmem:[%s172 + $0x5c8] sm:$0xff]
        %v361 = vld [vmem:[%s172 + $0x5d0] sm:$0xff]
        %v362 = vld [vmem:[%s172 + $0x5d8] sm:$0xff]
        %v363 = vld [vmem:[%s172 + $0x5e0] sm:$0xff]
        %v364 = vld [vmem:[%s172 + $0x5e8] sm:$0xff]
        %v365 = vld [vmem:[%s172 + $0x5f0] sm:$0xff]
        %v366 = vld [vmem:[%s172 + $0x5f8] sm:$0xff]
        %v367 = vld [vmem:[%s172 + $0x600] sm:$0xff]
        %v368 = vld [vmem:[%s172 + $0x608] sm:$0xff]
        %v369 = vld [vmem:[%s172 + $0x610] sm:$0xff]
        %v370 = vld [vmem:[%s172 + $0x618] sm:$0xff]
        %v371 = vld [vmem:[%s172 + $0x620] sm:$0xff]
        %v372 = vld [vmem:[%s172 + $0x628] sm:$0xff]
        %v373 = vld [vmem:[%s172 + $0x630] sm:$0xff]
        %v374 = vld [vmem:[%s172 + $0x638] sm:$0xff]
        %v375 = vld [vmem:[%s172 + $0x640] sm:$0xff]
        %v376 = vld [vmem:[%s172 + $0x648] sm:$0xff]
        %v377 = vld [vmem:[%s172 + $0x650] sm:$0xff]
        %v378 = vld [vmem:[%s172 + $0x658] sm:$0xff]
        %v379 = vld [vmem:[%s172 + $0x660] sm:$0xff]
        %v380 = vld [vmem:[%s172 + $0x668] sm:$0xff]
        %v381 = vld [vmem:[%s172 + $0x670] sm:$0xff]
        %v382 = vld [vmem:[%s172 + $0x678] sm:$0xff]
        %v383 = vld [vmem:[%s172 + $0x680] sm:$0xff]
        %v384 = vld [vmem:[%s172 + $0x688] sm:$0xff]
        %v385 = vld [vmem:[%s172 + $0x690] sm:$0xff]
        %v386 = vld [vmem:[%s172 + $0x698] sm:$0xff]
        %v387 = vld [vmem:[%s172 + $0x6a0] sm:$0xff]
        %v388 = vld [vmem:[%s172 + $0x6a8] sm:$0xff]
        %v389 = vld [vmem:[%s172 + $0x6b0] sm:$0xff]
        %v390 = vld [vmem:[%s172 + $0x6b8] sm:$0xff]
        %v391 = vld [vmem:[%s172 + $0x6c0] sm:$0xff]
        %v392 = vld [vmem:[%s172 + $0x6c8] sm:$0xff]
        %v393 = vld [vmem:[%s172 + $0x6d0] sm:$0xff]
        %v394 = vld [vmem:[%s172 + $0x6d8] sm:$0xff]
        %v395 = vld [vmem:[%s172 + $0x6e0] sm:$0xff]
        %v396 = vld [vmem:[%s172 + $0x6e8] sm:$0xff]
        %v397 = vld [vmem:[%s172 + $0x6f0] sm:$0xff]
        %v398 = vld [vmem:[%s172 + $0x6f8] sm:$0xff]
        %v399 = vld [vmem:[%s172 + $0x700] sm:$0xff]
        %v400 = vld [vmem:[%s172 + $0x708] sm:$0xff]
        %v401 = vld [vmem:[%s172 + $0x710] sm:$0xff]
        %v402 = vld [vmem:[%s172 + $0x718] sm:$0xff]
        %v403 = vld [vmem:[%s172 + $0x720] sm:$0xff]
        %v404 = vld [vmem:[%s172 + $0x728] sm:$0xff]
        %v405 = vld [vmem:[%s172 + $0x730] sm:$0xff]
        %v406 = vld [vmem:[%s172 + $0x738] sm:$0xff]
        %v407 = vld [vmem:[%s172 + $0x740] sm:$0xff]
        %v408 = vld [vmem:[%s172 + $0x748] sm:$0xff]
        %v409 = vld [vmem:[%s172 + $0x750] sm:$0xff]
        %v410 = vld [vmem:[%s172 + $0x758] sm:$0xff]
        %v411 = vld [vmem:[%s172 + $0x760] sm:$0xff]
        %v412 = vld [vmem:[%s172 + $0x768] sm:$0xff]
        %v413 = vld [vmem:[%s172 + $0x770] sm:$0xff]
        %v414 = vld [vmem:[%s172 + $0x778] sm:$0xff]
        %v415 = vld [vmem:[%s172 + $0x780] sm:$0xff]
        %v416 = vld [vmem:[%s172 + $0x788] sm:$0xff]
        %v417 = vld [vmem:[%s172 + $0x790] sm:$0xff]
        %v418 = vld [vmem:[%s172 + $0x798] sm:$0xff]
        %v419 = vld [vmem:[%s172 + $0x7a0] sm:$0xff]
        %v420 = vld [vmem:[%s172 + $0x7a8] sm:$0xff]
        %v421 = vld [vmem:[%s172 + $0x7b0] sm:$0xff]
        %v422 = vld [vmem:[%s172 + $0x7b8] sm:$0xff]
        %v423 = vld [vmem:[%s172 + $0x7c0] sm:$0xff]
        %v424 = vld [vmem:[%s172 + $0x7c8] sm:$0xff]
        %v425 = vld [vmem:[%s172 + $0x7d0] sm:$0xff]
        %v426 = vld [vmem:[%s172 + $0x7d8] sm:$0xff]
        %v427 = vld [vmem:[%s172 + $0x7e0] sm:$0xff]
        %v428 = vld [vmem:[%s172 + $0x7e8] sm:$0xff]
        %v429 = vld [vmem:[%s172 + $0x7f0] sm:$0xff]
        %v430 = vld [vmem:[%s172 + $0x7f8] sm:$0xff]
        %v431 = vld [vmem:[%s172 + $0x800] sm:$0xff]
        %v432 = vld [vmem:[%s172 + $0x808] sm:$0xff]
        %v433 = vld [vmem:[%s172 + $0x810] sm:$0xff]
        %v434 = vld [vmem:[%s172 + $0x818] sm:$0xff]
        %v435 = vld [vmem:[%s172 + $0x820] sm:$0xff]
        %v436 = vld [vmem:[%s172 + $0x828] sm:$0xff]
        %v437 = vld [vmem:[%s172 + $0x830] sm:$0xff]
        %v438 = vld [vmem:[%s172 + $0x838] sm:$0xff]
        %v439 = vld [vmem:[%s172 + $0x840] sm:$0xff]
        %v440 = vld [vmem:[%s172 + $0x848] sm:$0xff]
        %v441 = vld [vmem:[%s172 + $0x850] sm:$0xff]
        %v442 = vld [vmem:[%s172 + $0x858] sm:$0xff]
        %v443 = vld [vmem:[%s172 + $0x860] sm:$0xff]
        %v444 = vld [vmem:[%s172 + $0x868] sm:$0xff]
        %v445 = vld [vmem:[%s172 + $0x870] sm:$0xff]
        %v446 = vld [vmem:[%s172 + $0x878] sm:$0xff]
        %v447 = vld [vmem:[%s172 + $0x880] sm:$0xff]
        %v448 = vld [vmem:[%s172 + $0x888] sm:$0xff]
        %v449 = vld [vmem:[%s172 + $0x890] sm:$0xff]
        %v450 = vld [vmem:[%s172 + $0x898] sm:$0xff]
        %v451 = vld [vmem:[%s172 + $0x8a0] sm:$0xff]
        %v452 = vld [vmem:[%s172 + $0x8a8] sm:$0xff]
        %v453 = vld [vmem:[%s172 + $0x8b0] sm:$0xff]
        %v454 = vld [vmem:[%s172 + $0x8b8] sm:$0xff]
        %v455 = vld [vmem:[%s172 + $0x8c0] sm:$0xff]
        %v456 = vld [vmem:[%s172 + $0x8c8] sm:$0xff]
        %v457 = vld [vmem:[%s172 + $0x8d0] sm:$0xff]
        %v458 = vld [vmem:[%s172 + $0x8d8] sm:$0xff]
        %v459 = vld [vmem:[%s172 + $0x8e0] sm:$0xff]
        %v460 = vld [vmem:[%s172 + $0x8e8] sm:$0xff]
        %v461 = vld [vmem:[%s172 + $0x8f0] sm:$0xff]
        %v462 = vld [vmem:[%s172 + $0x8f8] sm:$0xff]
        %v463 = vld [vmem:[%s172 + $0x900] sm:$0xff]
        %v464 = vld [vmem:[%s172 + $0x908] sm:$0xff]
        %v465 = vld [vmem:[%s172 + $0x910] sm:$0xff]
        %v466 = vld [vmem:[%s172 + $0x918] sm:$0xff]
        %v467 = vld [vmem:[%s172 + $0x920] sm:$0xff]
        %v468 = vld [vmem:[%s172 + $0x928] sm:$0xff]
        %v469 = vld [vmem:[%s172 + $0x930] sm:$0xff]
        %v470 = vld [vmem:[%s172 + $0x938] sm:$0xff]
        %v471 = vld [vmem:[%s172 + $0x940] sm:$0xff]
        %v472 = vld [vmem:[%s172 + $0x948] sm:$0xff]
        %v473 = vld [vmem:[%s172 + $0x950] sm:$0xff]
        %v474 = vld [vmem:[%s172 + $0x958] sm:$0xff]
        %v475 = vld [vmem:[%s172 + $0x960] sm:$0xff]
        %v476 = vld [vmem:[%s172 + $0x968] sm:$0xff]
        %v477 = vld [vmem:[%s172 + $0x970] sm:$0xff]
        %v478 = vld [vmem:[%s172 + $0x978] sm:$0xff]
        %v479 = vld [vmem:[%s172 + $0x980] sm:$0xff]
        %v480 = vld [vmem:[%s172 + $0x988] sm:$0xff]
        %v481 = vld [vmem:[%s172 + $0x990] sm:$0xff]
        %v482 = vld [vmem:[%s172 + $0x998] sm:$0xff]
        %v483 = vld [vmem:[%s172 + $0x9a0] sm:$0xff]
        %v484 = vld [vmem:[%s172 + $0x9a8] sm:$0xff]
        %v485 = vld [vmem:[%s172 + $0x9b0] sm:$0xff]
        %v486 = vld [vmem:[%s172 + $0x9b8] sm:$0xff]
        %v487 = vld [vmem:[%s172 + $0x9c0] sm:$0xff]
        %v488 = vld [vmem:[%s172 + $0x9c8] sm:$0xff]
        %v489 = vld [vmem:[%s172 + $0x9d0] sm:$0xff]
        %v490 = vld [vmem:[%s172 + $0x9d8] sm:$0xff]
        %v491 = vld [vmem:[%s172 + $0x9e0] sm:$0xff]
        %v492 = vld [vmem:[%s172 + $0x9e8] sm:$0xff]
        %v493 = vld [vmem:[%s172 + $0x9f0] sm:$0xff]
        %v494 = vld [vmem:[%s172 + $0x9f8] sm:$0xff]
        %v495 = vld [vmem:[%s172 + $0xa00] sm:$0xff]
        %v496 = vld [vmem:[%s172 + $0xa08] sm:$0xff]
        %v497 = vld [vmem:[%s172 + $0xa10] sm:$0xff]
        %v498 = vld [vmem:[%s172 + $0xa18] sm:$0xff]
        %v499 = vld [vmem:[%s172 + $0xa20] sm:$0xff]
        %v500 = vld [vmem:[%s172 + $0xa28] sm:$0xff]
        %v501 = vld [vmem:[%s172 + $0xa30] sm:$0xff]
        %v502 = vld [vmem:[%s172 + $0xa38] sm:$0xff]
        %v503 = vld [vmem:[%s172 + $0xa40] sm:$0xff]
        %v504 = vld [vmem:[%s172 + $0xa48] sm:$0xff]
        %v505 = vld [vmem:[%s172 + $0xa50] sm:$0xff]
        %v506 = vld [vmem:[%s172 + $0xa58] sm:$0xff]
        %v507 = vld [vmem:[%s172 + $0xa60] sm:$0xff]
        %v508 = vld [vmem:[%s172 + $0xa68] sm:$0xff]
        %v509 = vld [vmem:[%s172 + $0xa70] sm:$0xff]
        %v510 = vld [vmem:[%s172 + $0xa78] sm:$0xff]
        %v511 = vld [vmem:[%s172 + $0xa80] sm:$0xff]
        %v512 = vld [vmem:[%s172 + $0xa88] sm:$0xff]
        %v513 = vld [vmem:[%s172 + $0xa90] sm:$0xff]
        %v514 = vld [vmem:[%s172 + $0xa98] sm:$0xff]
        %v515 = vld [vmem:[%s172 + $0xaa0] sm:$0xff]
        %v516 = vld [vmem:[%s172 + $0xaa8] sm:$0xff]
        %v517 = vld [vmem:[%s172 + $0xab0] sm:$0xff]
        %v518 = vld [vmem:[%s172 + $0xab8] sm:$0xff]
        %v519 = vld [vmem:[%s172 + $0xac0] sm:$0xff]
        %v520 = vld [vmem:[%s172 + $0xac8] sm:$0xff]
        %v521 = vld [vmem:[%s172 + $0xad0] sm:$0xff]
        %v522 = vld [vmem:[%s172 + $0xad8] sm:$0xff]
        %v523 = vld [vmem:[%s172 + $0xae0] sm:$0xff]
        %v524 = vld [vmem:[%s172 + $0xae8] sm:$0xff]
        %v525 = vld [vmem:[%s172 + $0xaf0] sm:$0xff]
        %v526 = vld [vmem:[%s172 + $0xaf8] sm:$0xff]
        %v527 = vld [vmem:[%s172 + $0xb00] sm:$0xff]
        %v528 = vld [vmem:[%s172 + $0xb08] sm:$0xff]
        %v529 = vld [vmem:[%s172 + $0xb10] sm:$0xff]
        %v530 = vld [vmem:[%s172 + $0xb18] sm:$0xff]
        %v531 = vld [vmem:[%s172 + $0xb20] sm:$0xff]
        %v532 = vld [vmem:[%s172 + $0xb28] sm:$0xff]
        %v533 = vld [vmem:[%s172 + $0xb30] sm:$0xff]
        %v534 = vld [vmem:[%s172 + $0xb38] sm:$0xff]
        %v535 = vld [vmem:[%s172 + $0xb40] sm:$0xff]
        %v536 = vld [vmem:[%s172 + $0xb48] sm:$0xff]
        %v537 = vld [vmem:[%s172 + $0xb50] sm:$0xff]
        %v538 = vld [vmem:[%s172 + $0xb58] sm:$0xff]
        %v539 = vld [vmem:[%s172 + $0xb60] sm:$0xff]
        %v540 = vld [vmem:[%s172 + $0xb68] sm:$0xff]
        %v541 = vld [vmem:[%s172 + $0xb70] sm:$0xff]
        %v542 = vld [vmem:[%s172 + $0xb78] sm:$0xff]
        %v543 = vld [vmem:[%s172 + $0xb80] sm:$0xff]
        %v544 = vld [vmem:[%s172 + $0xb88] sm:$0xff]
        %v545 = vld [vmem:[%s172 + $0xb90] sm:$0xff]
        %v546 = vld [vmem:[%s172 + $0xb98] sm:$0xff]
        %v547 = vld [vmem:[%s172 + $0xba0] sm:$0xff]
        %v548 = vld [vmem:[%s172 + $0xba8] sm:$0xff]
        %v549 = vld [vmem:[%s172 + $0xbb0] sm:$0xff]
        %v550 = vld [vmem:[%s172 + $0xbb8] sm:$0xff]
        %v551 = vld [vmem:[%s172 + $0xbc0] sm:$0xff]
        %v552 = vld [vmem:[%s172 + $0xbc8] sm:$0xff]
        %v553 = vld [vmem:[%s172 + $0xbd0] sm:$0xff]
        %v554 = vld [vmem:[%s172 + $0xbd8] sm:$0xff]
        %v555 = vld [vmem:[%s172 + $0xbe0] sm:$0xff]
        %v556 = vld [vmem:[%s172 + $0xbe8] sm:$0xff]
        %v557 = vld [vmem:[%s172 + $0xbf0] sm:$0xff]
        %v558 = vld [vmem:[%s172 + $0xbf8] sm:$0xff]
        %v559 = vld [vmem:[%s172 + $0xc00] sm:$0xff]
        %v560 = vld [vmem:[%s172 + $0xc08] sm:$0xff]
        %v561 = vld [vmem:[%s172 + $0xc10] sm:$0xff]
        %v562 = vld [vmem:[%s172 + $0xc18] sm:$0xff]
        %v563 = vld [vmem:[%s172 + $0xc20] sm:$0xff]
        %v564 = vld [vmem:[%s172 + $0xc28] sm:$0xff]
        %v565 = vld [vmem:[%s172 + $0xc30] sm:$0xff]
        %v566 = vld [vmem:[%s172 + $0xc38] sm:$0xff]
        %v567 = vld [vmem:[%s172 + $0xc40] sm:$0xff]
        %v568 = vld [vmem:[%s172 + $0xc48] sm:$0xff]
        %v569 = vld [vmem:[%s172 + $0xc50] sm:$0xff]
        %v570 = vld [vmem:[%s172 + $0xc58] sm:$0xff]
        %v571 = vld [vmem:[%s172 + $0xc60] sm:$0xff]
        %v572 = vld [vmem:[%s172 + $0xc68] sm:$0xff]
        %v573 = vld [vmem:[%s172 + $0xc70] sm:$0xff]
        %v574 = vld [vmem:[%s172 + $0xc78] sm:$0xff]
        %v575 = vld [vmem:[%s172 + $0xc80] sm:$0xff]
        %v576 = vld [vmem:[%s172 + $0xc88] sm:$0xff]
        %v577 = vld [vmem:[%s172 + $0xc90] sm:$0xff]
        %v578 = vld [vmem:[%s172 + $0xc98] sm:$0xff]
        %v579 = vld [vmem:[%s172 + $0xca0] sm:$0xff]
        %v580 = vld [vmem:[%s172 + $0xca8] sm:$0xff]
        %v581 = vld [vmem:[%s172 + $0xcb0] sm:$0xff]
        %v582 = vld [vmem:[%s172 + $0xcb8] sm:$0xff]
        %v583 = vld [vmem:[%s172 + $0xcc0] sm:$0xff]
        %v584 = vld [vmem:[%s172 + $0xcc8] sm:$0xff]
        %v585 = vld [vmem:[%s172 + $0xcd0] sm:$0xff]
        %v586 = vld [vmem:[%s172 + $0xcd8] sm:$0xff]
        %v587 = vld [vmem:[%s172 + $0xce0] sm:$0xff]
        %v588 = vld [vmem:[%s172 + $0xce8] sm:$0xff]
        %v589 = vld [vmem:[%s172 + $0xcf0] sm:$0xff]
        %v590 = vld [vmem:[%s172 + $0xcf8] sm:$0xff]
        %v591 = vld [vmem:[%s172 + $0xd00] sm:$0xff]
        %v592 = vld [vmem:[%s172 + $0xd08] sm:$0xff]
        %v593 = vld [vmem:[%s172 + $0xd10] sm:$0xff]
        %v594 = vld [vmem:[%s172 + $0xd18] sm:$0xff]
        %v595 = vld [vmem:[%s172 + $0xd20] sm:$0xff]
        %v596 = vld [vmem:[%s172 + $0xd28] sm:$0xff]
        %v597 = vld [vmem:[%s172 + $0xd30] sm:$0xff]
        %v598 = vld [vmem:[%s172 + $0xd38] sm:$0xff]
        %v599 = vld [vmem:[%s172 + $0xd40] sm:$0xff]
        %v600 = vld [vmem:[%s172 + $0xd48] sm:$0xff]
        %v601 = vld [vmem:[%s172 + $0xd50] sm:$0xff]
        %v602 = vld [vmem:[%s172 + $0xd58] sm:$0xff]
        %v603 = vld [vmem:[%s172 + $0xd60] sm:$0xff]
        %v604 = vld [vmem:[%s172 + $0xd68] sm:$0xff]
        %v605 = vld [vmem:[%s172 + $0xd70] sm:$0xff]
        %v606 = vld [vmem:[%s172 + $0xd78] sm:$0xff]
        %v607 = vld [vmem:[%s172 + $0xd80] sm:$0xff]
        %v608 = vld [vmem:[%s172 + $0xd88] sm:$0xff]
        %v609 = vld [vmem:[%s172 + $0xd90] sm:$0xff]
        %v610 = vld [vmem:[%s172 + $0xd98] sm:$0xff]
        %v611 = vld [vmem:[%s172 + $0xda0] sm:$0xff]
        %v612 = vld [vmem:[%s172 + $0xda8] sm:$0xff]
        %v613 = vld [vmem:[%s172 + $0xdb0] sm:$0xff]
        %v614 = vld [vmem:[%s172 + $0xdb8] sm:$0xff]
        %v615 = vld [vmem:[%s172 + $0xdc0] sm:$0xff]
        %v616 = vld [vmem:[%s172 + $0xdc8] sm:$0xff]
        %v617 = vld [vmem:[%s172 + $0xdd0] sm:$0xff]
        %v618 = vld [vmem:[%s172 + $0xdd8] sm:$0xff]
        %v619 = vld [vmem:[%s172 + $0xde0] sm:$0xff]
        %v620 = vld [vmem:[%s172 + $0xde8] sm:$0xff]
        %v621 = vld [vmem:[%s172 + $0xdf0] sm:$0xff]
        %v622 = vld [vmem:[%s172 + $0xdf8] sm:$0xff]
        %v623 = vld [vmem:[%s172 + $0xe00] sm:$0xff]
        %v624 = vld [vmem:[%s172 + $0xe08] sm:$0xff]
        %v625 = vld [vmem:[%s172 + $0xe10] sm:$0xff]
        %v626 = vld [vmem:[%s172 + $0xe18] sm:$0xff]
        %v627 = vld [vmem:[%s172 + $0xe20] sm:$0xff]
        %v628 = vld [vmem:[%s172 + $0xe28] sm:$0xff]
        %v629 = vld [vmem:[%s172 + $0xe30] sm:$0xff]
        %v630 = vld [vmem:[%s172 + $0xe38] sm:$0xff]
        %v631 = vld [vmem:[%s172 + $0xe40] sm:$0xff]
        %v632 = vld [vmem:[%s172 + $0xe48] sm:$0xff]
        %v633 = vld [vmem:[%s172 + $0xe50] sm:$0xff]
        %v634 = vld [vmem:[%s172 + $0xe58] sm:$0xff]
        %v635 = vld [vmem:[%s172 + $0xe60] sm:$0xff]
        %v636 = vld [vmem:[%s172 + $0xe68] sm:$0xff]
        %v637 = vld [vmem:[%s172 + $0xe70] sm:$0xff]
        %v638 = vld [vmem:[%s172 + $0xe78] sm:$0xff]
        %v639 = vld [vmem:[%s172 + $0xe80] sm:$0xff]
        %v640 = vld [vmem:[%s172 + $0xe88] sm:$0xff]
        %v641 = vld [vmem:[%s172 + $0xe90] sm:$0xff]
        %v642 = vld [vmem:[%s172 + $0xe98] sm:$0xff]
        %v643 = vld [vmem:[%s172 + $0xea0] sm:$0xff]
        %v644 = vld [vmem:[%s172 + $0xea8] sm:$0xff]
        %v645 = vld [vmem:[%s172 + $0xeb0] sm:$0xff]
        %v646 = vld [vmem:[%s172 + $0xeb8] sm:$0xff]
        %v647 = vld [vmem:[%s172 + $0xec0] sm:$0xff]
        %v648 = vld [vmem:[%s172 + $0xec8] sm:$0xff]
        %v649 = vld [vmem:[%s172 + $0xed0] sm:$0xff]
        %v650 = vld [vmem:[%s172 + $0xed8] sm:$0xff]
        %v651 = vld [vmem:[%s172 + $0xee0] sm:$0xff]
        %v652 = vld [vmem:[%s172 + $0xee8] sm:$0xff]
        %v653 = vld [vmem:[%s172 + $0xef0] sm:$0xff]
        %v654 = vld [vmem:[%s172 + $0xef8] sm:$0xff]
        %v655 = vld [vmem:[%s172 + $0xf00] sm:$0xff]
        %v656 = vld [vmem:[%s172 + $0xf08] sm:$0xff]
        %v657 = vld [vmem:[%s172 + $0xf10] sm:$0xff]
        %v658 = vld [vmem:[%s172 + $0xf18] sm:$0xff]
        %v659 = vld [vmem:[%s172 + $0xf20] sm:$0xff]
        %v660 = vld [vmem:[%s172 + $0xf28] sm:$0xff]
        %v661 = vld [vmem:[%s172 + $0xf30] sm:$0xff]
        %v662 = vld [vmem:[%s172 + $0xf38] sm:$0xff]
        %v663 = vld [vmem:[%s172 + $0xf40] sm:$0xff]
        %v664 = vld [vmem:[%s172 + $0xf48] sm:$0xff]
        %v665 = vld [vmem:[%s172 + $0xf50] sm:$0xff]
        %v666 = vld [vmem:[%s172 + $0xf58] sm:$0xff]
        %v667 = vld [vmem:[%s172 + $0xf60] sm:$0xff]
        %v668 = vld [vmem:[%s172 + $0xf68] sm:$0xff]
        %v669 = vld [vmem:[%s172 + $0xf70] sm:$0xff]
        %v670 = vld [vmem:[%s172 + $0xf78] sm:$0xff]
        %v671 = vld [vmem:[%s172 + $0xf80] sm:$0xff]
        %v672 = vld [vmem:[%s172 + $0xf88] sm:$0xff]
        %v673 = vld [vmem:[%s172 + $0xf90] sm:$0xff]
        %v674 = vld [vmem:[%s172 + $0xf98] sm:$0xff]
        %v675 = vld [vmem:[%s172 + $0xfa0] sm:$0xff]
        %v676 = vld [vmem:[%s172 + $0xfa8] sm:$0xff]
        %v677 = vld [vmem:[%s172 + $0xfb0] sm:$0xff]
        %v678 = vld [vmem:[%s172 + $0xfb8] sm:$0xff]
        %v679 = vld [vmem:[%s172 + $0xfc0] sm:$0xff]
        %v680 = vld [vmem:[%s172 + $0xfc8] sm:$0xff]
        %v681 = vld [vmem:[%s172 + $0xfd0] sm:$0xff]
        %v682 = vld [vmem:[%s172 + $0xfd8] sm:$0xff]
        %v683 = vld [vmem:[%s172 + $0xfe0] sm:$0xff]
        %v684 = vld [vmem:[%s172 + $0xfe8] sm:$0xff]
        %v685 = vld [vmem:[%s172 + $0xff0] sm:$0xff]
        %v686 = vld [vmem:[%s172 + $0xff8] sm:$0xff]
        %v687 = vld [vmem:[%s1] sm:$0xff]
        %v688 = vld [vmem:[%s1 + $0x8] sm:$0xff]
        %v689 = vld [vmem:[%s1 + $0x10] sm:$0xff]
        %v690 = vld [vmem:[%s1 + $0x18] sm:$0xff]
        %v691 = vld [vmem:[%s1 + $0x20] sm:$0xff]
        %v692 = vld [vmem:[%s1 + $0x28] sm:$0xff]
        %v693 = vld [vmem:[%s1 + $0x30] sm:$0xff]
        %v694 = vld [vmem:[%s1 + $0x38] sm:$0xff]
        %v695 = vld [vmem:[%s1 + $0x40] sm:$0xff]
        %v696 = vld [vmem:[%s1 + $0x48] sm:$0xff]
        %v697 = vld [vmem:[%s1 + $0x50] sm:$0xff]
        %v698 = vld [vmem:[%s1 + $0x58] sm:$0xff]
        %v699 = vld [vmem:[%s1 + $0x60] sm:$0xff]
        %v700 = vld [vmem:[%s1 + $0x68] sm:$0xff]
        %v701 = vld [vmem:[%s1 + $0x70] sm:$0xff]
        %v702 = vld [vmem:[%s1 + $0x78] sm:$0xff]
        %v703 = vld [vmem:[%s1 + $0x80] sm:$0xff]
        %v704 = vld [vmem:[%s1 + $0x88] sm:$0xff]
        %v705 = vld [vmem:[%s2] sm:$0xf]
        %vm706 = vcmask 130048
        %v708 = vsel %vm706, %v176, 0
        %v711 = vsel %vm706, %v178, 0
        %v714 = vsel %vm706, %v180, 0
        %v717 = vsel %vm706, %v182, 0
        %v720 = vsel %vm706, %v184, 0
        %v723 = vsel %vm706, %v186, 0
        %v726 = vsel %vm706, %v188, 0
        %v729 = vsel %vm706, %v190, 0
        %v732 = vsel %vm706, %v192, 0
        %v735 = vsel %vm706, %v194, 0
        %v738 = vsel %vm706, %v196, 0
        %v741 = vsel %vm706, %v198, 0
        %v744 = vsel %vm706, %v200, 0
        %v747 = vsel %vm706, %v202, 0
        %v750 = vsel %vm706, %v204, 0
        %v753 = vsel %vm706, %v206, 0
        %v756 = vsel %vm706, %v208, 0
        %v759 = vsel %vm706, %v210, 0
        %v762 = vsel %vm706, %v212, 0
        %v765 = vsel %vm706, %v214, 0
        %v768 = vsel %vm706, %v216, 0
        %v771 = vsel %vm706, %v218, 0
        %v774 = vsel %vm706, %v220, 0
        %v777 = vsel %vm706, %v222, 0
        %v780 = vsel %vm706, %v224, 0
        %v783 = vsel %vm706, %v226, 0
        %v786 = vsel %vm706, %v228, 0
        %v789 = vsel %vm706, %v230, 0
        %v792 = vsel %vm706, %v232, 0
        %v795 = vsel %vm706, %v234, 0
        %v798 = vsel %vm706, %v236, 0
        %v801 = vsel %vm706, %v238, 0
        %v804 = vsel %vm706, %v240, 0
        %v807 = vsel %vm706, %v242, 0
        %v810 = vsel %vm706, %v244, 0
        %v813 = vsel %vm706, %v246, 0
        %v816 = vsel %vm706, %v248, 0
        %v819 = vsel %vm706, %v250, 0
        %v822 = vsel %vm706, %v252, 0
        %v825 = vsel %vm706, %v254, 0
        %v828 = vsel %vm706, %v256, 0
        %v831 = vsel %vm706, %v258, 0
        %v834 = vsel %vm706, %v260, 0
        %v837 = vsel %vm706, %v262, 0
        %v840 = vsel %vm706, %v264, 0
        %v843 = vsel %vm706, %v266, 0
        %v846 = vsel %vm706, %v268, 0
        %v849 = vsel %vm706, %v270, 0
        %v852 = vsel %vm706, %v272, 0
        %v855 = vsel %vm706, %v274, 0
        %v858 = vsel %vm706, %v276, 0
        %v861 = vsel %vm706, %v278, 0
        %v864 = vsel %vm706, %v280, 0
        %v867 = vsel %vm706, %v282, 0
        %v870 = vsel %vm706, %v284, 0
        %v873 = vsel %vm706, %v286, 0
        %v876 = vsel %vm706, %v288, 0
        %v879 = vsel %vm706, %v290, 0
        %v882 = vsel %vm706, %v292, 0
        %v885 = vsel %vm706, %v294, 0
        %v888 = vsel %vm706, %v296, 0
        %v891 = vsel %vm706, %v298, 0
        %v894 = vsel %vm706, %v300, 0
        %v897 = vsel %vm706, %v302, 0
        %v900 = vsel %vm706, %v304, 0
        %v903 = vsel %vm706, %v306, 0
        %v906 = vsel %vm706, %v308, 0
        %v909 = vsel %vm706, %v310, 0
        %v912 = vsel %vm706, %v312, 0
        %v915 = vsel %vm706, %v314, 0
        %v918 = vsel %vm706, %v316, 0
        %v921 = vsel %vm706, %v318, 0
        %v924 = vsel %vm706, %v320, 0
        %v927 = vsel %vm706, %v322, 0
        %v930 = vsel %vm706, %v324, 0
        %v933 = vsel %vm706, %v326, 0
        %v936 = vsel %vm706, %v328, 0
        %v939 = vsel %vm706, %v330, 0
        %v942 = vsel %vm706, %v332, 0
        %v945 = vsel %vm706, %v334, 0
        %v948 = vsel %vm706, %v336, 0
        %v951 = vsel %vm706, %v338, 0
        %v954 = vsel %vm706, %v340, 0
        %v957 = vsel %vm706, %v342, 0
        %v960 = vsel %vm706, %v344, 0
        %v963 = vsel %vm706, %v346, 0
        %v966 = vsel %vm706, %v348, 0
        %v969 = vsel %vm706, %v350, 0
        %v972 = vsel %vm706, %v352, 0
        %v975 = vsel %vm706, %v354, 0
        %v978 = vsel %vm706, %v356, 0
        %v981 = vsel %vm706, %v358, 0
        %v984 = vsel %vm706, %v360, 0
        %v987 = vsel %vm706, %v362, 0
        %v990 = vsel %vm706, %v364, 0
        %v993 = vsel %vm706, %v366, 0
        %v996 = vsel %vm706, %v368, 0
        %v999 = vsel %vm706, %v370, 0
        %v1002 = vsel %vm706, %v372, 0
        %v1005 = vsel %vm706, %v374, 0
        %v1008 = vsel %vm706, %v376, 0
        %v1011 = vsel %vm706, %v378, 0
        %v1014 = vsel %vm706, %v380, 0
        %v1017 = vsel %vm706, %v382, 0
        %v1020 = vsel %vm706, %v384, 0
        %v1023 = vsel %vm706, %v386, 0
        %v1026 = vsel %vm706, %v388, 0
        %v1029 = vsel %vm706, %v390, 0
        %v1032 = vsel %vm706, %v392, 0
        %v1035 = vsel %vm706, %v394, 0
        %v1038 = vsel %vm706, %v396, 0
        %v1041 = vsel %vm706, %v398, 0
        %v1044 = vsel %vm706, %v400, 0
        %v1047 = vsel %vm706, %v402, 0
        %v1050 = vsel %vm706, %v404, 0
        %v1053 = vsel %vm706, %v406, 0
        %v1056 = vsel %vm706, %v408, 0
        %v1059 = vsel %vm706, %v410, 0
        %v1062 = vsel %vm706, %v412, 0
        %v1065 = vsel %vm706, %v414, 0
        %v1068 = vsel %vm706, %v416, 0
        %v1071 = vsel %vm706, %v418, 0
        %v1074 = vsel %vm706, %v420, 0
        %v1077 = vsel %vm706, %v422, 0
        %v1080 = vsel %vm706, %v424, 0
        %v1083 = vsel %vm706, %v426, 0
        %v1086 = vsel %vm706, %v428, 0
        %v1089 = vsel %vm706, %v430, 0
        %v1092 = vsel %vm706, %v432, 0
        %v1095 = vsel %vm706, %v434, 0
        %v1098 = vsel %vm706, %v436, 0
        %v1101 = vsel %vm706, %v438, 0
        %v1104 = vsel %vm706, %v440, 0
        %v1107 = vsel %vm706, %v442, 0
        %v1110 = vsel %vm706, %v444, 0
        %v1113 = vsel %vm706, %v446, 0
        %v1116 = vsel %vm706, %v448, 0
        %v1119 = vsel %vm706, %v450, 0
        %v1122 = vsel %vm706, %v452, 0
        %v1125 = vsel %vm706, %v454, 0
        %v1128 = vsel %vm706, %v456, 0
        %v1131 = vsel %vm706, %v458, 0
        %v1134 = vsel %vm706, %v460, 0
        %v1137 = vsel %vm706, %v462, 0
        %v1140 = vsel %vm706, %v464, 0
        %v1143 = vsel %vm706, %v466, 0
        %v1146 = vsel %vm706, %v468, 0
        %v1149 = vsel %vm706, %v470, 0
        %v1152 = vsel %vm706, %v472, 0
        %v1155 = vsel %vm706, %v474, 0
        %v1158 = vsel %vm706, %v476, 0
        %v1161 = vsel %vm706, %v478, 0
        %v1164 = vsel %vm706, %v480, 0
        %v1167 = vsel %vm706, %v482, 0
        %v1170 = vsel %vm706, %v484, 0
        %v1173 = vsel %vm706, %v486, 0
        %v1176 = vsel %vm706, %v488, 0
        %v1179 = vsel %vm706, %v490, 0
        %v1182 = vsel %vm706, %v492, 0
        %v1185 = vsel %vm706, %v494, 0
        %v1188 = vsel %vm706, %v496, 0
        %v1191 = vsel %vm706, %v498, 0
        %v1194 = vsel %vm706, %v500, 0
        %v1197 = vsel %vm706, %v502, 0
        %v1200 = vsel %vm706, %v504, 0
        %v1203 = vsel %vm706, %v506, 0
        %v1206 = vsel %vm706, %v508, 0
        %v1209 = vsel %vm706, %v510, 0
        %v1212 = vsel %vm706, %v512, 0
        %v1215 = vsel %vm706, %v514, 0
        %v1218 = vsel %vm706, %v516, 0
        %v1221 = vsel %vm706, %v518, 0
        %v1224 = vsel %vm706, %v520, 0
        %v1227 = vsel %vm706, %v522, 0
        %v1230 = vsel %vm706, %v524, 0
        %v1233 = vsel %vm706, %v526, 0
        %v1236 = vsel %vm706, %v528, 0
        %v1239 = vsel %vm706, %v530, 0
        %v1242 = vsel %vm706, %v532, 0
        %v1245 = vsel %vm706, %v534, 0
        %v1248 = vsel %vm706, %v536, 0
        %v1251 = vsel %vm706, %v538, 0
        %v1254 = vsel %vm706, %v540, 0
        %v1257 = vsel %vm706, %v542, 0
        %v1260 = vsel %vm706, %v544, 0
        %v1263 = vsel %vm706, %v546, 0
        %v1266 = vsel %vm706, %v548, 0
        %v1269 = vsel %vm706, %v550, 0
        %v1272 = vsel %vm706, %v552, 0
        %v1275 = vsel %vm706, %v554, 0
        %v1278 = vsel %vm706, %v556, 0
        %v1281 = vsel %vm706, %v558, 0
        %v1284 = vsel %vm706, %v560, 0
        %v1287 = vsel %vm706, %v562, 0
        %v1290 = vsel %vm706, %v564, 0
        %v1293 = vsel %vm706, %v566, 0
        %v1296 = vsel %vm706, %v568, 0
        %v1299 = vsel %vm706, %v570, 0
        %v1302 = vsel %vm706, %v572, 0
        %v1305 = vsel %vm706, %v574, 0
        %v1308 = vsel %vm706, %v576, 0
        %v1311 = vsel %vm706, %v578, 0
        %v1314 = vsel %vm706, %v580, 0
        %v1317 = vsel %vm706, %v582, 0
        %v1320 = vsel %vm706, %v584, 0
        %v1323 = vsel %vm706, %v586, 0
        %v1326 = vsel %vm706, %v588, 0
        %v1329 = vsel %vm706, %v590, 0
        %v1332 = vsel %vm706, %v592, 0
        %v1335 = vsel %vm706, %v594, 0
        %v1338 = vsel %vm706, %v596, 0
        %v1341 = vsel %vm706, %v598, 0
        %v1344 = vsel %vm706, %v600, 0
        %v1347 = vsel %vm706, %v602, 0
        %v1350 = vsel %vm706, %v604, 0
        %v1353 = vsel %vm706, %v606, 0
        %v1356 = vsel %vm706, %v608, 0
        %v1359 = vsel %vm706, %v610, 0
        %v1362 = vsel %vm706, %v612, 0
        %v1365 = vsel %vm706, %v614, 0
        %v1368 = vsel %vm706, %v616, 0
        %v1371 = vsel %vm706, %v618, 0
        %v1374 = vsel %vm706, %v620, 0
        %v1377 = vsel %vm706, %v622, 0
        %v1380 = vsel %vm706, %v624, 0
        %v1383 = vsel %vm706, %v626, 0
        %v1386 = vsel %vm706, %v628, 0
        %v1389 = vsel %vm706, %v630, 0
        %v1392 = vsel %vm706, %v632, 0
        %v1395 = vsel %vm706, %v634, 0
        %v1398 = vsel %vm706, %v636, 0
        %v1401 = vsel %vm706, %v638, 0
        %v1404 = vsel %vm706, %v640, 0
        %v1407 = vsel %vm706, %v642, 0
        %v1410 = vsel %vm706, %v644, 0
        %v1413 = vsel %vm706, %v646, 0
        %v1416 = vsel %vm706, %v648, 0
        %v1419 = vsel %vm706, %v650, 0
        %v1422 = vsel %vm706, %v652, 0
        %v1425 = vsel %vm706, %v654, 0
        %v1428 = vsel %vm706, %v656, 0
        %v1431 = vsel %vm706, %v658, 0
        %v1434 = vsel %vm706, %v660, 0
        %v1437 = vsel %vm706, %v662, 0
        %v1440 = vsel %vm706, %v664, 0
        %v1443 = vsel %vm706, %v666, 0
        %v1446 = vsel %vm706, %v668, 0
        %v1449 = vsel %vm706, %v670, 0
        %v1452 = vsel %vm706, %v672, 0
        %v1455 = vsel %vm706, %v674, 0
        %v1458 = vsel %vm706, %v676, 0
        %v1461 = vsel %vm706, %v678, 0
        %v1464 = vsel %vm706, %v680, 0
        %v1467 = vsel %vm706, %v682, 0
        %v1470 = vsel %vm706, %v684, 0
        %v1473 = vsel %vm706, %v686, 0
        %1475 = vmatprep.subr.mxu0 0.0
        %1476 = vmatpush1.msra.mxu0 %v702
        %1477 = vmatprep.subr.mxu0 0.0
        %1478 = vmatpush1.msra.mxu0 %v701
        %1479 = vmatprep.subr.mxu0 0.0
        %1480 = vmatpush1.msra.mxu0 %v700
        %1481 = vmatprep.subr.mxu0 0.0
        %1482 = vmatpush1.msra.mxu0 %v699
        %1483 = vmatprep.subr.mxu0 0.0
        %1484 = vmatpush1.msra.mxu0 %v698
        %1485 = vmatprep.subr.mxu0 0.0
        %1486 = vmatpush1.msra.mxu0 %v697
        %1487 = vmatprep.subr.mxu0 0.0
        %1488 = vmatpush1.msra.mxu0 %v696
        %1489 = vmatprep.subr.mxu0 0.0
        %1490 = vmatpush1.msra.mxu0 %v695
        %1491 = vmatprep.subr.mxu0 0.0
        %1492 = vmatpush1.msra.mxu0 %v694
        %1493 = vmatprep.subr.mxu0 0.0
        %1494 = vmatpush1.msra.mxu0 %v693
        %1495 = vmatprep.subr.mxu0 0.0
        %1496 = vmatpush1.msra.mxu0 %v692
        %1497 = vmatprep.subr.mxu0 0.0
        %1498 = vmatpush1.msra.mxu0 %v691
        %1499 = vmatprep.subr.mxu0 0.0
        %1500 = vmatpush1.msra.mxu0 %v690
        %1501 = vmatprep.subr.mxu0 0.0
        %1502 = vmatpush1.msra.mxu0 %v689
        %1503 = vmatprep.subr.mxu0 0.0
        %1504 = vmatpush1.msra.mxu0 %v688
        %1505 = vmatprep.subr.mxu0 0.0
        %1506 = vmatpush1.msra.mxu0 %v687
        %1507 = vmatprep.subr.mxu0 0.0
        %1508 = vmatpush2.msra.mxu0 0.0
        %1509 = vmatprep.subr.mxu0 0.0
        %1510 = vmatpush2.msra.mxu0 0.0
        %1511 = vmatprep.subr.mxu0 0.0
        %1512 = vmatpush2.msra.mxu0 0.0
        %1513 = vmatprep.subr.mxu0 0.0
        %1514 = vmatpush2.msra.mxu0 0.0
        %1515 = vmatprep.subr.mxu0 0.0
        %1516 = vmatpush2.msra.mxu0 0.0
        %1517 = vmatprep.subr.mxu0 0.0
        %1518 = vmatpush2.msra.mxu0 0.0
        %1519 = vmatprep.subr.mxu0 0.0
        %1520 = vmatpush2.msra.mxu0 0.0
        %1521 = vmatprep.subr.mxu0 0.0
        %1522 = vmatpush2.msra.mxu0 0.0
        %1523 = vmatprep.subr.mxu0 0.0
        %1524 = vmatpush2.msra.mxu0 0.0
        %1525 = vmatprep.subr.mxu0 0.0
        %1526 = vmatpush2.msra.mxu0 0.0
        %1527 = vmatprep.subr.mxu0 0.0
        %1528 = vmatpush2.msra.mxu0 0.0
        %1529 = vmatprep.subr.mxu0 0.0
        %1530 = vmatpush2.msra.mxu0 0.0
        %1531 = vmatprep.subr.mxu0 0.0
        %1532 = vmatpush2.msra.mxu0 0.0
        %1533 = vmatprep.subr.mxu0 0.0
        %1534 = vmatpush2.msra.mxu0 0.0
        %1535 = vmatprep.subr.mxu0 0.0
        %1536 = vmatpush2.msra.mxu0 %v704
        %1537 = vmatprep.subr.mxu0 0.0
        %1538 = vmatpush2.msra.mxu0 %v703
        %1539 = vmatprep.mubr.f32.mxu0 %v708
        %1540 = vmatmul.mubr.f32.gmra.mxu0 %v175
        %v1541 = vpop.f32.mrf.mxu0
        %v1542 = vadd.f32 0.0, %v1541
        %v1543 = vpop.f32.mrf.mxu0
        %1544 = vmatprep.mubr.f32.mxu0 %v711
        %1545 = vmatmul.mubr.f32.gmra.mxu0 %v177
        %v1546 = vpop.f32.mrf.mxu0
        %v1547 = vadd.f32 0.0, %v1546
        %v1548 = vpop.f32.mrf.mxu0
        %1549 = vmatprep.mubr.f32.mxu0 %v714
        %1550 = vmatmul.mubr.f32.gmra.mxu0 %v179
        %v1551 = vpop.f32.mrf.mxu0
        %v1552 = vadd.f32 0.0, %v1551
        %v1553 = vpop.f32.mrf.mxu0
        %1554 = vmatprep.mubr.f32.mxu0 %v717
        %1555 = vmatmul.mubr.f32.gmra.mxu0 %v181
        %v1556 = vpop.f32.mrf.mxu0
        %v1557 = vadd.f32 0.0, %v1556
        %v1558 = vpop.f32.mrf.mxu0
        %1559 = vmatprep.mubr.f32.mxu0 %v720
        %1560 = vmatmul.mubr.f32.gmra.mxu0 %v183
        %v1561 = vpop.f32.mrf.mxu0
        %v1562 = vadd.f32 0.0, %v1561
        %v1563 = vpop.f32.mrf.mxu0
        %1564 = vmatprep.mubr.f32.mxu0 %v723
        %1565 = vmatmul.mubr.f32.gmra.mxu0 %v185
        %v1566 = vpop.f32.mrf.mxu0
        %v1567 = vadd.f32 0.0, %v1566
        %v1568 = vpop.f32.mrf.mxu0
        %1569 = vmatprep.mubr.f32.mxu0 %v726
        %1570 = vmatmul.mubr.f32.gmra.mxu0 %v187
        %v1571 = vpop.f32.mrf.mxu0
        %v1572 = vadd.f32 0.0, %v1571
        %v1573 = vpop.f32.mrf.mxu0
        %1574 = vmatprep.mubr.f32.mxu0 %v729
        %1575 = vmatmul.mubr.f32.gmra.mxu0 %v189
        %v1576 = vpop.f32.mrf.mxu0
        %v1577 = vadd.f32 0.0, %v1576
        %v1578 = vpop.f32.mrf.mxu0
        %1579 = vmatprep.mubr.f32.mxu0 %v732
        %1580 = vmatmul.mubr.f32.gmra.mxu0 %v191
        %v1581 = vpop.f32.mrf.mxu0
        %v1582 = vadd.f32 0.0, %v1581
        %v1583 = vpop.f32.mrf.mxu0
        %1584 = vmatprep.mubr.f32.mxu0 %v735
        %1585 = vmatmul.mubr.f32.gmra.mxu0 %v193
        %v1586 = vpop.f32.mrf.mxu0
        %v1587 = vadd.f32 0.0, %v1586
        %v1588 = vpop.f32.mrf.mxu0
        %1589 = vmatprep.mubr.f32.mxu0 %v738
        %1590 = vmatmul.mubr.f32.gmra.mxu0 %v195
        %v1591 = vpop.f32.mrf.mxu0
        %v1592 = vadd.f32 0.0, %v1591
        %v1593 = vpop.f32.mrf.mxu0
        %1594 = vmatprep.mubr.f32.mxu0 %v741
        %1595 = vmatmul.mubr.f32.gmra.mxu0 %v197
        %v1596 = vpop.f32.mrf.mxu0
        %v1597 = vadd.f32 0.0, %v1596
        %v1598 = vpop.f32.mrf.mxu0
        %1599 = vmatprep.mubr.f32.mxu0 %v744
        %1600 = vmatmul.mubr.f32.gmra.mxu0 %v199
        %v1601 = vpop.f32.mrf.mxu0
        %v1602 = vadd.f32 0.0, %v1601
        %v1603 = vpop.f32.mrf.mxu0
        %1604 = vmatprep.mubr.f32.mxu0 %v747
        %1605 = vmatmul.mubr.f32.gmra.mxu0 %v201
        %v1606 = vpop.f32.mrf.mxu0
        %v1607 = vadd.f32 0.0, %v1606
        %v1608 = vpop.f32.mrf.mxu0
        %1609 = vmatprep.mubr.f32.mxu0 %v750
        %1610 = vmatmul.mubr.f32.gmra.mxu0 %v203
        %v1611 = vpop.f32.mrf.mxu0
        %v1612 = vadd.f32 0.0, %v1611
        %v1613 = vpop.f32.mrf.mxu0
        %1614 = vmatprep.mubr.f32.mxu0 %v753
        %1615 = vmatmul.mubr.f32.gmra.mxu0 %v205
        %v1616 = vpop.f32.mrf.mxu0
        %v1617 = vadd.f32 0.0, %v1616
        %v1618 = vpop.f32.mrf.mxu0
        %1619 = vmatprep.mubr.f32.mxu0 %v756
        %1620 = vmatmul.mubr.f32.gmra.mxu0 %v207
        %v1621 = vpop.f32.mrf.mxu0
        %v1622 = vadd.f32 0.0, %v1621
        %v1623 = vpop.f32.mrf.mxu0
        %1624 = vmatprep.mubr.f32.mxu0 %v759
        %1625 = vmatmul.mubr.f32.gmra.mxu0 %v209
        %v1626 = vpop.f32.mrf.mxu0
        %v1627 = vadd.f32 0.0, %v1626
        %v1628 = vpop.f32.mrf.mxu0
        %1629 = vmatprep.mubr.f32.mxu0 %v762
        %1630 = vmatmul.mubr.f32.gmra.mxu0 %v211
        %v1631 = vpop.f32.mrf.mxu0
        %v1632 = vadd.f32 0.0, %v1631
        %v1633 = vpop.f32.mrf.mxu0
        %1634 = vmatprep.mubr.f32.mxu0 %v765
        %1635 = vmatmul.mubr.f32.gmra.mxu0 %v213
        %v1636 = vpop.f32.mrf.mxu0
        %v1637 = vadd.f32 0.0, %v1636
        %v1638 = vpop.f32.mrf.mxu0
        %1639 = vmatprep.mubr.f32.mxu0 %v768
        %1640 = vmatmul.mubr.f32.gmra.mxu0 %v215
        %v1641 = vpop.f32.mrf.mxu0
        %v1642 = vadd.f32 0.0, %v1641
        %v1643 = vpop.f32.mrf.mxu0
        %1644 = vmatprep.mubr.f32.mxu0 %v771
        %1645 = vmatmul.mubr.f32.gmra.mxu0 %v217
        %v1646 = vpop.f32.mrf.mxu0
        %v1647 = vadd.f32 0.0, %v1646
        %v1648 = vpop.f32.mrf.mxu0
        %1649 = vmatprep.mubr.f32.mxu0 %v774
        %1650 = vmatmul.mubr.f32.gmra.mxu0 %v219
        %v1651 = vpop.f32.mrf.mxu0
        %v1652 = vadd.f32 0.0, %v1651
        %v1653 = vpop.f32.mrf.mxu0
        %1654 = vmatprep.mubr.f32.mxu0 %v777
        %1655 = vmatmul.mubr.f32.gmra.mxu0 %v221
        %v1656 = vpop.f32.mrf.mxu0
        %v1657 = vadd.f32 0.0, %v1656
        %v1658 = vpop.f32.mrf.mxu0
        %1659 = vmatprep.mubr.f32.mxu0 %v780
        %1660 = vmatmul.mubr.f32.gmra.mxu0 %v223
        %v1661 = vpop.f32.mrf.mxu0
        %v1662 = vadd.f32 0.0, %v1661
        %v1663 = vpop.f32.mrf.mxu0
        %1664 = vmatprep.mubr.f32.mxu0 %v783
        %1665 = vmatmul.mubr.f32.gmra.mxu0 %v225
        %v1666 = vpop.f32.mrf.mxu0
        %v1667 = vadd.f32 0.0, %v1666
        %v1668 = vpop.f32.mrf.mxu0
        %1669 = vmatprep.mubr.f32.mxu0 %v786
        %1670 = vmatmul.mubr.f32.gmra.mxu0 %v227
        %v1671 = vpop.f32.mrf.mxu0
        %v1672 = vadd.f32 0.0, %v1671
        %v1673 = vpop.f32.mrf.mxu0
        %1674 = vmatprep.mubr.f32.mxu0 %v789
        %1675 = vmatmul.mubr.f32.gmra.mxu0 %v229
        %v1676 = vpop.f32.mrf.mxu0
        %v1677 = vadd.f32 0.0, %v1676
        %v1678 = vpop.f32.mrf.mxu0
        %1679 = vmatprep.mubr.f32.mxu0 %v792
        %1680 = vmatmul.mubr.f32.gmra.mxu0 %v231
        %v1681 = vpop.f32.mrf.mxu0
        %v1682 = vadd.f32 0.0, %v1681
        %v1683 = vpop.f32.mrf.mxu0
        %1684 = vmatprep.mubr.f32.mxu0 %v795
        %1685 = vmatmul.mubr.f32.gmra.mxu0 %v233
        %v1686 = vpop.f32.mrf.mxu0
        %v1687 = vadd.f32 0.0, %v1686
        %v1688 = vpop.f32.mrf.mxu0
        %1689 = vmatprep.mubr.f32.mxu0 %v798
        %1690 = vmatmul.mubr.f32.gmra.mxu0 %v235
        %v1691 = vpop.f32.mrf.mxu0
        %v1692 = vadd.f32 0.0, %v1691
        %v1693 = vpop.f32.mrf.mxu0
        %1694 = vmatprep.mubr.f32.mxu0 %v801
        %1695 = vmatmul.mubr.f32.gmra.mxu0 %v237
        %v1696 = vpop.f32.mrf.mxu0
        %v1697 = vadd.f32 0.0, %v1696
        %v1698 = vpop.f32.mrf.mxu0
        %1699 = vmatprep.mubr.f32.mxu0 %v804
        %1700 = vmatmul.mubr.f32.gmra.mxu0 %v239
        %v1701 = vpop.f32.mrf.mxu0
        %v1702 = vadd.f32 0.0, %v1701
        %v1703 = vpop.f32.mrf.mxu0
        %1704 = vmatprep.mubr.f32.mxu0 %v807
        %1705 = vmatmul.mubr.f32.gmra.mxu0 %v241
        %v1706 = vpop.f32.mrf.mxu0
        %v1707 = vadd.f32 0.0, %v1706
        %v1708 = vpop.f32.mrf.mxu0
        %1709 = vmatprep.mubr.f32.mxu0 %v810
        %1710 = vmatmul.mubr.f32.gmra.mxu0 %v243
        %v1711 = vpop.f32.mrf.mxu0
        %v1712 = vadd.f32 0.0, %v1711
        %v1713 = vpop.f32.mrf.mxu0
        %1714 = vmatprep.mubr.f32.mxu0 %v813
        %1715 = vmatmul.mubr.f32.gmra.mxu0 %v245
        %v1716 = vpop.f32.mrf.mxu0
        %v1717 = vadd.f32 0.0, %v1716
        %v1718 = vpop.f32.mrf.mxu0
        %1719 = vmatprep.mubr.f32.mxu0 %v816
        %1720 = vmatmul.mubr.f32.gmra.mxu0 %v247
        %v1721 = vpop.f32.mrf.mxu0
        %v1722 = vadd.f32 0.0, %v1721
        %v1723 = vpop.f32.mrf.mxu0
        %1724 = vmatprep.mubr.f32.mxu0 %v819
        %1725 = vmatmul.mubr.f32.gmra.mxu0 %v249
        %v1726 = vpop.f32.mrf.mxu0
        %v1727 = vadd.f32 0.0, %v1726
        %v1728 = vpop.f32.mrf.mxu0
        %1729 = vmatprep.mubr.f32.mxu0 %v822
        %1730 = vmatmul.mubr.f32.gmra.mxu0 %v251
        %v1731 = vpop.f32.mrf.mxu0
        %v1732 = vadd.f32 0.0, %v1731
        %v1733 = vpop.f32.mrf.mxu0
        %1734 = vmatprep.mubr.f32.mxu0 %v825
        %1735 = vmatmul.mubr.f32.gmra.mxu0 %v253
        %v1736 = vpop.f32.mrf.mxu0
        %v1737 = vadd.f32 0.0, %v1736
        %v1738 = vpop.f32.mrf.mxu0
        %1739 = vmatprep.mubr.f32.mxu0 %v828
        %1740 = vmatmul.mubr.f32.gmra.mxu0 %v255
        %v1741 = vpop.f32.mrf.mxu0
        %v1742 = vadd.f32 0.0, %v1741
        %v1743 = vpop.f32.mrf.mxu0
        %1744 = vmatprep.mubr.f32.mxu0 %v831
        %1745 = vmatmul.mubr.f32.gmra.mxu0 %v257
        %v1746 = vpop.f32.mrf.mxu0
        %v1747 = vadd.f32 0.0, %v1746
        %v1748 = vpop.f32.mrf.mxu0
        %1749 = vmatprep.mubr.f32.mxu0 %v834
        %1750 = vmatmul.mubr.f32.gmra.mxu0 %v259
        %v1751 = vpop.f32.mrf.mxu0
        %v1752 = vadd.f32 0.0, %v1751
        %v1753 = vpop.f32.mrf.mxu0
        %1754 = vmatprep.mubr.f32.mxu0 %v837
        %1755 = vmatmul.mubr.f32.gmra.mxu0 %v261
        %v1756 = vpop.f32.mrf.mxu0
        %v1757 = vadd.f32 0.0, %v1756
        %v1758 = vpop.f32.mrf.mxu0
        %1759 = vmatprep.mubr.f32.mxu0 %v840
        %1760 = vmatmul.mubr.f32.gmra.mxu0 %v263
        %v1761 = vpop.f32.mrf.mxu0
        %v1762 = vadd.f32 0.0, %v1761
        %v1763 = vpop.f32.mrf.mxu0
        %1764 = vmatprep.mubr.f32.mxu0 %v843
        %1765 = vmatmul.mubr.f32.gmra.mxu0 %v265
        %v1766 = vpop.f32.mrf.mxu0
        %v1767 = vadd.f32 0.0, %v1766
        %v1768 = vpop.f32.mrf.mxu0
        %1769 = vmatprep.mubr.f32.mxu0 %v846
        %1770 = vmatmul.mubr.f32.gmra.mxu0 %v267
        %v1771 = vpop.f32.mrf.mxu0
        %v1772 = vadd.f32 0.0, %v1771
        %v1773 = vpop.f32.mrf.mxu0
        %1774 = vmatprep.mubr.f32.mxu0 %v849
        %1775 = vmatmul.mubr.f32.gmra.mxu0 %v269
        %v1776 = vpop.f32.mrf.mxu0
        %v1777 = vadd.f32 0.0, %v1776
        %v1778 = vpop.f32.mrf.mxu0
        %1779 = vmatprep.mubr.f32.mxu0 %v852
        %1780 = vmatmul.mubr.f32.gmra.mxu0 %v271
        %v1781 = vpop.f32.mrf.mxu0
        %v1782 = vadd.f32 0.0, %v1781
        %v1783 = vpop.f32.mrf.mxu0
        %1784 = vmatprep.mubr.f32.mxu0 %v855
        %1785 = vmatmul.mubr.f32.gmra.mxu0 %v273
        %v1786 = vpop.f32.mrf.mxu0
        %v1787 = vadd.f32 0.0, %v1786
        %v1788 = vpop.f32.mrf.mxu0
        %1789 = vmatprep.mubr.f32.mxu0 %v858
        %1790 = vmatmul.mubr.f32.gmra.mxu0 %v275
        %v1791 = vpop.f32.mrf.mxu0
        %v1792 = vadd.f32 0.0, %v1791
        %v1793 = vpop.f32.mrf.mxu0
        %1794 = vmatprep.mubr.f32.mxu0 %v861
        %1795 = vmatmul.mubr.f32.gmra.mxu0 %v277
        %v1796 = vpop.f32.mrf.mxu0
        %v1797 = vadd.f32 0.0, %v1796
        %v1798 = vpop.f32.mrf.mxu0
        %1799 = vmatprep.mubr.f32.mxu0 %v864
        %1800 = vmatmul.mubr.f32.gmra.mxu0 %v279
        %v1801 = vpop.f32.mrf.mxu0
        %v1802 = vadd.f32 0.0, %v1801
        %v1803 = vpop.f32.mrf.mxu0
        %1804 = vmatprep.mubr.f32.mxu0 %v867
        %1805 = vmatmul.mubr.f32.gmra.mxu0 %v281
        %v1806 = vpop.f32.mrf.mxu0
        %v1807 = vadd.f32 0.0, %v1806
        %v1808 = vpop.f32.mrf.mxu0
        %1809 = vmatprep.mubr.f32.mxu0 %v870
        %1810 = vmatmul.mubr.f32.gmra.mxu0 %v283
        %v1811 = vpop.f32.mrf.mxu0
        %v1812 = vadd.f32 0.0, %v1811
        %v1813 = vpop.f32.mrf.mxu0
        %1814 = vmatprep.mubr.f32.mxu0 %v873
        %1815 = vmatmul.mubr.f32.gmra.mxu0 %v285
        %v1816 = vpop.f32.mrf.mxu0
        %v1817 = vadd.f32 0.0, %v1816
        %v1818 = vpop.f32.mrf.mxu0
        %1819 = vmatprep.mubr.f32.mxu0 %v876
        %1820 = vmatmul.mubr.f32.gmra.mxu0 %v287
        %v1821 = vpop.f32.mrf.mxu0
        %v1822 = vadd.f32 0.0, %v1821
        %v1823 = vpop.f32.mrf.mxu0
        %1824 = vmatprep.mubr.f32.mxu0 %v879
        %1825 = vmatmul.mubr.f32.gmra.mxu0 %v289
        %v1826 = vpop.f32.mrf.mxu0
        %v1827 = vadd.f32 0.0, %v1826
        %v1828 = vpop.f32.mrf.mxu0
        %1829 = vmatprep.mubr.f32.mxu0 %v882
        %1830 = vmatmul.mubr.f32.gmra.mxu0 %v291
        %v1831 = vpop.f32.mrf.mxu0
        %v1832 = vadd.f32 0.0, %v1831
        %v1833 = vpop.f32.mrf.mxu0
        %1834 = vmatprep.mubr.f32.mxu0 %v885
        %1835 = vmatmul.mubr.f32.gmra.mxu0 %v293
        %v1836 = vpop.f32.mrf.mxu0
        %v1837 = vadd.f32 0.0, %v1836
        %v1838 = vpop.f32.mrf.mxu0
        %1839 = vmatprep.mubr.f32.mxu0 %v888
        %1840 = vmatmul.mubr.f32.gmra.mxu0 %v295
        %v1841 = vpop.f32.mrf.mxu0
        %v1842 = vadd.f32 0.0, %v1841
        %v1843 = vpop.f32.mrf.mxu0
        %1844 = vmatprep.mubr.f32.mxu0 %v891
        %1845 = vmatmul.mubr.f32.gmra.mxu0 %v297
        %v1846 = vpop.f32.mrf.mxu0
        %v1847 = vadd.f32 0.0, %v1846
        %v1848 = vpop.f32.mrf.mxu0
        %1849 = vmatprep.mubr.f32.mxu0 %v894
        %1850 = vmatmul.mubr.f32.gmra.mxu0 %v299
        %v1851 = vpop.f32.mrf.mxu0
        %v1852 = vadd.f32 0.0, %v1851
        %v1853 = vpop.f32.mrf.mxu0
        %1854 = vmatprep.mubr.f32.mxu0 %v897
        %1855 = vmatmul.mubr.f32.gmra.mxu0 %v301
        %v1856 = vpop.f32.mrf.mxu0
        %v1857 = vadd.f32 0.0, %v1856
        %v1858 = vpop.f32.mrf.mxu0
        %1859 = vmatprep.mubr.f32.mxu0 %v900
        %1860 = vmatmul.mubr.f32.gmra.mxu0 %v303
        %v1861 = vpop.f32.mrf.mxu0
        %v1862 = vadd.f32 0.0, %v1861
        %v1863 = vpop.f32.mrf.mxu0
        %1864 = vmatprep.mubr.f32.mxu0 %v903
        %1865 = vmatmul.mubr.f32.gmra.mxu0 %v305
        %v1866 = vpop.f32.mrf.mxu0
        %v1867 = vadd.f32 0.0, %v1866
        %v1868 = vpop.f32.mrf.mxu0
        %1869 = vmatprep.mubr.f32.mxu0 %v906
        %1870 = vmatmul.mubr.f32.gmra.mxu0 %v307
        %v1871 = vpop.f32.mrf.mxu0
        %v1872 = vadd.f32 0.0, %v1871
        %v1873 = vpop.f32.mrf.mxu0
        %1874 = vmatprep.mubr.f32.mxu0 %v909
        %1875 = vmatmul.mubr.f32.gmra.mxu0 %v309
        %v1876 = vpop.f32.mrf.mxu0
        %v1877 = vadd.f32 0.0, %v1876
        %v1878 = vpop.f32.mrf.mxu0
        %1879 = vmatprep.mubr.f32.mxu0 %v912
        %1880 = vmatmul.mubr.f32.gmra.mxu0 %v311
        %v1881 = vpop.f32.mrf.mxu0
        %v1882 = vadd.f32 0.0, %v1881
        %v1883 = vpop.f32.mrf.mxu0
        %1884 = vmatprep.mubr.f32.mxu0 %v915
        %1885 = vmatmul.mubr.f32.gmra.mxu0 %v313
        %v1886 = vpop.f32.mrf.mxu0
        %v1887 = vadd.f32 0.0, %v1886
        %v1888 = vpop.f32.mrf.mxu0
        %1889 = vmatprep.mubr.f32.mxu0 %v918
        %1890 = vmatmul.mubr.f32.gmra.mxu0 %v315
        %v1891 = vpop.f32.mrf.mxu0
        %v1892 = vadd.f32 0.0, %v1891
        %v1893 = vpop.f32.mrf.mxu0
        %1894 = vmatprep.mubr.f32.mxu0 %v921
        %1895 = vmatmul.mubr.f32.gmra.mxu0 %v317
        %v1896 = vpop.f32.mrf.mxu0
        %v1897 = vadd.f32 0.0, %v1896
        %v1898 = vpop.f32.mrf.mxu0
        %1899 = vmatprep.mubr.f32.mxu0 %v924
        %1900 = vmatmul.mubr.f32.gmra.mxu0 %v319
        %v1901 = vpop.f32.mrf.mxu0
        %v1902 = vadd.f32 0.0, %v1901
        %v1903 = vpop.f32.mrf.mxu0
        %1904 = vmatprep.mubr.f32.mxu0 %v927
        %1905 = vmatmul.mubr.f32.gmra.mxu0 %v321
        %v1906 = vpop.f32.mrf.mxu0
        %v1907 = vadd.f32 0.0, %v1906
        %v1908 = vpop.f32.mrf.mxu0
        %1909 = vmatprep.mubr.f32.mxu0 %v930
        %1910 = vmatmul.mubr.f32.gmra.mxu0 %v323
        %v1911 = vpop.f32.mrf.mxu0
        %v1912 = vadd.f32 0.0, %v1911
        %v1913 = vpop.f32.mrf.mxu0
        %1914 = vmatprep.mubr.f32.mxu0 %v933
        %1915 = vmatmul.mubr.f32.gmra.mxu0 %v325
        %v1916 = vpop.f32.mrf.mxu0
        %v1917 = vadd.f32 0.0, %v1916
        %v1918 = vpop.f32.mrf.mxu0
        %1919 = vmatprep.mubr.f32.mxu0 %v936
        %1920 = vmatmul.mubr.f32.gmra.mxu0 %v327
        %v1921 = vpop.f32.mrf.mxu0
        %v1922 = vadd.f32 0.0, %v1921
        %v1923 = vpop.f32.mrf.mxu0
        %1924 = vmatprep.mubr.f32.mxu0 %v939
        %1925 = vmatmul.mubr.f32.gmra.mxu0 %v329
        %v1926 = vpop.f32.mrf.mxu0
        %v1927 = vadd.f32 0.0, %v1926
        %v1928 = vpop.f32.mrf.mxu0
        %1929 = vmatprep.mubr.f32.mxu0 %v942
        %1930 = vmatmul.mubr.f32.gmra.mxu0 %v331
        %v1931 = vpop.f32.mrf.mxu0
        %v1932 = vadd.f32 0.0, %v1931
        %v1933 = vpop.f32.mrf.mxu0
        %1934 = vmatprep.mubr.f32.mxu0 %v945
        %1935 = vmatmul.mubr.f32.gmra.mxu0 %v333
        %v1936 = vpop.f32.mrf.mxu0
        %v1937 = vadd.f32 0.0, %v1936
        %v1938 = vpop.f32.mrf.mxu0
        %1939 = vmatprep.mubr.f32.mxu0 %v948
        %1940 = vmatmul.mubr.f32.gmra.mxu0 %v335
        %v1941 = vpop.f32.mrf.mxu0
        %v1942 = vadd.f32 0.0, %v1941
        %v1943 = vpop.f32.mrf.mxu0
        %1944 = vmatprep.mubr.f32.mxu0 %v951
        %1945 = vmatmul.mubr.f32.gmra.mxu0 %v337
        %v1946 = vpop.f32.mrf.mxu0
        %v1947 = vadd.f32 0.0, %v1946
        %v1948 = vpop.f32.mrf.mxu0
        %1949 = vmatprep.mubr.f32.mxu0 %v954
        %1950 = vmatmul.mubr.f32.gmra.mxu0 %v339
        %v1951 = vpop.f32.mrf.mxu0
        %v1952 = vadd.f32 0.0, %v1951
        %v1953 = vpop.f32.mrf.mxu0
        %1954 = vmatprep.mubr.f32.mxu0 %v957
        %1955 = vmatmul.mubr.f32.gmra.mxu0 %v341
        %v1956 = vpop.f32.mrf.mxu0
        %v1957 = vadd.f32 0.0, %v1956
        %v1958 = vpop.f32.mrf.mxu0
        %1959 = vmatprep.mubr.f32.mxu0 %v960
        %1960 = vmatmul.mubr.f32.gmra.mxu0 %v343
        %v1961 = vpop.f32.mrf.mxu0
        %v1962 = vadd.f32 0.0, %v1961
        %v1963 = vpop.f32.mrf.mxu0
        %1964 = vmatprep.mubr.f32.mxu0 %v963
        %1965 = vmatmul.mubr.f32.gmra.mxu0 %v345
        %v1966 = vpop.f32.mrf.mxu0
        %v1967 = vadd.f32 0.0, %v1966
        %v1968 = vpop.f32.mrf.mxu0
        %1969 = vmatprep.mubr.f32.mxu0 %v966
        %1970 = vmatmul.mubr.f32.gmra.mxu0 %v347
        %v1971 = vpop.f32.mrf.mxu0
        %v1972 = vadd.f32 0.0, %v1971
        %v1973 = vpop.f32.mrf.mxu0
        %1974 = vmatprep.mubr.f32.mxu0 %v969
        %1975 = vmatmul.mubr.f32.gmra.mxu0 %v349
        %v1976 = vpop.f32.mrf.mxu0
        %v1977 = vadd.f32 0.0, %v1976
        %v1978 = vpop.f32.mrf.mxu0
        %1979 = vmatprep.mubr.f32.mxu0 %v972
        %1980 = vmatmul.mubr.f32.gmra.mxu0 %v351
        %v1981 = vpop.f32.mrf.mxu0
        %v1982 = vadd.f32 0.0, %v1981
        %v1983 = vpop.f32.mrf.mxu0
        %1984 = vmatprep.mubr.f32.mxu0 %v975
        %1985 = vmatmul.mubr.f32.gmra.mxu0 %v353
        %v1986 = vpop.f32.mrf.mxu0
        %v1987 = vadd.f32 0.0, %v1986
        %v1988 = vpop.f32.mrf.mxu0
        %1989 = vmatprep.mubr.f32.mxu0 %v978
        %1990 = vmatmul.mubr.f32.gmra.mxu0 %v355
        %v1991 = vpop.f32.mrf.mxu0
        %v1992 = vadd.f32 0.0, %v1991
        %v1993 = vpop.f32.mrf.mxu0
        %1994 = vmatprep.mubr.f32.mxu0 %v981
        %1995 = vmatmul.mubr.f32.gmra.mxu0 %v357
        %v1996 = vpop.f32.mrf.mxu0
        %v1997 = vadd.f32 0.0, %v1996
        %v1998 = vpop.f32.mrf.mxu0
        %1999 = vmatprep.mubr.f32.mxu0 %v984
        %2000 = vmatmul.mubr.f32.gmra.mxu0 %v359
        %v2001 = vpop.f32.mrf.mxu0
        %v2002 = vadd.f32 0.0, %v2001
        %v2003 = vpop.f32.mrf.mxu0
        %2004 = vmatprep.mubr.f32.mxu0 %v987
        %2005 = vmatmul.mubr.f32.gmra.mxu0 %v361
        %v2006 = vpop.f32.mrf.mxu0
        %v2007 = vadd.f32 0.0, %v2006
        %v2008 = vpop.f32.mrf.mxu0
        %2009 = vmatprep.mubr.f32.mxu0 %v990
        %2010 = vmatmul.mubr.f32.gmra.mxu0 %v363
        %v2011 = vpop.f32.mrf.mxu0
        %v2012 = vadd.f32 0.0, %v2011
        %v2013 = vpop.f32.mrf.mxu0
        %2014 = vmatprep.mubr.f32.mxu0 %v993
        %2015 = vmatmul.mubr.f32.gmra.mxu0 %v365
        %v2016 = vpop.f32.mrf.mxu0
        %v2017 = vadd.f32 0.0, %v2016
        %v2018 = vpop.f32.mrf.mxu0
        %2019 = vmatprep.mubr.f32.mxu0 %v996
        %2020 = vmatmul.mubr.f32.gmra.mxu0 %v367
        %v2021 = vpop.f32.mrf.mxu0
        %v2022 = vadd.f32 0.0, %v2021
        %v2023 = vpop.f32.mrf.mxu0
        %2024 = vmatprep.mubr.f32.mxu0 %v999
        %2025 = vmatmul.mubr.f32.gmra.mxu0 %v369
        %v2026 = vpop.f32.mrf.mxu0
        %v2027 = vadd.f32 0.0, %v2026
        %v2028 = vpop.f32.mrf.mxu0
        %2029 = vmatprep.mubr.f32.mxu0 %v1002
        %2030 = vmatmul.mubr.f32.gmra.mxu0 %v371
        %v2031 = vpop.f32.mrf.mxu0
        %v2032 = vadd.f32 0.0, %v2031
        %v2033 = vpop.f32.mrf.mxu0
        %2034 = vmatprep.mubr.f32.mxu0 %v1005
        %2035 = vmatmul.mubr.f32.gmra.mxu0 %v373
        %v2036 = vpop.f32.mrf.mxu0
        %v2037 = vadd.f32 0.0, %v2036
        %v2038 = vpop.f32.mrf.mxu0
        %2039 = vmatprep.mubr.f32.mxu0 %v1008
        %2040 = vmatmul.mubr.f32.gmra.mxu0 %v375
        %v2041 = vpop.f32.mrf.mxu0
        %v2042 = vadd.f32 0.0, %v2041
        %v2043 = vpop.f32.mrf.mxu0
        %2044 = vmatprep.mubr.f32.mxu0 %v1011
        %2045 = vmatmul.mubr.f32.gmra.mxu0 %v377
        %v2046 = vpop.f32.mrf.mxu0
        %v2047 = vadd.f32 0.0, %v2046
        %v2048 = vpop.f32.mrf.mxu0
        %2049 = vmatprep.mubr.f32.mxu0 %v1014
        %2050 = vmatmul.mubr.f32.gmra.mxu0 %v379
        %v2051 = vpop.f32.mrf.mxu0
        %v2052 = vadd.f32 0.0, %v2051
        %v2053 = vpop.f32.mrf.mxu0
        %2054 = vmatprep.mubr.f32.mxu0 %v1017
        %2055 = vmatmul.mubr.f32.gmra.mxu0 %v381
        %v2056 = vpop.f32.mrf.mxu0
        %v2057 = vadd.f32 0.0, %v2056
        %v2058 = vpop.f32.mrf.mxu0
        %2059 = vmatprep.mubr.f32.mxu0 %v1020
        %2060 = vmatmul.mubr.f32.gmra.mxu0 %v383
        %v2061 = vpop.f32.mrf.mxu0
        %v2062 = vadd.f32 0.0, %v2061
        %v2063 = vpop.f32.mrf.mxu0
        %2064 = vmatprep.mubr.f32.mxu0 %v1023
        %2065 = vmatmul.mubr.f32.gmra.mxu0 %v385
        %v2066 = vpop.f32.mrf.mxu0
        %v2067 = vadd.f32 0.0, %v2066
        %v2068 = vpop.f32.mrf.mxu0
        %2069 = vmatprep.mubr.f32.mxu0 %v1026
        %2070 = vmatmul.mubr.f32.gmra.mxu0 %v387
        %v2071 = vpop.f32.mrf.mxu0
        %v2072 = vadd.f32 0.0, %v2071
        %v2073 = vpop.f32.mrf.mxu0
        %2074 = vmatprep.mubr.f32.mxu0 %v1029
        %2075 = vmatmul.mubr.f32.gmra.mxu0 %v389
        %v2076 = vpop.f32.mrf.mxu0
        %v2077 = vadd.f32 0.0, %v2076
        %v2078 = vpop.f32.mrf.mxu0
        %2079 = vmatprep.mubr.f32.mxu0 %v1032
        %2080 = vmatmul.mubr.f32.gmra.mxu0 %v391
        %v2081 = vpop.f32.mrf.mxu0
        %v2082 = vadd.f32 0.0, %v2081
        %v2083 = vpop.f32.mrf.mxu0
        %2084 = vmatprep.mubr.f32.mxu0 %v1035
        %2085 = vmatmul.mubr.f32.gmra.mxu0 %v393
        %v2086 = vpop.f32.mrf.mxu0
        %v2087 = vadd.f32 0.0, %v2086
        %v2088 = vpop.f32.mrf.mxu0
        %2089 = vmatprep.mubr.f32.mxu0 %v1038
        %2090 = vmatmul.mubr.f32.gmra.mxu0 %v395
        %v2091 = vpop.f32.mrf.mxu0
        %v2092 = vadd.f32 0.0, %v2091
        %v2093 = vpop.f32.mrf.mxu0
        %2094 = vmatprep.mubr.f32.mxu0 %v1041
        %2095 = vmatmul.mubr.f32.gmra.mxu0 %v397
        %v2096 = vpop.f32.mrf.mxu0
        %v2097 = vadd.f32 0.0, %v2096
        %v2098 = vpop.f32.mrf.mxu0
        %2099 = vmatprep.mubr.f32.mxu0 %v1044
        %2100 = vmatmul.mubr.f32.gmra.mxu0 %v399
        %v2101 = vpop.f32.mrf.mxu0
        %v2102 = vadd.f32 0.0, %v2101
        %v2103 = vpop.f32.mrf.mxu0
        %2104 = vmatprep.mubr.f32.mxu0 %v1047
        %2105 = vmatmul.mubr.f32.gmra.mxu0 %v401
        %v2106 = vpop.f32.mrf.mxu0
        %v2107 = vadd.f32 0.0, %v2106
        %v2108 = vpop.f32.mrf.mxu0
        %2109 = vmatprep.mubr.f32.mxu0 %v1050
        %2110 = vmatmul.mubr.f32.gmra.mxu0 %v403
        %v2111 = vpop.f32.mrf.mxu0
        %v2112 = vadd.f32 0.0, %v2111
        %v2113 = vpop.f32.mrf.mxu0
        %2114 = vmatprep.mubr.f32.mxu0 %v1053
        %2115 = vmatmul.mubr.f32.gmra.mxu0 %v405
        %v2116 = vpop.f32.mrf.mxu0
        %v2117 = vadd.f32 0.0, %v2116
        %v2118 = vpop.f32.mrf.mxu0
        %2119 = vmatprep.mubr.f32.mxu0 %v1056
        %2120 = vmatmul.mubr.f32.gmra.mxu0 %v407
        %v2121 = vpop.f32.mrf.mxu0
        %v2122 = vadd.f32 0.0, %v2121
        %v2123 = vpop.f32.mrf.mxu0
        %2124 = vmatprep.mubr.f32.mxu0 %v1059
        %2125 = vmatmul.mubr.f32.gmra.mxu0 %v409
        %v2126 = vpop.f32.mrf.mxu0
        %v2127 = vadd.f32 0.0, %v2126
        %v2128 = vpop.f32.mrf.mxu0
        %2129 = vmatprep.mubr.f32.mxu0 %v1062
        %2130 = vmatmul.mubr.f32.gmra.mxu0 %v411
        %v2131 = vpop.f32.mrf.mxu0
        %v2132 = vadd.f32 0.0, %v2131
        %v2133 = vpop.f32.mrf.mxu0
        %2134 = vmatprep.mubr.f32.mxu0 %v1065
        %2135 = vmatmul.mubr.f32.gmra.mxu0 %v413
        %v2136 = vpop.f32.mrf.mxu0
        %v2137 = vadd.f32 0.0, %v2136
        %v2138 = vpop.f32.mrf.mxu0
        %2139 = vmatprep.mubr.f32.mxu0 %v1068
        %2140 = vmatmul.mubr.f32.gmra.mxu0 %v415
        %v2141 = vpop.f32.mrf.mxu0
        %v2142 = vadd.f32 0.0, %v2141
        %v2143 = vpop.f32.mrf.mxu0
        %2144 = vmatprep.mubr.f32.mxu0 %v1071
        %2145 = vmatmul.mubr.f32.gmra.mxu0 %v417
        %v2146 = vpop.f32.mrf.mxu0
        %v2147 = vadd.f32 0.0, %v2146
        %v2148 = vpop.f32.mrf.mxu0
        %2149 = vmatprep.mubr.f32.mxu0 %v1074
        %2150 = vmatmul.mubr.f32.gmra.mxu0 %v419
        %v2151 = vpop.f32.mrf.mxu0
        %v2152 = vadd.f32 0.0, %v2151
        %v2153 = vpop.f32.mrf.mxu0
        %2154 = vmatprep.mubr.f32.mxu0 %v1077
        %2155 = vmatmul.mubr.f32.gmra.mxu0 %v421
        %v2156 = vpop.f32.mrf.mxu0
        %v2157 = vadd.f32 0.0, %v2156
        %v2158 = vpop.f32.mrf.mxu0
        %2159 = vmatprep.mubr.f32.mxu0 %v1080
        %2160 = vmatmul.mubr.f32.gmra.mxu0 %v423
        %v2161 = vpop.f32.mrf.mxu0
        %v2162 = vadd.f32 0.0, %v2161
        %v2163 = vpop.f32.mrf.mxu0
        %2164 = vmatprep.mubr.f32.mxu0 %v1083
        %2165 = vmatmul.mubr.f32.gmra.mxu0 %v425
        %v2166 = vpop.f32.mrf.mxu0
        %v2167 = vadd.f32 0.0, %v2166
        %v2168 = vpop.f32.mrf.mxu0
        %2169 = vmatprep.mubr.f32.mxu0 %v1086
        %2170 = vmatmul.mubr.f32.gmra.mxu0 %v427
        %v2171 = vpop.f32.mrf.mxu0
        %v2172 = vadd.f32 0.0, %v2171
        %v2173 = vpop.f32.mrf.mxu0
        %2174 = vmatprep.mubr.f32.mxu0 %v1089
        %2175 = vmatmul.mubr.f32.gmra.mxu0 %v429
        %v2176 = vpop.f32.mrf.mxu0
        %v2177 = vadd.f32 0.0, %v2176
        %v2178 = vpop.f32.mrf.mxu0
        %2179 = vmatprep.mubr.f32.mxu0 %v1092
        %2180 = vmatmul.mubr.f32.gmra.mxu0 %v431
        %v2181 = vpop.f32.mrf.mxu0
        %v2182 = vadd.f32 0.0, %v2181
        %v2183 = vpop.f32.mrf.mxu0
        %2184 = vmatprep.mubr.f32.mxu0 %v1095
        %2185 = vmatmul.mubr.f32.gmra.mxu0 %v433
        %v2186 = vpop.f32.mrf.mxu0
        %v2187 = vadd.f32 0.0, %v2186
        %v2188 = vpop.f32.mrf.mxu0
        %2189 = vmatprep.mubr.f32.mxu0 %v1098
        %2190 = vmatmul.mubr.f32.gmra.mxu0 %v435
        %v2191 = vpop.f32.mrf.mxu0
        %v2192 = vadd.f32 0.0, %v2191
        %v2193 = vpop.f32.mrf.mxu0
        %2194 = vmatprep.mubr.f32.mxu0 %v1101
        %2195 = vmatmul.mubr.f32.gmra.mxu0 %v437
        %v2196 = vpop.f32.mrf.mxu0
        %v2197 = vadd.f32 0.0, %v2196
        %v2198 = vpop.f32.mrf.mxu0
        %2199 = vmatprep.mubr.f32.mxu0 %v1104
        %2200 = vmatmul.mubr.f32.gmra.mxu0 %v439
        %v2201 = vpop.f32.mrf.mxu0
        %v2202 = vadd.f32 0.0, %v2201
        %v2203 = vpop.f32.mrf.mxu0
        %2204 = vmatprep.mubr.f32.mxu0 %v1107
        %2205 = vmatmul.mubr.f32.gmra.mxu0 %v441
        %v2206 = vpop.f32.mrf.mxu0
        %v2207 = vadd.f32 0.0, %v2206
        %v2208 = vpop.f32.mrf.mxu0
        %2209 = vmatprep.mubr.f32.mxu0 %v1110
        %2210 = vmatmul.mubr.f32.gmra.mxu0 %v443
        %v2211 = vpop.f32.mrf.mxu0
        %v2212 = vadd.f32 0.0, %v2211
        %v2213 = vpop.f32.mrf.mxu0
        %2214 = vmatprep.mubr.f32.mxu0 %v1113
        %2215 = vmatmul.mubr.f32.gmra.mxu0 %v445
        %v2216 = vpop.f32.mrf.mxu0
        %v2217 = vadd.f32 0.0, %v2216
        %v2218 = vpop.f32.mrf.mxu0
        %2219 = vmatprep.mubr.f32.mxu0 %v1116
        %2220 = vmatmul.mubr.f32.gmra.mxu0 %v447
        %v2221 = vpop.f32.mrf.mxu0
        %v2222 = vadd.f32 0.0, %v2221
        %v2223 = vpop.f32.mrf.mxu0
        %2224 = vmatprep.mubr.f32.mxu0 %v1119
        %2225 = vmatmul.mubr.f32.gmra.mxu0 %v449
        %v2226 = vpop.f32.mrf.mxu0
        %v2227 = vadd.f32 0.0, %v2226
        %v2228 = vpop.f32.mrf.mxu0
        %2229 = vmatprep.mubr.f32.mxu0 %v1122
        %2230 = vmatmul.mubr.f32.gmra.mxu0 %v451
        %v2231 = vpop.f32.mrf.mxu0
        %v2232 = vadd.f32 0.0, %v2231
        %v2233 = vpop.f32.mrf.mxu0
        %2234 = vmatprep.mubr.f32.mxu0 %v1125
        %2235 = vmatmul.mubr.f32.gmra.mxu0 %v453
        %v2236 = vpop.f32.mrf.mxu0
        %v2237 = vadd.f32 0.0, %v2236
        %v2238 = vpop.f32.mrf.mxu0
        %2239 = vmatprep.mubr.f32.mxu0 %v1128
        %2240 = vmatmul.mubr.f32.gmra.mxu0 %v455
        %v2241 = vpop.f32.mrf.mxu0
        %v2242 = vadd.f32 0.0, %v2241
        %v2243 = vpop.f32.mrf.mxu0
        %2244 = vmatprep.mubr.f32.mxu0 %v1131
        %2245 = vmatmul.mubr.f32.gmra.mxu0 %v457
        %v2246 = vpop.f32.mrf.mxu0
        %v2247 = vadd.f32 0.0, %v2246
        %v2248 = vpop.f32.mrf.mxu0
        %2249 = vmatprep.mubr.f32.mxu0 %v1134
        %2250 = vmatmul.mubr.f32.gmra.mxu0 %v459
        %v2251 = vpop.f32.mrf.mxu0
        %v2252 = vadd.f32 0.0, %v2251
        %v2253 = vpop.f32.mrf.mxu0
        %2254 = vmatprep.mubr.f32.mxu0 %v1137
        %2255 = vmatmul.mubr.f32.gmra.mxu0 %v461
        %v2256 = vpop.f32.mrf.mxu0
        %v2257 = vadd.f32 0.0, %v2256
        %v2258 = vpop.f32.mrf.mxu0
        %2259 = vmatprep.mubr.f32.mxu0 %v1140
        %2260 = vmatmul.mubr.f32.gmra.mxu0 %v463
        %v2261 = vpop.f32.mrf.mxu0
        %v2262 = vadd.f32 0.0, %v2261
        %v2263 = vpop.f32.mrf.mxu0
        %2264 = vmatprep.mubr.f32.mxu0 %v1143
        %2265 = vmatmul.mubr.f32.gmra.mxu0 %v465
        %v2266 = vpop.f32.mrf.mxu0
        %v2267 = vadd.f32 0.0, %v2266
        %v2268 = vpop.f32.mrf.mxu0
        %2269 = vmatprep.mubr.f32.mxu0 %v1146
        %2270 = vmatmul.mubr.f32.gmra.mxu0 %v467
        %v2271 = vpop.f32.mrf.mxu0
        %v2272 = vadd.f32 0.0, %v2271
        %v2273 = vpop.f32.mrf.mxu0
        %2274 = vmatprep.mubr.f32.mxu0 %v1149
        %2275 = vmatmul.mubr.f32.gmra.mxu0 %v469
        %v2276 = vpop.f32.mrf.mxu0
        %v2277 = vadd.f32 0.0, %v2276
        %v2278 = vpop.f32.mrf.mxu0
        %2279 = vmatprep.mubr.f32.mxu0 %v1152
        %2280 = vmatmul.mubr.f32.gmra.mxu0 %v471
        %v2281 = vpop.f32.mrf.mxu0
        %v2282 = vadd.f32 0.0, %v2281
        %v2283 = vpop.f32.mrf.mxu0
        %2284 = vmatprep.mubr.f32.mxu0 %v1155
        %2285 = vmatmul.mubr.f32.gmra.mxu0 %v473
        %v2286 = vpop.f32.mrf.mxu0
        %v2287 = vadd.f32 0.0, %v2286
        %v2288 = vpop.f32.mrf.mxu0
        %2289 = vmatprep.mubr.f32.mxu0 %v1158
        %2290 = vmatmul.mubr.f32.gmra.mxu0 %v475
        %v2291 = vpop.f32.mrf.mxu0
        %v2292 = vadd.f32 0.0, %v2291
        %v2293 = vpop.f32.mrf.mxu0
        %2294 = vmatprep.mubr.f32.mxu0 %v1161
        %2295 = vmatmul.mubr.f32.gmra.mxu0 %v477
        %v2296 = vpop.f32.mrf.mxu0
        %v2297 = vadd.f32 0.0, %v2296
        %v2298 = vpop.f32.mrf.mxu0
        %2299 = vmatprep.mubr.f32.mxu0 %v1164
        %2300 = vmatmul.mubr.f32.gmra.mxu0 %v479
        %v2301 = vpop.f32.mrf.mxu0
        %v2302 = vadd.f32 0.0, %v2301
        %v2303 = vpop.f32.mrf.mxu0
        %2304 = vmatprep.mubr.f32.mxu0 %v1167
        %2305 = vmatmul.mubr.f32.gmra.mxu0 %v481
        %v2306 = vpop.f32.mrf.mxu0
        %v2307 = vadd.f32 0.0, %v2306
        %v2308 = vpop.f32.mrf.mxu0
        %2309 = vmatprep.mubr.f32.mxu0 %v1170
        %2310 = vmatmul.mubr.f32.gmra.mxu0 %v483
        %v2311 = vpop.f32.mrf.mxu0
        %v2312 = vadd.f32 0.0, %v2311
        %v2313 = vpop.f32.mrf.mxu0
        %2314 = vmatprep.mubr.f32.mxu0 %v1173
        %2315 = vmatmul.mubr.f32.gmra.mxu0 %v485
        %v2316 = vpop.f32.mrf.mxu0
        %v2317 = vadd.f32 0.0, %v2316
        %v2318 = vpop.f32.mrf.mxu0
        %2319 = vmatprep.mubr.f32.mxu0 %v1176
        %2320 = vmatmul.mubr.f32.gmra.mxu0 %v487
        %v2321 = vpop.f32.mrf.mxu0
        %v2322 = vadd.f32 0.0, %v2321
        %v2323 = vpop.f32.mrf.mxu0
        %2324 = vmatprep.mubr.f32.mxu0 %v1179
        %2325 = vmatmul.mubr.f32.gmra.mxu0 %v489
        %v2326 = vpop.f32.mrf.mxu0
        %v2327 = vadd.f32 0.0, %v2326
        %v2328 = vpop.f32.mrf.mxu0
        %2329 = vmatprep.mubr.f32.mxu0 %v1182
        %2330 = vmatmul.mubr.f32.gmra.mxu0 %v491
        %v2331 = vpop.f32.mrf.mxu0
        %v2332 = vadd.f32 0.0, %v2331
        %v2333 = vpop.f32.mrf.mxu0
        %2334 = vmatprep.mubr.f32.mxu0 %v1185
        %2335 = vmatmul.mubr.f32.gmra.mxu0 %v493
        %v2336 = vpop.f32.mrf.mxu0
        %v2337 = vadd.f32 0.0, %v2336
        %v2338 = vpop.f32.mrf.mxu0
        %2339 = vmatprep.mubr.f32.mxu0 %v1188
        %2340 = vmatmul.mubr.f32.gmra.mxu0 %v495
        %v2341 = vpop.f32.mrf.mxu0
        %v2342 = vadd.f32 0.0, %v2341
        %v2343 = vpop.f32.mrf.mxu0
        %2344 = vmatprep.mubr.f32.mxu0 %v1191
        %2345 = vmatmul.mubr.f32.gmra.mxu0 %v497
        %v2346 = vpop.f32.mrf.mxu0
        %v2347 = vadd.f32 0.0, %v2346
        %v2348 = vpop.f32.mrf.mxu0
        %2349 = vmatprep.mubr.f32.mxu0 %v1194
        %2350 = vmatmul.mubr.f32.gmra.mxu0 %v499
        %v2351 = vpop.f32.mrf.mxu0
        %v2352 = vadd.f32 0.0, %v2351
        %v2353 = vpop.f32.mrf.mxu0
        %2354 = vmatprep.mubr.f32.mxu0 %v1197
        %2355 = vmatmul.mubr.f32.gmra.mxu0 %v501
        %v2356 = vpop.f32.mrf.mxu0
        %v2357 = vadd.f32 0.0, %v2356
        %v2358 = vpop.f32.mrf.mxu0
        %2359 = vmatprep.mubr.f32.mxu0 %v1200
        %2360 = vmatmul.mubr.f32.gmra.mxu0 %v503
        %v2361 = vpop.f32.mrf.mxu0
        %v2362 = vadd.f32 0.0, %v2361
        %v2363 = vpop.f32.mrf.mxu0
        %2364 = vmatprep.mubr.f32.mxu0 %v1203
        %2365 = vmatmul.mubr.f32.gmra.mxu0 %v505
        %v2366 = vpop.f32.mrf.mxu0
        %v2367 = vadd.f32 0.0, %v2366
        %v2368 = vpop.f32.mrf.mxu0
        %2369 = vmatprep.mubr.f32.mxu0 %v1206
        %2370 = vmatmul.mubr.f32.gmra.mxu0 %v507
        %v2371 = vpop.f32.mrf.mxu0
        %v2372 = vadd.f32 0.0, %v2371
        %v2373 = vpop.f32.mrf.mxu0
        %2374 = vmatprep.mubr.f32.mxu0 %v1209
        %2375 = vmatmul.mubr.f32.gmra.mxu0 %v509
        %v2376 = vpop.f32.mrf.mxu0
        %v2377 = vadd.f32 0.0, %v2376
        %v2378 = vpop.f32.mrf.mxu0
        %2379 = vmatprep.mubr.f32.mxu0 %v1212
        %2380 = vmatmul.mubr.f32.gmra.mxu0 %v511
        %v2381 = vpop.f32.mrf.mxu0
        %v2382 = vadd.f32 0.0, %v2381
        %v2383 = vpop.f32.mrf.mxu0
        %2384 = vmatprep.mubr.f32.mxu0 %v1215
        %2385 = vmatmul.mubr.f32.gmra.mxu0 %v513
        %v2386 = vpop.f32.mrf.mxu0
        %v2387 = vadd.f32 0.0, %v2386
        %v2388 = vpop.f32.mrf.mxu0
        %2389 = vmatprep.mubr.f32.mxu0 %v1218
        %2390 = vmatmul.mubr.f32.gmra.mxu0 %v515
        %v2391 = vpop.f32.mrf.mxu0
        %v2392 = vadd.f32 0.0, %v2391
        %v2393 = vpop.f32.mrf.mxu0
        %2394 = vmatprep.mubr.f32.mxu0 %v1221
        %2395 = vmatmul.mubr.f32.gmra.mxu0 %v517
        %v2396 = vpop.f32.mrf.mxu0
        %v2397 = vadd.f32 0.0, %v2396
        %v2398 = vpop.f32.mrf.mxu0
        %2399 = vmatprep.mubr.f32.mxu0 %v1224
        %2400 = vmatmul.mubr.f32.gmra.mxu0 %v519
        %v2401 = vpop.f32.mrf.mxu0
        %v2402 = vadd.f32 0.0, %v2401
        %v2403 = vpop.f32.mrf.mxu0
        %2404 = vmatprep.mubr.f32.mxu0 %v1227
        %2405 = vmatmul.mubr.f32.gmra.mxu0 %v521
        %v2406 = vpop.f32.mrf.mxu0
        %v2407 = vadd.f32 0.0, %v2406
        %v2408 = vpop.f32.mrf.mxu0
        %2409 = vmatprep.mubr.f32.mxu0 %v1230
        %2410 = vmatmul.mubr.f32.gmra.mxu0 %v523
        %v2411 = vpop.f32.mrf.mxu0
        %v2412 = vadd.f32 0.0, %v2411
        %v2413 = vpop.f32.mrf.mxu0
        %2414 = vmatprep.mubr.f32.mxu0 %v1233
        %2415 = vmatmul.mubr.f32.gmra.mxu0 %v525
        %v2416 = vpop.f32.mrf.mxu0
        %v2417 = vadd.f32 0.0, %v2416
        %v2418 = vpop.f32.mrf.mxu0
        %2419 = vmatprep.mubr.f32.mxu0 %v1236
        %2420 = vmatmul.mubr.f32.gmra.mxu0 %v527
        %v2421 = vpop.f32.mrf.mxu0
        %v2422 = vadd.f32 0.0, %v2421
        %v2423 = vpop.f32.mrf.mxu0
        %2424 = vmatprep.mubr.f32.mxu0 %v1239
        %2425 = vmatmul.mubr.f32.gmra.mxu0 %v529
        %v2426 = vpop.f32.mrf.mxu0
        %v2427 = vadd.f32 0.0, %v2426
        %v2428 = vpop.f32.mrf.mxu0
        %2429 = vmatprep.mubr.f32.mxu0 %v1242
        %2430 = vmatmul.mubr.f32.gmra.mxu0 %v531
        %v2431 = vpop.f32.mrf.mxu0
        %v2432 = vadd.f32 0.0, %v2431
        %v2433 = vpop.f32.mrf.mxu0
        %2434 = vmatprep.mubr.f32.mxu0 %v1245
        %2435 = vmatmul.mubr.f32.gmra.mxu0 %v533
        %v2436 = vpop.f32.mrf.mxu0
        %v2437 = vadd.f32 0.0, %v2436
        %v2438 = vpop.f32.mrf.mxu0
        %2439 = vmatprep.mubr.f32.mxu0 %v1248
        %2440 = vmatmul.mubr.f32.gmra.mxu0 %v535
        %v2441 = vpop.f32.mrf.mxu0
        %v2442 = vadd.f32 0.0, %v2441
        %v2443 = vpop.f32.mrf.mxu0
        %2444 = vmatprep.mubr.f32.mxu0 %v1251
        %2445 = vmatmul.mubr.f32.gmra.mxu0 %v537
        %v2446 = vpop.f32.mrf.mxu0
        %v2447 = vadd.f32 0.0, %v2446
        %v2448 = vpop.f32.mrf.mxu0
        %2449 = vmatprep.mubr.f32.mxu0 %v1254
        %2450 = vmatmul.mubr.f32.gmra.mxu0 %v539
        %v2451 = vpop.f32.mrf.mxu0
        %v2452 = vadd.f32 0.0, %v2451
        %v2453 = vpop.f32.mrf.mxu0
        %2454 = vmatprep.mubr.f32.mxu0 %v1257
        %2455 = vmatmul.mubr.f32.gmra.mxu0 %v541
        %v2456 = vpop.f32.mrf.mxu0
        %v2457 = vadd.f32 0.0, %v2456
        %v2458 = vpop.f32.mrf.mxu0
        %2459 = vmatprep.mubr.f32.mxu0 %v1260
        %2460 = vmatmul.mubr.f32.gmra.mxu0 %v543
        %v2461 = vpop.f32.mrf.mxu0
        %v2462 = vadd.f32 0.0, %v2461
        %v2463 = vpop.f32.mrf.mxu0
        %2464 = vmatprep.mubr.f32.mxu0 %v1263
        %2465 = vmatmul.mubr.f32.gmra.mxu0 %v545
        %v2466 = vpop.f32.mrf.mxu0
        %v2467 = vadd.f32 0.0, %v2466
        %v2468 = vpop.f32.mrf.mxu0
        %2469 = vmatprep.mubr.f32.mxu0 %v1266
        %2470 = vmatmul.mubr.f32.gmra.mxu0 %v547
        %v2471 = vpop.f32.mrf.mxu0
        %v2472 = vadd.f32 0.0, %v2471
        %v2473 = vpop.f32.mrf.mxu0
        %2474 = vmatprep.mubr.f32.mxu0 %v1269
        %2475 = vmatmul.mubr.f32.gmra.mxu0 %v549
        %v2476 = vpop.f32.mrf.mxu0
        %v2477 = vadd.f32 0.0, %v2476
        %v2478 = vpop.f32.mrf.mxu0
        %2479 = vmatprep.mubr.f32.mxu0 %v1272
        %2480 = vmatmul.mubr.f32.gmra.mxu0 %v551
        %v2481 = vpop.f32.mrf.mxu0
        %v2482 = vadd.f32 0.0, %v2481
        %v2483 = vpop.f32.mrf.mxu0
        %2484 = vmatprep.mubr.f32.mxu0 %v1275
        %2485 = vmatmul.mubr.f32.gmra.mxu0 %v553
        %v2486 = vpop.f32.mrf.mxu0
        %v2487 = vadd.f32 0.0, %v2486
        %v2488 = vpop.f32.mrf.mxu0
        %2489 = vmatprep.mubr.f32.mxu0 %v1278
        %2490 = vmatmul.mubr.f32.gmra.mxu0 %v555
        %v2491 = vpop.f32.mrf.mxu0
        %v2492 = vadd.f32 0.0, %v2491
        %v2493 = vpop.f32.mrf.mxu0
        %2494 = vmatprep.mubr.f32.mxu0 %v1281
        %2495 = vmatmul.mubr.f32.gmra.mxu0 %v557
        %v2496 = vpop.f32.mrf.mxu0
        %v2497 = vadd.f32 0.0, %v2496
        %v2498 = vpop.f32.mrf.mxu0
        %2499 = vmatprep.mubr.f32.mxu0 %v1284
        %2500 = vmatmul.mubr.f32.gmra.mxu0 %v559
        %v2501 = vpop.f32.mrf.mxu0
        %v2502 = vadd.f32 0.0, %v2501
        %v2503 = vpop.f32.mrf.mxu0
        %2504 = vmatprep.mubr.f32.mxu0 %v1287
        %2505 = vmatmul.mubr.f32.gmra.mxu0 %v561
        %v2506 = vpop.f32.mrf.mxu0
        %v2507 = vadd.f32 0.0, %v2506
        %v2508 = vpop.f32.mrf.mxu0
        %2509 = vmatprep.mubr.f32.mxu0 %v1290
        %2510 = vmatmul.mubr.f32.gmra.mxu0 %v563
        %v2511 = vpop.f32.mrf.mxu0
        %v2512 = vadd.f32 0.0, %v2511
        %v2513 = vpop.f32.mrf.mxu0
        %2514 = vmatprep.mubr.f32.mxu0 %v1293
        %2515 = vmatmul.mubr.f32.gmra.mxu0 %v565
        %v2516 = vpop.f32.mrf.mxu0
        %v2517 = vadd.f32 0.0, %v2516
        %v2518 = vpop.f32.mrf.mxu0
        %2519 = vmatprep.mubr.f32.mxu0 %v1296
        %2520 = vmatmul.mubr.f32.gmra.mxu0 %v567
        %v2521 = vpop.f32.mrf.mxu0
        %v2522 = vadd.f32 0.0, %v2521
        %v2523 = vpop.f32.mrf.mxu0
        %2524 = vmatprep.mubr.f32.mxu0 %v1299
        %2525 = vmatmul.mubr.f32.gmra.mxu0 %v569
        %v2526 = vpop.f32.mrf.mxu0
        %v2527 = vadd.f32 0.0, %v2526
        %v2528 = vpop.f32.mrf.mxu0
        %2529 = vmatprep.mubr.f32.mxu0 %v1302
        %2530 = vmatmul.mubr.f32.gmra.mxu0 %v571
        %v2531 = vpop.f32.mrf.mxu0
        %v2532 = vadd.f32 0.0, %v2531
        %v2533 = vpop.f32.mrf.mxu0
        %2534 = vmatprep.mubr.f32.mxu0 %v1305
        %2535 = vmatmul.mubr.f32.gmra.mxu0 %v573
        %v2536 = vpop.f32.mrf.mxu0
        %v2537 = vadd.f32 0.0, %v2536
        %v2538 = vpop.f32.mrf.mxu0
        %2539 = vmatprep.mubr.f32.mxu0 %v1308
        %2540 = vmatmul.mubr.f32.gmra.mxu0 %v575
        %v2541 = vpop.f32.mrf.mxu0
        %v2542 = vadd.f32 0.0, %v2541
        %v2543 = vpop.f32.mrf.mxu0
        %2544 = vmatprep.mubr.f32.mxu0 %v1311
        %2545 = vmatmul.mubr.f32.gmra.mxu0 %v577
        %v2546 = vpop.f32.mrf.mxu0
        %v2547 = vadd.f32 0.0, %v2546
        %v2548 = vpop.f32.mrf.mxu0
        %2549 = vmatprep.mubr.f32.mxu0 %v1314
        %2550 = vmatmul.mubr.f32.gmra.mxu0 %v579
        %v2551 = vpop.f32.mrf.mxu0
        %v2552 = vadd.f32 0.0, %v2551
        %v2553 = vpop.f32.mrf.mxu0
        %2554 = vmatprep.mubr.f32.mxu0 %v1317
        %2555 = vmatmul.mubr.f32.gmra.mxu0 %v581
        %v2556 = vpop.f32.mrf.mxu0
        %v2557 = vadd.f32 0.0, %v2556
        %v2558 = vpop.f32.mrf.mxu0
        %2559 = vmatprep.mubr.f32.mxu0 %v1320
        %2560 = vmatmul.mubr.f32.gmra.mxu0 %v583
        %v2561 = vpop.f32.mrf.mxu0
        %v2562 = vadd.f32 0.0, %v2561
        %v2563 = vpop.f32.mrf.mxu0
        %2564 = vmatprep.mubr.f32.mxu0 %v1323
        %2565 = vmatmul.mubr.f32.gmra.mxu0 %v585
        %v2566 = vpop.f32.mrf.mxu0
        %v2567 = vadd.f32 0.0, %v2566
        %v2568 = vpop.f32.mrf.mxu0
        %2569 = vmatprep.mubr.f32.mxu0 %v1326
        %2570 = vmatmul.mubr.f32.gmra.mxu0 %v587
        %v2571 = vpop.f32.mrf.mxu0
        %v2572 = vadd.f32 0.0, %v2571
        %v2573 = vpop.f32.mrf.mxu0
        %2574 = vmatprep.mubr.f32.mxu0 %v1329
        %2575 = vmatmul.mubr.f32.gmra.mxu0 %v589
        %v2576 = vpop.f32.mrf.mxu0
        %v2577 = vadd.f32 0.0, %v2576
        %v2578 = vpop.f32.mrf.mxu0
        %2579 = vmatprep.mubr.f32.mxu0 %v1332
        %2580 = vmatmul.mubr.f32.gmra.mxu0 %v591
        %v2581 = vpop.f32.mrf.mxu0
        %v2582 = vadd.f32 0.0, %v2581
        %v2583 = vpop.f32.mrf.mxu0
        %2584 = vmatprep.mubr.f32.mxu0 %v1335
        %2585 = vmatmul.mubr.f32.gmra.mxu0 %v593
        %v2586 = vpop.f32.mrf.mxu0
        %v2587 = vadd.f32 0.0, %v2586
        %v2588 = vpop.f32.mrf.mxu0
        %2589 = vmatprep.mubr.f32.mxu0 %v1338
        %2590 = vmatmul.mubr.f32.gmra.mxu0 %v595
        %v2591 = vpop.f32.mrf.mxu0
        %v2592 = vadd.f32 0.0, %v2591
        %v2593 = vpop.f32.mrf.mxu0
        %2594 = vmatprep.mubr.f32.mxu0 %v1341
        %2595 = vmatmul.mubr.f32.gmra.mxu0 %v597
        %v2596 = vpop.f32.mrf.mxu0
        %v2597 = vadd.f32 0.0, %v2596
        %v2598 = vpop.f32.mrf.mxu0
        %2599 = vmatprep.mubr.f32.mxu0 %v1344
        %2600 = vmatmul.mubr.f32.gmra.mxu0 %v599
        %v2601 = vpop.f32.mrf.mxu0
        %v2602 = vadd.f32 0.0, %v2601
        %v2603 = vpop.f32.mrf.mxu0
        %2604 = vmatprep.mubr.f32.mxu0 %v1347
        %2605 = vmatmul.mubr.f32.gmra.mxu0 %v601
        %v2606 = vpop.f32.mrf.mxu0
        %v2607 = vadd.f32 0.0, %v2606
        %v2608 = vpop.f32.mrf.mxu0
        %2609 = vmatprep.mubr.f32.mxu0 %v1350
        %2610 = vmatmul.mubr.f32.gmra.mxu0 %v603
        %v2611 = vpop.f32.mrf.mxu0
        %v2612 = vadd.f32 0.0, %v2611
        %v2613 = vpop.f32.mrf.mxu0
        %2614 = vmatprep.mubr.f32.mxu0 %v1353
        %2615 = vmatmul.mubr.f32.gmra.mxu0 %v605
        %v2616 = vpop.f32.mrf.mxu0
        %v2617 = vadd.f32 0.0, %v2616
        %v2618 = vpop.f32.mrf.mxu0
        %2619 = vmatprep.mubr.f32.mxu0 %v1356
        %2620 = vmatmul.mubr.f32.gmra.mxu0 %v607
        %v2621 = vpop.f32.mrf.mxu0
        %v2622 = vadd.f32 0.0, %v2621
        %v2623 = vpop.f32.mrf.mxu0
        %2624 = vmatprep.mubr.f32.mxu0 %v1359
        %2625 = vmatmul.mubr.f32.gmra.mxu0 %v609
        %v2626 = vpop.f32.mrf.mxu0
        %v2627 = vadd.f32 0.0, %v2626
        %v2628 = vpop.f32.mrf.mxu0
        %2629 = vmatprep.mubr.f32.mxu0 %v1362
        %2630 = vmatmul.mubr.f32.gmra.mxu0 %v611
        %v2631 = vpop.f32.mrf.mxu0
        %v2632 = vadd.f32 0.0, %v2631
        %v2633 = vpop.f32.mrf.mxu0
        %2634 = vmatprep.mubr.f32.mxu0 %v1365
        %2635 = vmatmul.mubr.f32.gmra.mxu0 %v613
        %v2636 = vpop.f32.mrf.mxu0
        %v2637 = vadd.f32 0.0, %v2636
        %v2638 = vpop.f32.mrf.mxu0
        %2639 = vmatprep.mubr.f32.mxu0 %v1368
        %2640 = vmatmul.mubr.f32.gmra.mxu0 %v615
        %v2641 = vpop.f32.mrf.mxu0
        %v2642 = vadd.f32 0.0, %v2641
        %v2643 = vpop.f32.mrf.mxu0
        %2644 = vmatprep.mubr.f32.mxu0 %v1371
        %2645 = vmatmul.mubr.f32.gmra.mxu0 %v617
        %v2646 = vpop.f32.mrf.mxu0
        %v2647 = vadd.f32 0.0, %v2646
        %v2648 = vpop.f32.mrf.mxu0
        %2649 = vmatprep.mubr.f32.mxu0 %v1374
        %2650 = vmatmul.mubr.f32.gmra.mxu0 %v619
        %v2651 = vpop.f32.mrf.mxu0
        %v2652 = vadd.f32 0.0, %v2651
        %v2653 = vpop.f32.mrf.mxu0
        %2654 = vmatprep.mubr.f32.mxu0 %v1377
        %2655 = vmatmul.mubr.f32.gmra.mxu0 %v621
        %v2656 = vpop.f32.mrf.mxu0
        %v2657 = vadd.f32 0.0, %v2656
        %v2658 = vpop.f32.mrf.mxu0
        %2659 = vmatprep.mubr.f32.mxu0 %v1380
        %2660 = vmatmul.mubr.f32.gmra.mxu0 %v623
        %v2661 = vpop.f32.mrf.mxu0
        %v2662 = vadd.f32 0.0, %v2661
        %v2663 = vpop.f32.mrf.mxu0
        %2664 = vmatprep.mubr.f32.mxu0 %v1383
        %2665 = vmatmul.mubr.f32.gmra.mxu0 %v625
        %v2666 = vpop.f32.mrf.mxu0
        %v2667 = vadd.f32 0.0, %v2666
        %v2668 = vpop.f32.mrf.mxu0
        %2669 = vmatprep.mubr.f32.mxu0 %v1386
        %2670 = vmatmul.mubr.f32.gmra.mxu0 %v627
        %v2671 = vpop.f32.mrf.mxu0
        %v2672 = vadd.f32 0.0, %v2671
        %v2673 = vpop.f32.mrf.mxu0
        %2674 = vmatprep.mubr.f32.mxu0 %v1389
        %2675 = vmatmul.mubr.f32.gmra.mxu0 %v629
        %v2676 = vpop.f32.mrf.mxu0
        %v2677 = vadd.f32 0.0, %v2676
        %v2678 = vpop.f32.mrf.mxu0
        %2679 = vmatprep.mubr.f32.mxu0 %v1392
        %2680 = vmatmul.mubr.f32.gmra.mxu0 %v631
        %v2681 = vpop.f32.mrf.mxu0
        %v2682 = vadd.f32 0.0, %v2681
        %v2683 = vpop.f32.mrf.mxu0
        %2684 = vmatprep.mubr.f32.mxu0 %v1395
        %2685 = vmatmul.mubr.f32.gmra.mxu0 %v633
        %v2686 = vpop.f32.mrf.mxu0
        %v2687 = vadd.f32 0.0, %v2686
        %v2688 = vpop.f32.mrf.mxu0
        %2689 = vmatprep.mubr.f32.mxu0 %v1398
        %2690 = vmatmul.mubr.f32.gmra.mxu0 %v635
        %v2691 = vpop.f32.mrf.mxu0
        %v2692 = vadd.f32 0.0, %v2691
        %v2693 = vpop.f32.mrf.mxu0
        %2694 = vmatprep.mubr.f32.mxu0 %v1401
        %2695 = vmatmul.mubr.f32.gmra.mxu0 %v637
        %v2696 = vpop.f32.mrf.mxu0
        %v2697 = vadd.f32 0.0, %v2696
        %v2698 = vpop.f32.mrf.mxu0
        %2699 = vmatprep.mubr.f32.mxu0 %v1404
        %2700 = vmatmul.mubr.f32.gmra.mxu0 %v639
        %v2701 = vpop.f32.mrf.mxu0
        %v2702 = vadd.f32 0.0, %v2701
        %v2703 = vpop.f32.mrf.mxu0
        %2704 = vmatprep.mubr.f32.mxu0 %v1407
        %2705 = vmatmul.mubr.f32.gmra.mxu0 %v641
        %v2706 = vpop.f32.mrf.mxu0
        %v2707 = vadd.f32 0.0, %v2706
        %v2708 = vpop.f32.mrf.mxu0
        %2709 = vmatprep.mubr.f32.mxu0 %v1410
        %2710 = vmatmul.mubr.f32.gmra.mxu0 %v643
        %v2711 = vpop.f32.mrf.mxu0
        %v2712 = vadd.f32 0.0, %v2711
        %v2713 = vpop.f32.mrf.mxu0
        %2714 = vmatprep.mubr.f32.mxu0 %v1413
        %2715 = vmatmul.mubr.f32.gmra.mxu0 %v645
        %v2716 = vpop.f32.mrf.mxu0
        %v2717 = vadd.f32 0.0, %v2716
        %v2718 = vpop.f32.mrf.mxu0
        %2719 = vmatprep.mubr.f32.mxu0 %v1416
        %2720 = vmatmul.mubr.f32.gmra.mxu0 %v647
        %v2721 = vpop.f32.mrf.mxu0
        %v2722 = vadd.f32 0.0, %v2721
        %v2723 = vpop.f32.mrf.mxu0
        %2724 = vmatprep.mubr.f32.mxu0 %v1419
        %2725 = vmatmul.mubr.f32.gmra.mxu0 %v649
        %v2726 = vpop.f32.mrf.mxu0
        %v2727 = vadd.f32 0.0, %v2726
        %v2728 = vpop.f32.mrf.mxu0
        %2729 = vmatprep.mubr.f32.mxu0 %v1422
        %2730 = vmatmul.mubr.f32.gmra.mxu0 %v651
        %v2731 = vpop.f32.mrf.mxu0
        %v2732 = vadd.f32 0.0, %v2731
        %v2733 = vpop.f32.mrf.mxu0
        %2734 = vmatprep.mubr.f32.mxu0 %v1425
        %2735 = vmatmul.mubr.f32.gmra.mxu0 %v653
        %v2736 = vpop.f32.mrf.mxu0
        %v2737 = vadd.f32 0.0, %v2736
        %v2738 = vpop.f32.mrf.mxu0
        %2739 = vmatprep.mubr.f32.mxu0 %v1428
        %2740 = vmatmul.mubr.f32.gmra.mxu0 %v655
        %v2741 = vpop.f32.mrf.mxu0
        %v2742 = vadd.f32 0.0, %v2741
        %v2743 = vpop.f32.mrf.mxu0
        %2744 = vmatprep.mubr.f32.mxu0 %v1431
        %2745 = vmatmul.mubr.f32.gmra.mxu0 %v657
        %v2746 = vpop.f32.mrf.mxu0
        %v2747 = vadd.f32 0.0, %v2746
        %v2748 = vpop.f32.mrf.mxu0
        %2749 = vmatprep.mubr.f32.mxu0 %v1434
        %2750 = vmatmul.mubr.f32.gmra.mxu0 %v659
        %v2751 = vpop.f32.mrf.mxu0
        %v2752 = vadd.f32 0.0, %v2751
        %v2753 = vpop.f32.mrf.mxu0
        %2754 = vmatprep.mubr.f32.mxu0 %v1437
        %2755 = vmatmul.mubr.f32.gmra.mxu0 %v661
        %v2756 = vpop.f32.mrf.mxu0
        %v2757 = vadd.f32 0.0, %v2756
        %v2758 = vpop.f32.mrf.mxu0
        %2759 = vmatprep.mubr.f32.mxu0 %v1440
        %2760 = vmatmul.mubr.f32.gmra.mxu0 %v663
        %v2761 = vpop.f32.mrf.mxu0
        %v2762 = vadd.f32 0.0, %v2761
        %v2763 = vpop.f32.mrf.mxu0
        %2764 = vmatprep.mubr.f32.mxu0 %v1443
        %2765 = vmatmul.mubr.f32.gmra.mxu0 %v665
        %v2766 = vpop.f32.mrf.mxu0
        %v2767 = vadd.f32 0.0, %v2766
        %v2768 = vpop.f32.mrf.mxu0
        %2769 = vmatprep.mubr.f32.mxu0 %v1446
        %2770 = vmatmul.mubr.f32.gmra.mxu0 %v667
        %v2771 = vpop.f32.mrf.mxu0
        %v2772 = vadd.f32 0.0, %v2771
        %v2773 = vpop.f32.mrf.mxu0
        %2774 = vmatprep.mubr.f32.mxu0 %v1449
        %2775 = vmatmul.mubr.f32.gmra.mxu0 %v669
        %v2776 = vpop.f32.mrf.mxu0
        %v2777 = vadd.f32 0.0, %v2776
        %v2778 = vpop.f32.mrf.mxu0
        %2779 = vmatprep.mubr.f32.mxu0 %v1452
        %2780 = vmatmul.mubr.f32.gmra.mxu0 %v671
        %v2781 = vpop.f32.mrf.mxu0
        %v2782 = vadd.f32 0.0, %v2781
        %v2783 = vpop.f32.mrf.mxu0
        %2784 = vmatprep.mubr.f32.mxu0 %v1455
        %2785 = vmatmul.mubr.f32.gmra.mxu0 %v673
        %v2786 = vpop.f32.mrf.mxu0
        %v2787 = vadd.f32 0.0, %v2786
        %v2788 = vpop.f32.mrf.mxu0
        %2789 = vmatprep.mubr.f32.mxu0 %v1458
        %2790 = vmatmul.mubr.f32.gmra.mxu0 %v675
        %v2791 = vpop.f32.mrf.mxu0
        %v2792 = vadd.f32 0.0, %v2791
        %v2793 = vpop.f32.mrf.mxu0
        %2794 = vmatprep.mubr.f32.mxu0 %v1461
        %2795 = vmatmul.mubr.f32.gmra.mxu0 %v677
        %v2796 = vpop.f32.mrf.mxu0
        %v2797 = vadd.f32 0.0, %v2796
        %v2798 = vpop.f32.mrf.mxu0
        %2799 = vmatprep.mubr.f32.mxu0 %v1464
        %2800 = vmatmul.mubr.f32.gmra.mxu0 %v679
        %v2801 = vpop.f32.mrf.mxu0
        %v2802 = vadd.f32 0.0, %v2801
        %v2803 = vpop.f32.mrf.mxu0
        %2804 = vmatprep.mubr.f32.mxu0 %v1467
        %2805 = vmatmul.mubr.f32.gmra.mxu0 %v681
        %v2806 = vpop.f32.mrf.mxu0
        %v2807 = vadd.f32 0.0, %v2806
        %v2808 = vpop.f32.mrf.mxu0
        %2809 = vmatprep.mubr.f32.mxu0 %v1470
        %2810 = vmatmul.mubr.f32.gmra.mxu0 %v683
        %v2811 = vpop.f32.mrf.mxu0
        %v2812 = vadd.f32 0.0, %v2811
        %v2813 = vpop.f32.mrf.mxu0
        %2814 = vmatprep.mubr.f32.mxu0 %v1473
        %2815 = vmatmul.mubr.f32.gmra.mxu0 %v685
        %v2816 = vpop.f32.mrf.mxu0
        %v2817 = vadd.f32 0.0, %v2816
        %v2818 = vpop.f32.mrf.mxu0
        %2819 = vdwg.mxu0
        %2820 = vxpose.xlu0.b32.start [1/16] %v1542, 128
        %2821 = vxpose.xlu0.b32.cont [2/16] %v1547, 128
        %2822 = vxpose.xlu0.b32.cont [3/16] %v1552, 128
        %2823 = vxpose.xlu0.b32.cont [4/16] %v1557, 128
        %2824 = vxpose.xlu0.b32.cont [5/16] %v1562, 128
        %2825 = vxpose.xlu0.b32.cont [6/16] %v1567, 128
        %2826 = vxpose.xlu0.b32.cont [7/16] %v1572, 128
        %2827 = vxpose.xlu0.b32.cont [8/16] %v1577, 128
        %2828 = vxpose.xlu0.b32.cont [9/16] %v1582, 128
        %2829 = vxpose.xlu0.b32.cont [10/16] %v1587, 128
        %2830 = vxpose.xlu0.b32.cont [11/16] %v1592, 128
        %2831 = vxpose.xlu0.b32.cont [12/16] %v1597, 128
        %2832 = vxpose.xlu0.b32.cont [13/16] %v1602, 128
        %2833 = vxpose.xlu0.b32.cont [14/16] %v1607, 128
        %2834 = vxpose.xlu0.b32.cont [15/16] %v1612, 128
        %2835 = vxpose.xlu0.b32.end [16/16] %v1617, 128
        %v2836 = vpop.trf.xlu0
        %v2837 = vpop.trf.xlu0
        %v2838 = vpop.trf.xlu0
        %v2839 = vpop.trf.xlu0
        %v2840 = vpop.trf.xlu0
        %v2841 = vpop.trf.xlu0
        %v2842 = vpop.trf.xlu0
        %v2843 = vpop.trf.xlu0
        %v2844 = vpop.trf.xlu0
        %v2845 = vpop.trf.xlu0
        %v2846 = vpop.trf.xlu0
        %v2847 = vpop.trf.xlu0
        %v2848 = vpop.trf.xlu0
        %v2849 = vpop.trf.xlu0
        %v2850 = vpop.trf.xlu0
        %v2851 = vpop.trf.xlu0
        %2852 = vxpose.xlu0.b32.start [1/16] %v1622, 128
        %2853 = vxpose.xlu0.b32.cont [2/16] %v1627, 128
        %2854 = vxpose.xlu0.b32.cont [3/16] %v1632, 128
        %2855 = vxpose.xlu0.b32.cont [4/16] %v1637, 128
        %2856 = vxpose.xlu0.b32.cont [5/16] %v1642, 128
        %2857 = vxpose.xlu0.b32.cont [6/16] %v1647, 128
        %2858 = vxpose.xlu0.b32.cont [7/16] %v1652, 128
        %2859 = vxpose.xlu0.b32.cont [8/16] %v1657, 128
        %2860 = vxpose.xlu0.b32.cont [9/16] %v1662, 128
        %2861 = vxpose.xlu0.b32.cont [10/16] %v1667, 128
        %2862 = vxpose.xlu0.b32.cont [11/16] %v1672, 128
        %2863 = vxpose.xlu0.b32.cont [12/16] %v1677, 128
        %2864 = vxpose.xlu0.b32.cont [13/16] %v1682, 128
        %2865 = vxpose.xlu0.b32.cont [14/16] %v1687, 128
        %2866 = vxpose.xlu0.b32.cont [15/16] %v1692, 128
        %2867 = vxpose.xlu0.b32.end [16/16] %v1697, 128
        %v2868 = vpop.trf.xlu0
        %v2869 = vpop.trf.xlu0
        %v2870 = vpop.trf.xlu0
        %v2871 = vpop.trf.xlu0
        %v2872 = vpop.trf.xlu0
        %v2873 = vpop.trf.xlu0
        %v2874 = vpop.trf.xlu0
        %v2875 = vpop.trf.xlu0
        %v2876 = vpop.trf.xlu0
        %v2877 = vpop.trf.xlu0
        %v2878 = vpop.trf.xlu0
        %v2879 = vpop.trf.xlu0
        %v2880 = vpop.trf.xlu0
        %v2881 = vpop.trf.xlu0
        %v2882 = vpop.trf.xlu0
        %v2883 = vpop.trf.xlu0
        %2884 = vxpose.xlu0.b32.start [1/16] %v1702, 128
        %2885 = vxpose.xlu0.b32.cont [2/16] %v1707, 128
        %2886 = vxpose.xlu0.b32.cont [3/16] %v1712, 128
        %2887 = vxpose.xlu0.b32.cont [4/16] %v1717, 128
        %2888 = vxpose.xlu0.b32.cont [5/16] %v1722, 128
        %2889 = vxpose.xlu0.b32.cont [6/16] %v1727, 128
        %2890 = vxpose.xlu0.b32.cont [7/16] %v1732, 128
        %2891 = vxpose.xlu0.b32.cont [8/16] %v1737, 128
        %2892 = vxpose.xlu0.b32.cont [9/16] %v1742, 128
        %2893 = vxpose.xlu0.b32.cont [10/16] %v1747, 128
        %2894 = vxpose.xlu0.b32.cont [11/16] %v1752, 128
        %2895 = vxpose.xlu0.b32.cont [12/16] %v1757, 128
        %2896 = vxpose.xlu0.b32.cont [13/16] %v1762, 128
        %2897 = vxpose.xlu0.b32.cont [14/16] %v1767, 128
        %2898 = vxpose.xlu0.b32.cont [15/16] %v1772, 128
        %2899 = vxpose.xlu0.b32.end [16/16] %v1777, 128
        %v2900 = vpop.trf.xlu0
        %v2901 = vpop.trf.xlu0
        %v2902 = vpop.trf.xlu0
        %v2903 = vpop.trf.xlu0
        %v2904 = vpop.trf.xlu0
        %v2905 = vpop.trf.xlu0
        %v2906 = vpop.trf.xlu0
        %v2907 = vpop.trf.xlu0
        %v2908 = vpop.trf.xlu0
        %v2909 = vpop.trf.xlu0
        %v2910 = vpop.trf.xlu0
        %v2911 = vpop.trf.xlu0
        %v2912 = vpop.trf.xlu0
        %v2913 = vpop.trf.xlu0
        %v2914 = vpop.trf.xlu0
        %v2915 = vpop.trf.xlu0
        %2916 = vxpose.xlu0.b32.start [1/16] %v1782, 128
        %2917 = vxpose.xlu0.b32.cont [2/16] %v1787, 128
        %2918 = vxpose.xlu0.b32.cont [3/16] %v1792, 128
        %2919 = vxpose.xlu0.b32.cont [4/16] %v1797, 128
        %2920 = vxpose.xlu0.b32.cont [5/16] %v1802, 128
        %2921 = vxpose.xlu0.b32.cont [6/16] %v1807, 128
        %2922 = vxpose.xlu0.b32.cont [7/16] %v1812, 128
        %2923 = vxpose.xlu0.b32.cont [8/16] %v1817, 128
        %2924 = vxpose.xlu0.b32.cont [9/16] %v1822, 128
        %2925 = vxpose.xlu0.b32.cont [10/16] %v1827, 128
        %2926 = vxpose.xlu0.b32.cont [11/16] %v1832, 128
        %2927 = vxpose.xlu0.b32.cont [12/16] %v1837, 128
        %2928 = vxpose.xlu0.b32.cont [13/16] %v1842, 128
        %2929 = vxpose.xlu0.b32.cont [14/16] %v1847, 128
        %2930 = vxpose.xlu0.b32.cont [15/16] %v1852, 128
        %2931 = vxpose.xlu0.b32.end [16/16] %v1857, 128
        %v2932 = vpop.trf.xlu0
        %v2933 = vpop.trf.xlu0
        %v2934 = vpop.trf.xlu0
        %v2935 = vpop.trf.xlu0
        %v2936 = vpop.trf.xlu0
        %v2937 = vpop.trf.xlu0
        %v2938 = vpop.trf.xlu0
        %v2939 = vpop.trf.xlu0
        %v2940 = vpop.trf.xlu0
        %v2941 = vpop.trf.xlu0
        %v2942 = vpop.trf.xlu0
        %v2943 = vpop.trf.xlu0
        %v2944 = vpop.trf.xlu0
        %v2945 = vpop.trf.xlu0
        %v2946 = vpop.trf.xlu0
        %v2947 = vpop.trf.xlu0
        %2948 = vxpose.xlu0.b32.start [1/16] %v1862, 128
        %2949 = vxpose.xlu0.b32.cont [2/16] %v1867, 128
        %2950 = vxpose.xlu0.b32.cont [3/16] %v1872, 128
        %2951 = vxpose.xlu0.b32.cont [4/16] %v1877, 128
        %2952 = vxpose.xlu0.b32.cont [5/16] %v1882, 128
        %2953 = vxpose.xlu0.b32.cont [6/16] %v1887, 128
        %2954 = vxpose.xlu0.b32.cont [7/16] %v1892, 128
        %2955 = vxpose.xlu0.b32.cont [8/16] %v1897, 128
        %2956 = vxpose.xlu0.b32.cont [9/16] %v1902, 128
        %2957 = vxpose.xlu0.b32.cont [10/16] %v1907, 128
        %2958 = vxpose.xlu0.b32.cont [11/16] %v1912, 128
        %2959 = vxpose.xlu0.b32.cont [12/16] %v1917, 128
        %2960 = vxpose.xlu0.b32.cont [13/16] %v1922, 128
        %2961 = vxpose.xlu0.b32.cont [14/16] %v1927, 128
        %2962 = vxpose.xlu0.b32.cont [15/16] %v1932, 128
        %2963 = vxpose.xlu0.b32.end [16/16] %v1937, 128
        %v2964 = vpop.trf.xlu0
        %v2965 = vpop.trf.xlu0
        %v2966 = vpop.trf.xlu0
        %v2967 = vpop.trf.xlu0
        %v2968 = vpop.trf.xlu0
        %v2969 = vpop.trf.xlu0
        %v2970 = vpop.trf.xlu0
        %v2971 = vpop.trf.xlu0
        %v2972 = vpop.trf.xlu0
        %v2973 = vpop.trf.xlu0
        %v2974 = vpop.trf.xlu0
        %v2975 = vpop.trf.xlu0
        %v2976 = vpop.trf.xlu0
        %v2977 = vpop.trf.xlu0
        %v2978 = vpop.trf.xlu0
        %v2979 = vpop.trf.xlu0
        %2980 = vxpose.xlu0.b32.start [1/16] %v1942, 128
        %2981 = vxpose.xlu0.b32.cont [2/16] %v1947, 128
        %2982 = vxpose.xlu0.b32.cont [3/16] %v1952, 128
        %2983 = vxpose.xlu0.b32.cont [4/16] %v1957, 128
        %2984 = vxpose.xlu0.b32.cont [5/16] %v1962, 128
        %2985 = vxpose.xlu0.b32.cont [6/16] %v1967, 128
        %2986 = vxpose.xlu0.b32.cont [7/16] %v1972, 128
        %2987 = vxpose.xlu0.b32.cont [8/16] %v1977, 128
        %2988 = vxpose.xlu0.b32.cont [9/16] %v1982, 128
        %2989 = vxpose.xlu0.b32.cont [10/16] %v1987, 128
        %2990 = vxpose.xlu0.b32.cont [11/16] %v1992, 128
        %2991 = vxpose.xlu0.b32.cont [12/16] %v1997, 128
        %2992 = vxpose.xlu0.b32.cont [13/16] %v2002, 128
        %2993 = vxpose.xlu0.b32.cont [14/16] %v2007, 128
        %2994 = vxpose.xlu0.b32.cont [15/16] %v2012, 128
        %2995 = vxpose.xlu0.b32.end [16/16] %v2017, 128
        %v2996 = vpop.trf.xlu0
        %v2997 = vpop.trf.xlu0
        %v2998 = vpop.trf.xlu0
        %v2999 = vpop.trf.xlu0
        %v3000 = vpop.trf.xlu0
        %v3001 = vpop.trf.xlu0
        %v3002 = vpop.trf.xlu0
        %v3003 = vpop.trf.xlu0
        %v3004 = vpop.trf.xlu0
        %v3005 = vpop.trf.xlu0
        %v3006 = vpop.trf.xlu0
        %v3007 = vpop.trf.xlu0
        %v3008 = vpop.trf.xlu0
        %v3009 = vpop.trf.xlu0
        %v3010 = vpop.trf.xlu0
        %v3011 = vpop.trf.xlu0
        %3012 = vxpose.xlu0.b32.start [1/16] %v2022, 128
        %3013 = vxpose.xlu0.b32.cont [2/16] %v2027, 128
        %3014 = vxpose.xlu0.b32.cont [3/16] %v2032, 128
        %3015 = vxpose.xlu0.b32.cont [4/16] %v2037, 128
        %3016 = vxpose.xlu0.b32.cont [5/16] %v2042, 128
        %3017 = vxpose.xlu0.b32.cont [6/16] %v2047, 128
        %3018 = vxpose.xlu0.b32.cont [7/16] %v2052, 128
        %3019 = vxpose.xlu0.b32.cont [8/16] %v2057, 128
        %3020 = vxpose.xlu0.b32.cont [9/16] %v2062, 128
        %3021 = vxpose.xlu0.b32.cont [10/16] %v2067, 128
        %3022 = vxpose.xlu0.b32.cont [11/16] %v2072, 128
        %3023 = vxpose.xlu0.b32.cont [12/16] %v2077, 128
        %3024 = vxpose.xlu0.b32.cont [13/16] %v2082, 128
        %3025 = vxpose.xlu0.b32.cont [14/16] %v2087, 128
        %3026 = vxpose.xlu0.b32.cont [15/16] %v2092, 128
        %3027 = vxpose.xlu0.b32.end [16/16] %v2097, 128
        %v3028 = vpop.trf.xlu0
        %v3029 = vpop.trf.xlu0
        %v3030 = vpop.trf.xlu0
        %v3031 = vpop.trf.xlu0
        %v3032 = vpop.trf.xlu0
        %v3033 = vpop.trf.xlu0
        %v3034 = vpop.trf.xlu0
        %v3035 = vpop.trf.xlu0
        %v3036 = vpop.trf.xlu0
        %v3037 = vpop.trf.xlu0
        %v3038 = vpop.trf.xlu0
        %v3039 = vpop.trf.xlu0
        %v3040 = vpop.trf.xlu0
        %v3041 = vpop.trf.xlu0
        %v3042 = vpop.trf.xlu0
        %v3043 = vpop.trf.xlu0
        %3044 = vxpose.xlu0.b32.start [1/16] %v2102, 128
        %3045 = vxpose.xlu0.b32.cont [2/16] %v2107, 128
        %3046 = vxpose.xlu0.b32.cont [3/16] %v2112, 128
        %3047 = vxpose.xlu0.b32.cont [4/16] %v2117, 128
        %3048 = vxpose.xlu0.b32.cont [5/16] %v2122, 128
        %3049 = vxpose.xlu0.b32.cont [6/16] %v2127, 128
        %3050 = vxpose.xlu0.b32.cont [7/16] %v2132, 128
        %3051 = vxpose.xlu0.b32.cont [8/16] %v2137, 128
        %3052 = vxpose.xlu0.b32.cont [9/16] %v2142, 128
        %3053 = vxpose.xlu0.b32.cont [10/16] %v2147, 128
        %3054 = vxpose.xlu0.b32.cont [11/16] %v2152, 128
        %3055 = vxpose.xlu0.b32.cont [12/16] %v2157, 128
        %3056 = vxpose.xlu0.b32.cont [13/16] %v2162, 128
        %3057 = vxpose.xlu0.b32.cont [14/16] %v2167, 128
        %3058 = vxpose.xlu0.b32.cont [15/16] %v2172, 128
        %3059 = vxpose.xlu0.b32.end [16/16] %v2177, 128
        %v3060 = vpop.trf.xlu0
        %v3061 = vpop.trf.xlu0
        %v3062 = vpop.trf.xlu0
        %v3063 = vpop.trf.xlu0
        %v3064 = vpop.trf.xlu0
        %v3065 = vpop.trf.xlu0
        %v3066 = vpop.trf.xlu0
        %v3067 = vpop.trf.xlu0
        %v3068 = vpop.trf.xlu0
        %v3069 = vpop.trf.xlu0
        %v3070 = vpop.trf.xlu0
        %v3071 = vpop.trf.xlu0
        %v3072 = vpop.trf.xlu0
        %v3073 = vpop.trf.xlu0
        %v3074 = vpop.trf.xlu0
        %v3075 = vpop.trf.xlu0
        %3076 = vxpose.xlu0.b32.start [1/16] %v2182, 128
        %3077 = vxpose.xlu0.b32.cont [2/16] %v2187, 128
        %3078 = vxpose.xlu0.b32.cont [3/16] %v2192, 128
        %3079 = vxpose.xlu0.b32.cont [4/16] %v2197, 128
        %3080 = vxpose.xlu0.b32.cont [5/16] %v2202, 128
        %3081 = vxpose.xlu0.b32.cont [6/16] %v2207, 128
        %3082 = vxpose.xlu0.b32.cont [7/16] %v2212, 128
        %3083 = vxpose.xlu0.b32.cont [8/16] %v2217, 128
        %3084 = vxpose.xlu0.b32.cont [9/16] %v2222, 128
        %3085 = vxpose.xlu0.b32.cont [10/16] %v2227, 128
        %3086 = vxpose.xlu0.b32.cont [11/16] %v2232, 128
        %3087 = vxpose.xlu0.b32.cont [12/16] %v2237, 128
        %3088 = vxpose.xlu0.b32.cont [13/16] %v2242, 128
        %3089 = vxpose.xlu0.b32.cont [14/16] %v2247, 128
        %3090 = vxpose.xlu0.b32.cont [15/16] %v2252, 128
        %3091 = vxpose.xlu0.b32.end [16/16] %v2257, 128
        %v3092 = vpop.trf.xlu0
        %v3093 = vpop.trf.xlu0
        %v3094 = vpop.trf.xlu0
        %v3095 = vpop.trf.xlu0
        %v3096 = vpop.trf.xlu0
        %v3097 = vpop.trf.xlu0
        %v3098 = vpop.trf.xlu0
        %v3099 = vpop.trf.xlu0
        %v3100 = vpop.trf.xlu0
        %v3101 = vpop.trf.xlu0
        %v3102 = vpop.trf.xlu0
        %v3103 = vpop.trf.xlu0
        %v3104 = vpop.trf.xlu0
        %v3105 = vpop.trf.xlu0
        %v3106 = vpop.trf.xlu0
        %v3107 = vpop.trf.xlu0
        %3108 = vxpose.xlu0.b32.start [1/16] %v2262, 128
        %3109 = vxpose.xlu0.b32.cont [2/16] %v2267, 128
        %3110 = vxpose.xlu0.b32.cont [3/16] %v2272, 128
        %3111 = vxpose.xlu0.b32.cont [4/16] %v2277, 128
        %3112 = vxpose.xlu0.b32.cont [5/16] %v2282, 128
        %3113 = vxpose.xlu0.b32.cont [6/16] %v2287, 128
        %3114 = vxpose.xlu0.b32.cont [7/16] %v2292, 128
        %3115 = vxpose.xlu0.b32.cont [8/16] %v2297, 128
        %3116 = vxpose.xlu0.b32.cont [9/16] %v2302, 128
        %3117 = vxpose.xlu0.b32.cont [10/16] %v2307, 128
        %3118 = vxpose.xlu0.b32.cont [11/16] %v2312, 128
        %3119 = vxpose.xlu0.b32.cont [12/16] %v2317, 128
        %3120 = vxpose.xlu0.b32.cont [13/16] %v2322, 128
        %3121 = vxpose.xlu0.b32.cont [14/16] %v2327, 128
        %3122 = vxpose.xlu0.b32.cont [15/16] %v2332, 128
        %3123 = vxpose.xlu0.b32.end [16/16] %v2337, 128
        %v3124 = vpop.trf.xlu0
        %v3125 = vpop.trf.xlu0
        %v3126 = vpop.trf.xlu0
        %v3127 = vpop.trf.xlu0
        %v3128 = vpop.trf.xlu0
        %v3129 = vpop.trf.xlu0
        %v3130 = vpop.trf.xlu0
        %v3131 = vpop.trf.xlu0
        %v3132 = vpop.trf.xlu0
        %v3133 = vpop.trf.xlu0
        %v3134 = vpop.trf.xlu0
        %v3135 = vpop.trf.xlu0
        %v3136 = vpop.trf.xlu0
        %v3137 = vpop.trf.xlu0
        %v3138 = vpop.trf.xlu0
        %v3139 = vpop.trf.xlu0
        %3140 = vxpose.xlu0.b32.start [1/16] %v2342, 128
        %3141 = vxpose.xlu0.b32.cont [2/16] %v2347, 128
        %3142 = vxpose.xlu0.b32.cont [3/16] %v2352, 128
        %3143 = vxpose.xlu0.b32.cont [4/16] %v2357, 128
        %3144 = vxpose.xlu0.b32.cont [5/16] %v2362, 128
        %3145 = vxpose.xlu0.b32.cont [6/16] %v2367, 128
        %3146 = vxpose.xlu0.b32.cont [7/16] %v2372, 128
        %3147 = vxpose.xlu0.b32.cont [8/16] %v2377, 128
        %3148 = vxpose.xlu0.b32.cont [9/16] %v2382, 128
        %3149 = vxpose.xlu0.b32.cont [10/16] %v2387, 128
        %3150 = vxpose.xlu0.b32.cont [11/16] %v2392, 128
        %3151 = vxpose.xlu0.b32.cont [12/16] %v2397, 128
        %3152 = vxpose.xlu0.b32.cont [13/16] %v2402, 128
        %3153 = vxpose.xlu0.b32.cont [14/16] %v2407, 128
        %3154 = vxpose.xlu0.b32.cont [15/16] %v2412, 128
        %3155 = vxpose.xlu0.b32.end [16/16] %v2417, 128
        %v3156 = vpop.trf.xlu0
        %v3157 = vpop.trf.xlu0
        %v3158 = vpop.trf.xlu0
        %v3159 = vpop.trf.xlu0
        %v3160 = vpop.trf.xlu0
        %v3161 = vpop.trf.xlu0
        %v3162 = vpop.trf.xlu0
        %v3163 = vpop.trf.xlu0
        %v3164 = vpop.trf.xlu0
        %v3165 = vpop.trf.xlu0
        %v3166 = vpop.trf.xlu0
        %v3167 = vpop.trf.xlu0
        %v3168 = vpop.trf.xlu0
        %v3169 = vpop.trf.xlu0
        %v3170 = vpop.trf.xlu0
        %v3171 = vpop.trf.xlu0
        %3172 = vxpose.xlu0.b32.start [1/16] %v2422, 128
        %3173 = vxpose.xlu0.b32.cont [2/16] %v2427, 128
        %3174 = vxpose.xlu0.b32.cont [3/16] %v2432, 128
        %3175 = vxpose.xlu0.b32.cont [4/16] %v2437, 128
        %3176 = vxpose.xlu0.b32.cont [5/16] %v2442, 128
        %3177 = vxpose.xlu0.b32.cont [6/16] %v2447, 128
        %3178 = vxpose.xlu0.b32.cont [7/16] %v2452, 128
        %3179 = vxpose.xlu0.b32.cont [8/16] %v2457, 128
        %3180 = vxpose.xlu0.b32.cont [9/16] %v2462, 128
        %3181 = vxpose.xlu0.b32.cont [10/16] %v2467, 128
        %3182 = vxpose.xlu0.b32.cont [11/16] %v2472, 128
        %3183 = vxpose.xlu0.b32.cont [12/16] %v2477, 128
        %3184 = vxpose.xlu0.b32.cont [13/16] %v2482, 128
        %3185 = vxpose.xlu0.b32.cont [14/16] %v2487, 128
        %3186 = vxpose.xlu0.b32.cont [15/16] %v2492, 128
        %3187 = vxpose.xlu0.b32.end [16/16] %v2497, 128
        %v3188 = vpop.trf.xlu0
        %v3189 = vpop.trf.xlu0
        %v3190 = vpop.trf.xlu0
        %v3191 = vpop.trf.xlu0
        %v3192 = vpop.trf.xlu0
        %v3193 = vpop.trf.xlu0
        %v3194 = vpop.trf.xlu0
        %v3195 = vpop.trf.xlu0
        %v3196 = vpop.trf.xlu0
        %v3197 = vpop.trf.xlu0
        %v3198 = vpop.trf.xlu0
        %v3199 = vpop.trf.xlu0
        %v3200 = vpop.trf.xlu0
        %v3201 = vpop.trf.xlu0
        %v3202 = vpop.trf.xlu0
        %v3203 = vpop.trf.xlu0
        %3204 = vxpose.xlu0.b32.start [1/16] %v2502, 128
        %3205 = vxpose.xlu0.b32.cont [2/16] %v2507, 128
        %3206 = vxpose.xlu0.b32.cont [3/16] %v2512, 128
        %3207 = vxpose.xlu0.b32.cont [4/16] %v2517, 128
        %3208 = vxpose.xlu0.b32.cont [5/16] %v2522, 128
        %3209 = vxpose.xlu0.b32.cont [6/16] %v2527, 128
        %3210 = vxpose.xlu0.b32.cont [7/16] %v2532, 128
        %3211 = vxpose.xlu0.b32.cont [8/16] %v2537, 128
        %3212 = vxpose.xlu0.b32.cont [9/16] %v2542, 128
        %3213 = vxpose.xlu0.b32.cont [10/16] %v2547, 128
        %3214 = vxpose.xlu0.b32.cont [11/16] %v2552, 128
        %3215 = vxpose.xlu0.b32.cont [12/16] %v2557, 128
        %3216 = vxpose.xlu0.b32.cont [13/16] %v2562, 128
        %3217 = vxpose.xlu0.b32.cont [14/16] %v2567, 128
        %3218 = vxpose.xlu0.b32.cont [15/16] %v2572, 128
        %3219 = vxpose.xlu0.b32.end [16/16] %v2577, 128
        %v3220 = vpop.trf.xlu0
        %v3221 = vpop.trf.xlu0
        %v3222 = vpop.trf.xlu0
        %v3223 = vpop.trf.xlu0
        %v3224 = vpop.trf.xlu0
        %v3225 = vpop.trf.xlu0
        %v3226 = vpop.trf.xlu0
        %v3227 = vpop.trf.xlu0
        %v3228 = vpop.trf.xlu0
        %v3229 = vpop.trf.xlu0
        %v3230 = vpop.trf.xlu0
        %v3231 = vpop.trf.xlu0
        %v3232 = vpop.trf.xlu0
        %v3233 = vpop.trf.xlu0
        %v3234 = vpop.trf.xlu0
        %v3235 = vpop.trf.xlu0
        %3236 = vxpose.xlu0.b32.start [1/16] %v2582, 128
        %3237 = vxpose.xlu0.b32.cont [2/16] %v2587, 128
        %3238 = vxpose.xlu0.b32.cont [3/16] %v2592, 128
        %3239 = vxpose.xlu0.b32.cont [4/16] %v2597, 128
        %3240 = vxpose.xlu0.b32.cont [5/16] %v2602, 128
        %3241 = vxpose.xlu0.b32.cont [6/16] %v2607, 128
        %3242 = vxpose.xlu0.b32.cont [7/16] %v2612, 128
        %3243 = vxpose.xlu0.b32.cont [8/16] %v2617, 128
        %3244 = vxpose.xlu0.b32.cont [9/16] %v2622, 128
        %3245 = vxpose.xlu0.b32.cont [10/16] %v2627, 128
        %3246 = vxpose.xlu0.b32.cont [11/16] %v2632, 128
        %3247 = vxpose.xlu0.b32.cont [12/16] %v2637, 128
        %3248 = vxpose.xlu0.b32.cont [13/16] %v2642, 128
        %3249 = vxpose.xlu0.b32.cont [14/16] %v2647, 128
        %3250 = vxpose.xlu0.b32.cont [15/16] %v2652, 128
        %3251 = vxpose.xlu0.b32.end [16/16] %v2657, 128
        %v3252 = vpop.trf.xlu0
        %v3253 = vpop.trf.xlu0
        %v3254 = vpop.trf.xlu0
        %v3255 = vpop.trf.xlu0
        %v3256 = vpop.trf.xlu0
        %v3257 = vpop.trf.xlu0
        %v3258 = vpop.trf.xlu0
        %v3259 = vpop.trf.xlu0
        %v3260 = vpop.trf.xlu0
        %v3261 = vpop.trf.xlu0
        %v3262 = vpop.trf.xlu0
        %v3263 = vpop.trf.xlu0
        %v3264 = vpop.trf.xlu0
        %v3265 = vpop.trf.xlu0
        %v3266 = vpop.trf.xlu0
        %v3267 = vpop.trf.xlu0
        %3268 = vxpose.xlu0.b32.start [1/16] %v2662, 128
        %3269 = vxpose.xlu0.b32.cont [2/16] %v2667, 128
        %3270 = vxpose.xlu0.b32.cont [3/16] %v2672, 128
        %3271 = vxpose.xlu0.b32.cont [4/16] %v2677, 128
        %3272 = vxpose.xlu0.b32.cont [5/16] %v2682, 128
        %3273 = vxpose.xlu0.b32.cont [6/16] %v2687, 128
        %3274 = vxpose.xlu0.b32.cont [7/16] %v2692, 128
        %3275 = vxpose.xlu0.b32.cont [8/16] %v2697, 128
        %3276 = vxpose.xlu0.b32.cont [9/16] %v2702, 128
        %3277 = vxpose.xlu0.b32.cont [10/16] %v2707, 128
        %3278 = vxpose.xlu0.b32.cont [11/16] %v2712, 128
        %3279 = vxpose.xlu0.b32.cont [12/16] %v2717, 128
        %3280 = vxpose.xlu0.b32.cont [13/16] %v2722, 128
        %3281 = vxpose.xlu0.b32.cont [14/16] %v2727, 128
        %3282 = vxpose.xlu0.b32.cont [15/16] %v2732, 128
        %3283 = vxpose.xlu0.b32.end [16/16] %v2737, 128
        %v3284 = vpop.trf.xlu0
        %v3285 = vpop.trf.xlu0
        %v3286 = vpop.trf.xlu0
        %v3287 = vpop.trf.xlu0
        %v3288 = vpop.trf.xlu0
        %v3289 = vpop.trf.xlu0
        %v3290 = vpop.trf.xlu0
        %v3291 = vpop.trf.xlu0
        %v3292 = vpop.trf.xlu0
        %v3293 = vpop.trf.xlu0
        %v3294 = vpop.trf.xlu0
        %v3295 = vpop.trf.xlu0
        %v3296 = vpop.trf.xlu0
        %v3297 = vpop.trf.xlu0
        %v3298 = vpop.trf.xlu0
        %v3299 = vpop.trf.xlu0
        %3300 = vxpose.xlu0.b32.start [1/16] %v2742, 128
        %3301 = vxpose.xlu0.b32.cont [2/16] %v2747, 128
        %3302 = vxpose.xlu0.b32.cont [3/16] %v2752, 128
        %3303 = vxpose.xlu0.b32.cont [4/16] %v2757, 128
        %3304 = vxpose.xlu0.b32.cont [5/16] %v2762, 128
        %3305 = vxpose.xlu0.b32.cont [6/16] %v2767, 128
        %3306 = vxpose.xlu0.b32.cont [7/16] %v2772, 128
        %3307 = vxpose.xlu0.b32.cont [8/16] %v2777, 128
        %3308 = vxpose.xlu0.b32.cont [9/16] %v2782, 128
        %3309 = vxpose.xlu0.b32.cont [10/16] %v2787, 128
        %3310 = vxpose.xlu0.b32.cont [11/16] %v2792, 128
        %3311 = vxpose.xlu0.b32.cont [12/16] %v2797, 128
        %3312 = vxpose.xlu0.b32.cont [13/16] %v2802, 128
        %3313 = vxpose.xlu0.b32.cont [14/16] %v2807, 128
        %3314 = vxpose.xlu0.b32.cont [15/16] %v2812, 128
        %3315 = vxpose.xlu0.b32.end [16/16] %v2817, 128
        %v3316 = vpop.trf.xlu0
        %v3317 = vpop.trf.xlu0
        %v3318 = vpop.trf.xlu0
        %v3319 = vpop.trf.xlu0
        %v3320 = vpop.trf.xlu0
        %v3321 = vpop.trf.xlu0
        %v3322 = vpop.trf.xlu0
        %v3323 = vpop.trf.xlu0
        %v3324 = vpop.trf.xlu0
        %v3325 = vpop.trf.xlu0
        %v3326 = vpop.trf.xlu0
        %v3327 = vpop.trf.xlu0
        %v3328 = vpop.trf.xlu0
        %v3329 = vpop.trf.xlu0
        %v3330 = vpop.trf.xlu0
        %v3331 = vpop.trf.xlu0
        %3333 = vset.pattern.permute.xlu0 0
        %3334 = vperm.xlu0 %3333, %v705
        %v3335 = vpop.permute.xlu0 %3334
        %v3337 = vadd.f32 %v2836, %v3335
        %v3338 = vadd.f32 %v2868, %v3335
        %v3339 = vadd.f32 %v2900, %v3335
        %v3340 = vadd.f32 %v2932, %v3335
        %v3341 = vadd.f32 %v2964, %v3335
        %v3342 = vadd.f32 %v2996, %v3335
        %v3343 = vadd.f32 %v3028, %v3335
        %v3344 = vadd.f32 %v3060, %v3335
        %v3345 = vadd.f32 %v3092, %v3335
        %v3346 = vadd.f32 %v3124, %v3335
        %v3347 = vadd.f32 %v3156, %v3335
        %v3348 = vadd.f32 %v3188, %v3335
        %v3349 = vadd.f32 %v3220, %v3335
        %v3350 = vadd.f32 %v3252, %v3335
        %v3351 = vadd.f32 %v3284, %v3335
        %v3352 = vadd.f32 %v3316, %v3335
        %v3353 = vxor.u32 %v3337, 2147483648
        %v3354 = vxor.u32 %v3338, 2147483648
        %v3355 = vxor.u32 %v3339, 2147483648
        %v3356 = vxor.u32 %v3340, 2147483648
        %v3357 = vxor.u32 %v3341, 2147483648
        %v3358 = vxor.u32 %v3342, 2147483648
        %v3359 = vxor.u32 %v3343, 2147483648
        %v3360 = vxor.u32 %v3344, 2147483648
        %v3361 = vxor.u32 %v3345, 2147483648
        %v3362 = vxor.u32 %v3346, 2147483648
        %v3363 = vxor.u32 %v3347, 2147483648
        %v3364 = vxor.u32 %v3348, 2147483648
        %v3365 = vxor.u32 %v3349, 2147483648
        %v3366 = vxor.u32 %v3350, 2147483648
        %v3367 = vxor.u32 %v3351, 2147483648
        %v3368 = vxor.u32 %v3352, 2147483648
        %v3369 = vmul.f32 %v3353, 1.442695
        %v3370 = vpow.pop %v3369
        %v3371 = vmul.f32 %v3354, 1.442695
        %v3372 = vpow.pop %v3371
        %v3373 = vmul.f32 %v3355, 1.442695
        %v3374 = vpow.pop %v3373
        %v3375 = vmul.f32 %v3356, 1.442695
        %v3376 = vpow.pop %v3375
        %v3377 = vmul.f32 %v3357, 1.442695
        %v3378 = vpow.pop %v3377
        %v3379 = vmul.f32 %v3358, 1.442695
        %v3380 = vpow.pop %v3379
        %v3381 = vmul.f32 %v3359, 1.442695
        %v3382 = vpow.pop %v3381
        %v3383 = vmul.f32 %v3360, 1.442695
        %v3384 = vpow.pop %v3383
        %v3385 = vmul.f32 %v3361, 1.442695
        %v3386 = vpow.pop %v3385
        %v3387 = vmul.f32 %v3362, 1.442695
        %v3388 = vpow.pop %v3387
        %v3389 = vmul.f32 %v3363, 1.442695
        %v3390 = vpow.pop %v3389
        %v3391 = vmul.f32 %v3364, 1.442695
        %v3392 = vpow.pop %v3391
        %v3393 = vmul.f32 %v3365, 1.442695
        %v3394 = vpow.pop %v3393
        %v3395 = vmul.f32 %v3366, 1.442695
        %v3396 = vpow.pop %v3395
        %v3397 = vmul.f32 %v3367, 1.442695
        %v3398 = vpow.pop %v3397
        %v3399 = vmul.f32 %v3368, 1.442695
        %v3400 = vpow.pop %v3399
        %v3401 = vadd.f32 %v3370, 1.0
        %v3402 = vadd.f32 %v3372, 1.0
        %v3403 = vadd.f32 %v3374, 1.0
        %v3404 = vadd.f32 %v3376, 1.0
        %v3405 = vadd.f32 %v3378, 1.0
        %v3406 = vadd.f32 %v3380, 1.0
        %v3407 = vadd.f32 %v3382, 1.0
        %v3408 = vadd.f32 %v3384, 1.0
        %v3409 = vadd.f32 %v3386, 1.0
        %v3410 = vadd.f32 %v3388, 1.0
        %v3411 = vadd.f32 %v3390, 1.0
        %v3412 = vadd.f32 %v3392, 1.0
        %v3413 = vadd.f32 %v3394, 1.0
        %v3414 = vadd.f32 %v3396, 1.0
        %v3415 = vadd.f32 %v3398, 1.0
        %v3416 = vadd.f32 %v3400, 1.0
        %v3417 = vrcp.pop %v3401
        %v3418 = vmul.f32 1.0, %v3417
        %v3419 = vrcp.pop %v3402
        %v3420 = vmul.f32 1.0, %v3419
        %v3421 = vrcp.pop %v3403
        %v3422 = vmul.f32 1.0, %v3421
        %v3423 = vrcp.pop %v3404
        %v3424 = vmul.f32 1.0, %v3423
        %v3425 = vrcp.pop %v3405
        %v3426 = vmul.f32 1.0, %v3425
        %v3427 = vrcp.pop %v3406
        %v3428 = vmul.f32 1.0, %v3427
        %v3429 = vrcp.pop %v3407
        %v3430 = vmul.f32 1.0, %v3429
        %v3431 = vrcp.pop %v3408
        %v3432 = vmul.f32 1.0, %v3431
        %v3433 = vrcp.pop %v3409
        %v3434 = vmul.f32 1.0, %v3433
        %v3435 = vrcp.pop %v3410
        %v3436 = vmul.f32 1.0, %v3435
        %v3437 = vrcp.pop %v3411
        %v3438 = vmul.f32 1.0, %v3437
        %v3439 = vrcp.pop %v3412
        %v3440 = vmul.f32 1.0, %v3439
        %v3441 = vrcp.pop %v3413
        %v3442 = vmul.f32 1.0, %v3441
        %v3443 = vrcp.pop %v3414
        %v3444 = vmul.f32 1.0, %v3443
        %v3445 = vrcp.pop %v3415
        %v3446 = vmul.f32 1.0, %v3445
        %v3447 = vrcp.pop %v3416
        %v3448 = vmul.f32 1.0, %v3447
        %3449 = vset.pattern.permute.xlu0 1
        %3450 = vperm.xlu0 %3449, %v705
        %v3451 = vpop.permute.xlu0 %3450
        %v3453 = vlaneseq
        %v3454 = vshrl.u32 %v3453, 7
        %v3455 = vsub.s32 0, %v3454
        %v3456 = vrot.slane %v3418, %v3455
        %v3457 = vlaneseq
        %v3458 = vshrl.u32 %v3457, 7
        %v3459 = vsub.s32 0, %v3458
        %v3460 = vrot.slane %v3420, %v3459
        %v3461 = vlaneseq
        %v3462 = vshrl.u32 %v3461, 7
        %v3463 = vsub.s32 0, %v3462
        %v3464 = vrot.slane %v3422, %v3463
        %v3465 = vlaneseq
        %v3466 = vshrl.u32 %v3465, 7
        %v3467 = vsub.s32 0, %v3466
        %v3468 = vrot.slane %v3424, %v3467
        %v3469 = vlaneseq
        %v3470 = vshrl.u32 %v3469, 7
        %v3471 = vsub.s32 0, %v3470
        %v3472 = vrot.slane %v3426, %v3471
        %v3473 = vlaneseq
        %v3474 = vshrl.u32 %v3473, 7
        %v3475 = vsub.s32 0, %v3474
        %v3476 = vrot.slane %v3428, %v3475
        %v3477 = vlaneseq
        %v3478 = vshrl.u32 %v3477, 7
        %v3479 = vsub.s32 0, %v3478
        %v3480 = vrot.slane %v3430, %v3479
        %v3481 = vlaneseq
        %v3482 = vshrl.u32 %v3481, 7
        %v3483 = vsub.s32 0, %v3482
        %v3484 = vrot.slane %v3432, %v3483
        %v3485 = vlaneseq
        %v3486 = vshrl.u32 %v3485, 7
        %v3487 = vsub.s32 0, %v3486
        %v3488 = vrot.slane %v3434, %v3487
        %v3489 = vlaneseq
        %v3490 = vshrl.u32 %v3489, 7
        %v3491 = vsub.s32 0, %v3490
        %v3492 = vrot.slane %v3436, %v3491
        %v3493 = vlaneseq
        %v3494 = vshrl.u32 %v3493, 7
        %v3495 = vsub.s32 0, %v3494
        %v3496 = vrot.slane %v3438, %v3495
        %v3497 = vlaneseq
        %v3498 = vshrl.u32 %v3497, 7
        %v3499 = vsub.s32 0, %v3498
        %v3500 = vrot.slane %v3440, %v3499
        %v3501 = vlaneseq
        %v3502 = vshrl.u32 %v3501, 7
        %v3503 = vsub.s32 0, %v3502
        %v3504 = vrot.slane %v3442, %v3503
        %v3505 = vlaneseq
        %v3506 = vshrl.u32 %v3505, 7
        %v3507 = vsub.s32 0, %v3506
        %v3508 = vrot.slane %v3444, %v3507
        %v3509 = vlaneseq
        %v3510 = vshrl.u32 %v3509, 7
        %v3511 = vsub.s32 0, %v3510
        %v3512 = vrot.slane %v3446, %v3511
        %v3513 = vlaneseq
        %v3514 = vshrl.u32 %v3513, 7
        %v3515 = vsub.s32 0, %v3514
        %v3516 = vrot.slane %v3448, %v3515
        %v3517 = vmul.f32 %v3451, %v3456
        %v3518 = vmul.f32 %v3451, %v3460
        %v3519 = vmul.f32 %v3451, %v3464
        %v3520 = vmul.f32 %v3451, %v3468
        %v3521 = vmul.f32 %v3451, %v3472
        %v3522 = vmul.f32 %v3451, %v3476
        %v3523 = vmul.f32 %v3451, %v3480
        %v3524 = vmul.f32 %v3451, %v3484
        %v3525 = vmul.f32 %v3451, %v3488
        %v3526 = vmul.f32 %v3451, %v3492
        %v3527 = vmul.f32 %v3451, %v3496
        %v3528 = vmul.f32 %v3451, %v3500
        %v3529 = vmul.f32 %v3451, %v3504
        %v3530 = vmul.f32 %v3451, %v3508
        %v3531 = vmul.f32 %v3451, %v3512
        %v3532 = vmul.f32 %v3451, %v3516
        %3533 = vset.pattern.permute.xlu0 5
        %3534 = vperm.xlu0 %3533, %v705
        %v3535 = vpop.permute.xlu0 %3534
        %v3537 = vadd.f32 %v3535, %v3517
        %v3538 = vadd.f32 %v3535, %v3518
        %v3539 = vadd.f32 %v3535, %v3519
        %v3540 = vadd.f32 %v3535, %v3520
        %v3541 = vadd.f32 %v3535, %v3521
        %v3542 = vadd.f32 %v3535, %v3522
        %v3543 = vadd.f32 %v3535, %v3523
        %v3544 = vadd.f32 %v3535, %v3524
        %v3545 = vadd.f32 %v3535, %v3525
        %v3546 = vadd.f32 %v3535, %v3526
        %v3547 = vadd.f32 %v3535, %v3527
        %v3548 = vadd.f32 %v3535, %v3528
        %v3549 = vadd.f32 %v3535, %v3529
        %v3550 = vadd.f32 %v3535, %v3530
        %v3551 = vadd.f32 %v3535, %v3531
        %v3552 = vadd.f32 %v3535, %v3532
        %3553 = vset.pattern.permute.xlu0 2
        %3554 = vperm.xlu0 %3553, %v705
        %v3555 = vpop.permute.xlu0 %3554
        %v3557 = vlaneseq
        %v3558 = vshrl.u32 %v3557, 7
        %v3559 = vsub.s32 1, %v3558
        %v3560 = vrot.slane %v3418, %v3559
        %v3561 = vlaneseq
        %v3562 = vshrl.u32 %v3561, 7
        %v3563 = vsub.s32 1, %v3562
        %v3564 = vrot.slane %v3420, %v3563
        %v3565 = vlaneseq
        %v3566 = vshrl.u32 %v3565, 7
        %v3567 = vsub.s32 1, %v3566
        %v3568 = vrot.slane %v3422, %v3567
        %v3569 = vlaneseq
        %v3570 = vshrl.u32 %v3569, 7
        %v3571 = vsub.s32 1, %v3570
        %v3572 = vrot.slane %v3424, %v3571
        %v3573 = vlaneseq
        %v3574 = vshrl.u32 %v3573, 7
        %v3575 = vsub.s32 1, %v3574
        %v3576 = vrot.slane %v3426, %v3575
        %v3577 = vlaneseq
        %v3578 = vshrl.u32 %v3577, 7
        %v3579 = vsub.s32 1, %v3578
        %v3580 = vrot.slane %v3428, %v3579
        %v3581 = vlaneseq
        %v3582 = vshrl.u32 %v3581, 7
        %v3583 = vsub.s32 1, %v3582
        %v3584 = vrot.slane %v3430, %v3583
        %v3585 = vlaneseq
        %v3586 = vshrl.u32 %v3585, 7
        %v3587 = vsub.s32 1, %v3586
        %v3588 = vrot.slane %v3432, %v3587
        %v3589 = vlaneseq
        %v3590 = vshrl.u32 %v3589, 7
        %v3591 = vsub.s32 1, %v3590
        %v3592 = vrot.slane %v3434, %v3591
        %v3593 = vlaneseq
        %v3594 = vshrl.u32 %v3593, 7
        %v3595 = vsub.s32 1, %v3594
        %v3596 = vrot.slane %v3436, %v3595
        %v3597 = vlaneseq
        %v3598 = vshrl.u32 %v3597, 7
        %v3599 = vsub.s32 1, %v3598
        %v3600 = vrot.slane %v3438, %v3599
        %v3601 = vlaneseq
        %v3602 = vshrl.u32 %v3601, 7
        %v3603 = vsub.s32 1, %v3602
        %v3604 = vrot.slane %v3440, %v3603
        %v3605 = vlaneseq
        %v3606 = vshrl.u32 %v3605, 7
        %v3607 = vsub.s32 1, %v3606
        %v3608 = vrot.slane %v3442, %v3607
        %v3609 = vlaneseq
        %v3610 = vshrl.u32 %v3609, 7
        %v3611 = vsub.s32 1, %v3610
        %v3612 = vrot.slane %v3444, %v3611
        %v3613 = vlaneseq
        %v3614 = vshrl.u32 %v3613, 7
        %v3615 = vsub.s32 1, %v3614
        %v3616 = vrot.slane %v3446, %v3615
        %v3617 = vlaneseq
        %v3618 = vshrl.u32 %v3617, 7
        %v3619 = vsub.s32 1, %v3618
        %v3620 = vrot.slane %v3448, %v3619
        %v3621 = vmul.f32 %v3555, %v3560
        %v3622 = vmul.f32 %v3555, %v3564
        %v3623 = vmul.f32 %v3555, %v3568
        %v3624 = vmul.f32 %v3555, %v3572
        %v3625 = vmul.f32 %v3555, %v3576
        %v3626 = vmul.f32 %v3555, %v3580
        %v3627 = vmul.f32 %v3555, %v3584
        %v3628 = vmul.f32 %v3555, %v3588
        %v3629 = vmul.f32 %v3555, %v3592
        %v3630 = vmul.f32 %v3555, %v3596
        %v3631 = vmul.f32 %v3555, %v3600
        %v3632 = vmul.f32 %v3555, %v3604
        %v3633 = vmul.f32 %v3555, %v3608
        %v3634 = vmul.f32 %v3555, %v3612
        %v3635 = vmul.f32 %v3555, %v3616
        %v3636 = vmul.f32 %v3555, %v3620
        %v3637 = vadd.f32 %v3537, %v3621
        %v3638 = vadd.f32 %v3538, %v3622
        %v3639 = vadd.f32 %v3539, %v3623
        %v3640 = vadd.f32 %v3540, %v3624
        %v3641 = vadd.f32 %v3541, %v3625
        %v3642 = vadd.f32 %v3542, %v3626
        %v3643 = vadd.f32 %v3543, %v3627
        %v3644 = vadd.f32 %v3544, %v3628
        %v3645 = vadd.f32 %v3545, %v3629
        %v3646 = vadd.f32 %v3546, %v3630
        %v3647 = vadd.f32 %v3547, %v3631
        %v3648 = vadd.f32 %v3548, %v3632
        %v3649 = vadd.f32 %v3549, %v3633
        %v3650 = vadd.f32 %v3550, %v3634
        %v3651 = vadd.f32 %v3551, %v3635
        %v3652 = vadd.f32 %v3552, %v3636
        %3653 = vset.pattern.permute.xlu0 3
        %3654 = vperm.xlu0 %3653, %v705
        %v3655 = vpop.permute.xlu0 %3654
        %v3657 = vlaneseq
        %v3658 = vshrl.u32 %v3657, 7
        %v3659 = vsub.s32 2, %v3658
        %v3660 = vrot.slane %v3418, %v3659
        %v3661 = vlaneseq
        %v3662 = vshrl.u32 %v3661, 7
        %v3663 = vsub.s32 2, %v3662
        %v3664 = vrot.slane %v3420, %v3663
        %v3665 = vlaneseq
        %v3666 = vshrl.u32 %v3665, 7
        %v3667 = vsub.s32 2, %v3666
        %v3668 = vrot.slane %v3422, %v3667
        %v3669 = vlaneseq
        %v3670 = vshrl.u32 %v3669, 7
        %v3671 = vsub.s32 2, %v3670
        %v3672 = vrot.slane %v3424, %v3671
        %v3673 = vlaneseq
        %v3674 = vshrl.u32 %v3673, 7
        %v3675 = vsub.s32 2, %v3674
        %v3676 = vrot.slane %v3426, %v3675
        %v3677 = vlaneseq
        %v3678 = vshrl.u32 %v3677, 7
        %v3679 = vsub.s32 2, %v3678
        %v3680 = vrot.slane %v3428, %v3679
        %v3681 = vlaneseq
        %v3682 = vshrl.u32 %v3681, 7
        %v3683 = vsub.s32 2, %v3682
        %v3684 = vrot.slane %v3430, %v3683
        %v3685 = vlaneseq
        %v3686 = vshrl.u32 %v3685, 7
        %v3687 = vsub.s32 2, %v3686
        %v3688 = vrot.slane %v3432, %v3687
        %v3689 = vlaneseq
        %v3690 = vshrl.u32 %v3689, 7
        %v3691 = vsub.s32 2, %v3690
        %v3692 = vrot.slane %v3434, %v3691
        %v3693 = vlaneseq
        %v3694 = vshrl.u32 %v3693, 7
        %v3695 = vsub.s32 2, %v3694
        %v3696 = vrot.slane %v3436, %v3695
        %v3697 = vlaneseq
        %v3698 = vshrl.u32 %v3697, 7
        %v3699 = vsub.s32 2, %v3698
        %v3700 = vrot.slane %v3438, %v3699
        %v3701 = vlaneseq
        %v3702 = vshrl.u32 %v3701, 7
        %v3703 = vsub.s32 2, %v3702
        %v3704 = vrot.slane %v3440, %v3703
        %v3705 = vlaneseq
        %v3706 = vshrl.u32 %v3705, 7
        %v3707 = vsub.s32 2, %v3706
        %v3708 = vrot.slane %v3442, %v3707
        %v3709 = vlaneseq
        %v3710 = vshrl.u32 %v3709, 7
        %v3711 = vsub.s32 2, %v3710
        %v3712 = vrot.slane %v3444, %v3711
        %v3713 = vlaneseq
        %v3714 = vshrl.u32 %v3713, 7
        %v3715 = vsub.s32 2, %v3714
        %v3716 = vrot.slane %v3446, %v3715
        %v3717 = vlaneseq
        %v3718 = vshrl.u32 %v3717, 7
        %v3719 = vsub.s32 2, %v3718
        %v3720 = vrot.slane %v3448, %v3719
        %v3721 = vmul.f32 %v3655, %v3660
        %v3722 = vmul.f32 %v3655, %v3664
        %v3723 = vmul.f32 %v3655, %v3668
        %v3724 = vmul.f32 %v3655, %v3672
        %v3725 = vmul.f32 %v3655, %v3676
        %v3726 = vmul.f32 %v3655, %v3680
        %v3727 = vmul.f32 %v3655, %v3684
        %v3728 = vmul.f32 %v3655, %v3688
        %v3729 = vmul.f32 %v3655, %v3692
        %v3730 = vmul.f32 %v3655, %v3696
        %v3731 = vmul.f32 %v3655, %v3700
        %v3732 = vmul.f32 %v3655, %v3704
        %v3733 = vmul.f32 %v3655, %v3708
        %v3734 = vmul.f32 %v3655, %v3712
        %v3735 = vmul.f32 %v3655, %v3716
        %v3736 = vmul.f32 %v3655, %v3720
        %v3737 = vadd.f32 %v3637, %v3721
        %v3738 = vadd.f32 %v3638, %v3722
        %v3739 = vadd.f32 %v3639, %v3723
        %v3740 = vadd.f32 %v3640, %v3724
        %v3741 = vadd.f32 %v3641, %v3725
        %v3742 = vadd.f32 %v3642, %v3726
        %v3743 = vadd.f32 %v3643, %v3727
        %v3744 = vadd.f32 %v3644, %v3728
        %v3745 = vadd.f32 %v3645, %v3729
        %v3746 = vadd.f32 %v3646, %v3730
        %v3747 = vadd.f32 %v3647, %v3731
        %v3748 = vadd.f32 %v3648, %v3732
        %v3749 = vadd.f32 %v3649, %v3733
        %v3750 = vadd.f32 %v3650, %v3734
        %v3751 = vadd.f32 %v3651, %v3735
        %v3752 = vadd.f32 %v3652, %v3736
        %3753 = vset.pattern.permute.xlu0 4
        %3754 = vperm.xlu0 %3753, %v705
        %v3755 = vpop.permute.xlu0 %3754
        %v3757 = vlaneseq
        %v3758 = vshrl.u32 %v3757, 7
        %v3759 = vsub.s32 3, %v3758
        %v3760 = vrot.slane %v3418, %v3759
        %v3761 = vlaneseq
        %v3762 = vshrl.u32 %v3761, 7
        %v3763 = vsub.s32 3, %v3762
        %v3764 = vrot.slane %v3420, %v3763
        %v3765 = vlaneseq
        %v3766 = vshrl.u32 %v3765, 7
        %v3767 = vsub.s32 3, %v3766
        %v3768 = vrot.slane %v3422, %v3767
        %v3769 = vlaneseq
        %v3770 = vshrl.u32 %v3769, 7
        %v3771 = vsub.s32 3, %v3770
        %v3772 = vrot.slane %v3424, %v3771
        %v3773 = vlaneseq
        %v3774 = vshrl.u32 %v3773, 7
        %v3775 = vsub.s32 3, %v3774
        %v3776 = vrot.slane %v3426, %v3775
        %v3777 = vlaneseq
        %v3778 = vshrl.u32 %v3777, 7
        %v3779 = vsub.s32 3, %v3778
        %v3780 = vrot.slane %v3428, %v3779
        %v3781 = vlaneseq
        %v3782 = vshrl.u32 %v3781, 7
        %v3783 = vsub.s32 3, %v3782
        %v3784 = vrot.slane %v3430, %v3783
        %v3785 = vlaneseq
        %v3786 = vshrl.u32 %v3785, 7
        %v3787 = vsub.s32 3, %v3786
        %v3788 = vrot.slane %v3432, %v3787
        %v3789 = vlaneseq
        %v3790 = vshrl.u32 %v3789, 7
        %v3791 = vsub.s32 3, %v3790
        %v3792 = vrot.slane %v3434, %v3791
        %v3793 = vlaneseq
        %v3794 = vshrl.u32 %v3793, 7
        %v3795 = vsub.s32 3, %v3794
        %v3796 = vrot.slane %v3436, %v3795
        %v3797 = vlaneseq
        %v3798 = vshrl.u32 %v3797, 7
        %v3799 = vsub.s32 3, %v3798
        %v3800 = vrot.slane %v3438, %v3799
        %v3801 = vlaneseq
        %v3802 = vshrl.u32 %v3801, 7
        %v3803 = vsub.s32 3, %v3802
        %v3804 = vrot.slane %v3440, %v3803
        %v3805 = vlaneseq
        %v3806 = vshrl.u32 %v3805, 7
        %v3807 = vsub.s32 3, %v3806
        %v3808 = vrot.slane %v3442, %v3807
        %v3809 = vlaneseq
        %v3810 = vshrl.u32 %v3809, 7
        %v3811 = vsub.s32 3, %v3810
        %v3812 = vrot.slane %v3444, %v3811
        %v3813 = vlaneseq
        %v3814 = vshrl.u32 %v3813, 7
        %v3815 = vsub.s32 3, %v3814
        %v3816 = vrot.slane %v3446, %v3815
        %v3817 = vlaneseq
        %v3818 = vshrl.u32 %v3817, 7
        %v3819 = vsub.s32 3, %v3818
        %v3820 = vrot.slane %v3448, %v3819
        %v3821 = vmul.f32 %v3755, %v3760
        %v3822 = vmul.f32 %v3755, %v3764
        %v3823 = vmul.f32 %v3755, %v3768
        %v3824 = vmul.f32 %v3755, %v3772
        %v3825 = vmul.f32 %v3755, %v3776
        %v3826 = vmul.f32 %v3755, %v3780
        %v3827 = vmul.f32 %v3755, %v3784
        %v3828 = vmul.f32 %v3755, %v3788
        %v3829 = vmul.f32 %v3755, %v3792
        %v3830 = vmul.f32 %v3755, %v3796
        %v3831 = vmul.f32 %v3755, %v3800
        %v3832 = vmul.f32 %v3755, %v3804
        %v3833 = vmul.f32 %v3755, %v3808
        %v3834 = vmul.f32 %v3755, %v3812
        %v3835 = vmul.f32 %v3755, %v3816
        %v3836 = vmul.f32 %v3755, %v3820
        %v3837 = vadd.f32 %v3737, %v3821
        %v3838 = vadd.f32 %v3738, %v3822
        %v3839 = vadd.f32 %v3739, %v3823
        %v3840 = vadd.f32 %v3740, %v3824
        %v3841 = vadd.f32 %v3741, %v3825
        %v3842 = vadd.f32 %v3742, %v3826
        %v3843 = vadd.f32 %v3743, %v3827
        %v3844 = vadd.f32 %v3744, %v3828
        %v3845 = vadd.f32 %v3745, %v3829
        %v3846 = vadd.f32 %v3746, %v3830
        %v3847 = vadd.f32 %v3747, %v3831
        %v3848 = vadd.f32 %v3748, %v3832
        %v3849 = vadd.f32 %v3749, %v3833
        %v3850 = vadd.f32 %v3750, %v3834
        %v3851 = vadd.f32 %v3751, %v3835
        %v3852 = vadd.f32 %v3752, %v3836
        %v3853 = vxor.u32 %v3837, 2147483648
        %v3854 = vxor.u32 %v3838, 2147483648
        %v3855 = vxor.u32 %v3839, 2147483648
        %v3856 = vxor.u32 %v3840, 2147483648
        %v3857 = vxor.u32 %v3841, 2147483648
        %v3858 = vxor.u32 %v3842, 2147483648
        %v3859 = vxor.u32 %v3843, 2147483648
        %v3860 = vxor.u32 %v3844, 2147483648
        %v3861 = vxor.u32 %v3845, 2147483648
        %v3862 = vxor.u32 %v3846, 2147483648
        %v3863 = vxor.u32 %v3847, 2147483648
        %v3864 = vxor.u32 %v3848, 2147483648
        %v3865 = vxor.u32 %v3849, 2147483648
        %v3866 = vxor.u32 %v3850, 2147483648
        %v3867 = vxor.u32 %v3851, 2147483648
        %v3868 = vxor.u32 %v3852, 2147483648
        %v3869 = vmul.f32 %v3853, 1.442695
        %v3870 = vpow.pop %v3869
        %v3871 = vmul.f32 %v3854, 1.442695
        %v3872 = vpow.pop %v3871
        %v3873 = vmul.f32 %v3855, 1.442695
        %v3874 = vpow.pop %v3873
        %v3875 = vmul.f32 %v3856, 1.442695
        %v3876 = vpow.pop %v3875
        %v3877 = vmul.f32 %v3857, 1.442695
        %v3878 = vpow.pop %v3877
        %v3879 = vmul.f32 %v3858, 1.442695
        %v3880 = vpow.pop %v3879
        %v3881 = vmul.f32 %v3859, 1.442695
        %v3882 = vpow.pop %v3881
        %v3883 = vmul.f32 %v3860, 1.442695
        %v3884 = vpow.pop %v3883
        %v3885 = vmul.f32 %v3861, 1.442695
        %v3886 = vpow.pop %v3885
        %v3887 = vmul.f32 %v3862, 1.442695
        %v3888 = vpow.pop %v3887
        %v3889 = vmul.f32 %v3863, 1.442695
        %v3890 = vpow.pop %v3889
        %v3891 = vmul.f32 %v3864, 1.442695
        %v3892 = vpow.pop %v3891
        %v3893 = vmul.f32 %v3865, 1.442695
        %v3894 = vpow.pop %v3893
        %v3895 = vmul.f32 %v3866, 1.442695
        %v3896 = vpow.pop %v3895
        %v3897 = vmul.f32 %v3867, 1.442695
        %v3898 = vpow.pop %v3897
        %v3899 = vmul.f32 %v3868, 1.442695
        %v3900 = vpow.pop %v3899
        %v3901 = vadd.f32 %v3870, 1.0
        %v3902 = vadd.f32 %v3872, 1.0
        %v3903 = vadd.f32 %v3874, 1.0
        %v3904 = vadd.f32 %v3876, 1.0
        %v3905 = vadd.f32 %v3878, 1.0
        %v3906 = vadd.f32 %v3880, 1.0
        %v3907 = vadd.f32 %v3882, 1.0
        %v3908 = vadd.f32 %v3884, 1.0
        %v3909 = vadd.f32 %v3886, 1.0
        %v3910 = vadd.f32 %v3888, 1.0
        %v3911 = vadd.f32 %v3890, 1.0
        %v3912 = vadd.f32 %v3892, 1.0
        %v3913 = vadd.f32 %v3894, 1.0
        %v3914 = vadd.f32 %v3896, 1.0
        %v3915 = vadd.f32 %v3898, 1.0
        %v3916 = vadd.f32 %v3900, 1.0
        %v3917 = vrcp.pop %v3901
        %v3918 = vmul.f32 1.0, %v3917
        %v3919 = vrcp.pop %v3902
        %v3920 = vmul.f32 1.0, %v3919
        %v3921 = vrcp.pop %v3903
        %v3922 = vmul.f32 1.0, %v3921
        %v3923 = vrcp.pop %v3904
        %v3924 = vmul.f32 1.0, %v3923
        %v3925 = vrcp.pop %v3905
        %v3926 = vmul.f32 1.0, %v3925
        %v3927 = vrcp.pop %v3906
        %v3928 = vmul.f32 1.0, %v3927
        %v3929 = vrcp.pop %v3907
        %v3930 = vmul.f32 1.0, %v3929
        %v3931 = vrcp.pop %v3908
        %v3932 = vmul.f32 1.0, %v3931
        %v3933 = vrcp.pop %v3909
        %v3934 = vmul.f32 1.0, %v3933
        %v3935 = vrcp.pop %v3910
        %v3936 = vmul.f32 1.0, %v3935
        %v3937 = vrcp.pop %v3911
        %v3938 = vmul.f32 1.0, %v3937
        %v3939 = vrcp.pop %v3912
        %v3940 = vmul.f32 1.0, %v3939
        %v3941 = vrcp.pop %v3913
        %v3942 = vmul.f32 1.0, %v3941
        %v3943 = vrcp.pop %v3914
        %v3944 = vmul.f32 1.0, %v3943
        %v3945 = vrcp.pop %v3915
        %v3946 = vmul.f32 1.0, %v3945
        %v3947 = vrcp.pop %v3916
        %v3948 = vmul.f32 1.0, %v3947
        %3949 = vset.pattern.permute.xlu0 6
        %3950 = vperm.xlu0 %3949, %v705
        %v3951 = vpop.permute.xlu0 %3950
        %v3953 = vlaneseq
        %v3954 = vshrl.u32 %v3953, 7
        %v3955 = vsub.s32 0, %v3954
        %v3956 = vrot.slane %v3918, %v3955
        %v3957 = vlaneseq
        %v3958 = vshrl.u32 %v3957, 7
        %v3959 = vsub.s32 0, %v3958
        %v3960 = vrot.slane %v3920, %v3959
        %v3961 = vlaneseq
        %v3962 = vshrl.u32 %v3961, 7
        %v3963 = vsub.s32 0, %v3962
        %v3964 = vrot.slane %v3922, %v3963
        %v3965 = vlaneseq
        %v3966 = vshrl.u32 %v3965, 7
        %v3967 = vsub.s32 0, %v3966
        %v3968 = vrot.slane %v3924, %v3967
        %v3969 = vlaneseq
        %v3970 = vshrl.u32 %v3969, 7
        %v3971 = vsub.s32 0, %v3970
        %v3972 = vrot.slane %v3926, %v3971
        %v3973 = vlaneseq
        %v3974 = vshrl.u32 %v3973, 7
        %v3975 = vsub.s32 0, %v3974
        %v3976 = vrot.slane %v3928, %v3975
        %v3977 = vlaneseq
        %v3978 = vshrl.u32 %v3977, 7
        %v3979 = vsub.s32 0, %v3978
        %v3980 = vrot.slane %v3930, %v3979
        %v3981 = vlaneseq
        %v3982 = vshrl.u32 %v3981, 7
        %v3983 = vsub.s32 0, %v3982
        %v3984 = vrot.slane %v3932, %v3983
        %v3985 = vlaneseq
        %v3986 = vshrl.u32 %v3985, 7
        %v3987 = vsub.s32 0, %v3986
        %v3988 = vrot.slane %v3934, %v3987
        %v3989 = vlaneseq
        %v3990 = vshrl.u32 %v3989, 7
        %v3991 = vsub.s32 0, %v3990
        %v3992 = vrot.slane %v3936, %v3991
        %v3993 = vlaneseq
        %v3994 = vshrl.u32 %v3993, 7
        %v3995 = vsub.s32 0, %v3994
        %v3996 = vrot.slane %v3938, %v3995
        %v3997 = vlaneseq
        %v3998 = vshrl.u32 %v3997, 7
        %v3999 = vsub.s32 0, %v3998
        %v4000 = vrot.slane %v3940, %v3999
        %v4001 = vlaneseq
        %v4002 = vshrl.u32 %v4001, 7
        %v4003 = vsub.s32 0, %v4002
        %v4004 = vrot.slane %v3942, %v4003
        %v4005 = vlaneseq
        %v4006 = vshrl.u32 %v4005, 7
        %v4007 = vsub.s32 0, %v4006
        %v4008 = vrot.slane %v3944, %v4007
        %v4009 = vlaneseq
        %v4010 = vshrl.u32 %v4009, 7
        %v4011 = vsub.s32 0, %v4010
        %v4012 = vrot.slane %v3946, %v4011
        %v4013 = vlaneseq
        %v4014 = vshrl.u32 %v4013, 7
        %v4015 = vsub.s32 0, %v4014
        %v4016 = vrot.slane %v3948, %v4015
        %v4017 = vmul.f32 %v3951, %v3956
        %v4018 = vmul.f32 %v3951, %v3960
        %v4019 = vmul.f32 %v3951, %v3964
        %v4020 = vmul.f32 %v3951, %v3968
        %v4021 = vmul.f32 %v3951, %v3972
        %v4022 = vmul.f32 %v3951, %v3976
        %v4023 = vmul.f32 %v3951, %v3980
        %v4024 = vmul.f32 %v3951, %v3984
        %v4025 = vmul.f32 %v3951, %v3988
        %v4026 = vmul.f32 %v3951, %v3992
        %v4027 = vmul.f32 %v3951, %v3996
        %v4028 = vmul.f32 %v3951, %v4000
        %v4029 = vmul.f32 %v3951, %v4004
        %v4030 = vmul.f32 %v3951, %v4008
        %v4031 = vmul.f32 %v3951, %v4012
        %v4032 = vmul.f32 %v3951, %v4016
        %4033 = vset.pattern.permute.xlu0 10
        %4034 = vperm.xlu0 %4033, %v705
        %v4035 = vpop.permute.xlu0 %4034
        %v4037 = vadd.f32 %v4035, %v4017
        %v4038 = vadd.f32 %v4035, %v4018
        %v4039 = vadd.f32 %v4035, %v4019
        %v4040 = vadd.f32 %v4035, %v4020
        %v4041 = vadd.f32 %v4035, %v4021
        %v4042 = vadd.f32 %v4035, %v4022
        %v4043 = vadd.f32 %v4035, %v4023
        %v4044 = vadd.f32 %v4035, %v4024
        %v4045 = vadd.f32 %v4035, %v4025
        %v4046 = vadd.f32 %v4035, %v4026
        %v4047 = vadd.f32 %v4035, %v4027
        %v4048 = vadd.f32 %v4035, %v4028
        %v4049 = vadd.f32 %v4035, %v4029
        %v4050 = vadd.f32 %v4035, %v4030
        %v4051 = vadd.f32 %v4035, %v4031
        %v4052 = vadd.f32 %v4035, %v4032
        %4053 = vset.pattern.permute.xlu0 7
        %4054 = vperm.xlu0 %4053, %v705
        %v4055 = vpop.permute.xlu0 %4054
        %v4057 = vlaneseq
        %v4058 = vshrl.u32 %v4057, 7
        %v4059 = vsub.s32 1, %v4058
        %v4060 = vrot.slane %v3918, %v4059
        %v4061 = vlaneseq
        %v4062 = vshrl.u32 %v4061, 7
        %v4063 = vsub.s32 1, %v4062
        %v4064 = vrot.slane %v3920, %v4063
        %v4065 = vlaneseq
        %v4066 = vshrl.u32 %v4065, 7
        %v4067 = vsub.s32 1, %v4066
        %v4068 = vrot.slane %v3922, %v4067
        %v4069 = vlaneseq
        %v4070 = vshrl.u32 %v4069, 7
        %v4071 = vsub.s32 1, %v4070
        %v4072 = vrot.slane %v3924, %v4071
        %v4073 = vlaneseq
        %v4074 = vshrl.u32 %v4073, 7
        %v4075 = vsub.s32 1, %v4074
        %v4076 = vrot.slane %v3926, %v4075
        %v4077 = vlaneseq
        %v4078 = vshrl.u32 %v4077, 7
        %v4079 = vsub.s32 1, %v4078
        %v4080 = vrot.slane %v3928, %v4079
        %v4081 = vlaneseq
        %v4082 = vshrl.u32 %v4081, 7
        %v4083 = vsub.s32 1, %v4082
        %v4084 = vrot.slane %v3930, %v4083
        %v4085 = vlaneseq
        %v4086 = vshrl.u32 %v4085, 7
        %v4087 = vsub.s32 1, %v4086
        %v4088 = vrot.slane %v3932, %v4087
        %v4089 = vlaneseq
        %v4090 = vshrl.u32 %v4089, 7
        %v4091 = vsub.s32 1, %v4090
        %v4092 = vrot.slane %v3934, %v4091
        %v4093 = vlaneseq
        %v4094 = vshrl.u32 %v4093, 7
        %v4095 = vsub.s32 1, %v4094
        %v4096 = vrot.slane %v3936, %v4095
        %v4097 = vlaneseq
        %v4098 = vshrl.u32 %v4097, 7
        %v4099 = vsub.s32 1, %v4098
        %v4100 = vrot.slane %v3938, %v4099
        %v4101 = vlaneseq
        %v4102 = vshrl.u32 %v4101, 7
        %v4103 = vsub.s32 1, %v4102
        %v4104 = vrot.slane %v3940, %v4103
        %v4105 = vlaneseq
        %v4106 = vshrl.u32 %v4105, 7
        %v4107 = vsub.s32 1, %v4106
        %v4108 = vrot.slane %v3942, %v4107
        %v4109 = vlaneseq
        %v4110 = vshrl.u32 %v4109, 7
        %v4111 = vsub.s32 1, %v4110
        %v4112 = vrot.slane %v3944, %v4111
        %v4113 = vlaneseq
        %v4114 = vshrl.u32 %v4113, 7
        %v4115 = vsub.s32 1, %v4114
        %v4116 = vrot.slane %v3946, %v4115
        %v4117 = vlaneseq
        %v4118 = vshrl.u32 %v4117, 7
        %v4119 = vsub.s32 1, %v4118
        %v4120 = vrot.slane %v3948, %v4119
        %v4121 = vmul.f32 %v4055, %v4060
        %v4122 = vmul.f32 %v4055, %v4064
        %v4123 = vmul.f32 %v4055, %v4068
        %v4124 = vmul.f32 %v4055, %v4072
        %v4125 = vmul.f32 %v4055, %v4076
        %v4126 = vmul.f32 %v4055, %v4080
        %v4127 = vmul.f32 %v4055, %v4084
        %v4128 = vmul.f32 %v4055, %v4088
        %v4129 = vmul.f32 %v4055, %v4092
        %v4130 = vmul.f32 %v4055, %v4096
        %v4131 = vmul.f32 %v4055, %v4100
        %v4132 = vmul.f32 %v4055, %v4104
        %v4133 = vmul.f32 %v4055, %v4108
        %v4134 = vmul.f32 %v4055, %v4112
        %v4135 = vmul.f32 %v4055, %v4116
        %v4136 = vmul.f32 %v4055, %v4120
        %v4137 = vadd.f32 %v4037, %v4121
        %v4138 = vadd.f32 %v4038, %v4122
        %v4139 = vadd.f32 %v4039, %v4123
        %v4140 = vadd.f32 %v4040, %v4124
        %v4141 = vadd.f32 %v4041, %v4125
        %v4142 = vadd.f32 %v4042, %v4126
        %v4143 = vadd.f32 %v4043, %v4127
        %v4144 = vadd.f32 %v4044, %v4128
        %v4145 = vadd.f32 %v4045, %v4129
        %v4146 = vadd.f32 %v4046, %v4130
        %v4147 = vadd.f32 %v4047, %v4131
        %v4148 = vadd.f32 %v4048, %v4132
        %v4149 = vadd.f32 %v4049, %v4133
        %v4150 = vadd.f32 %v4050, %v4134
        %v4151 = vadd.f32 %v4051, %v4135
        %v4152 = vadd.f32 %v4052, %v4136
        %4153 = vset.pattern.permute.xlu0 8
        %4154 = vperm.xlu0 %4153, %v705
        %v4155 = vpop.permute.xlu0 %4154
        %v4157 = vlaneseq
        %v4158 = vshrl.u32 %v4157, 7
        %v4159 = vsub.s32 2, %v4158
        %v4160 = vrot.slane %v3918, %v4159
        %v4161 = vlaneseq
        %v4162 = vshrl.u32 %v4161, 7
        %v4163 = vsub.s32 2, %v4162
        %v4164 = vrot.slane %v3920, %v4163
        %v4165 = vlaneseq
        %v4166 = vshrl.u32 %v4165, 7
        %v4167 = vsub.s32 2, %v4166
        %v4168 = vrot.slane %v3922, %v4167
        %v4169 = vlaneseq
        %v4170 = vshrl.u32 %v4169, 7
        %v4171 = vsub.s32 2, %v4170
        %v4172 = vrot.slane %v3924, %v4171
        %v4173 = vlaneseq
        %v4174 = vshrl.u32 %v4173, 7
        %v4175 = vsub.s32 2, %v4174
        %v4176 = vrot.slane %v3926, %v4175
        %v4177 = vlaneseq
        %v4178 = vshrl.u32 %v4177, 7
        %v4179 = vsub.s32 2, %v4178
        %v4180 = vrot.slane %v3928, %v4179
        %v4181 = vlaneseq
        %v4182 = vshrl.u32 %v4181, 7
        %v4183 = vsub.s32 2, %v4182
        %v4184 = vrot.slane %v3930, %v4183
        %v4185 = vlaneseq
        %v4186 = vshrl.u32 %v4185, 7
        %v4187 = vsub.s32 2, %v4186
        %v4188 = vrot.slane %v3932, %v4187
        %v4189 = vlaneseq
        %v4190 = vshrl.u32 %v4189, 7
        %v4191 = vsub.s32 2, %v4190
        %v4192 = vrot.slane %v3934, %v4191
        %v4193 = vlaneseq
        %v4194 = vshrl.u32 %v4193, 7
        %v4195 = vsub.s32 2, %v4194
        %v4196 = vrot.slane %v3936, %v4195
        %v4197 = vlaneseq
        %v4198 = vshrl.u32 %v4197, 7
        %v4199 = vsub.s32 2, %v4198
        %v4200 = vrot.slane %v3938, %v4199
        %v4201 = vlaneseq
        %v4202 = vshrl.u32 %v4201, 7
        %v4203 = vsub.s32 2, %v4202
        %v4204 = vrot.slane %v3940, %v4203
        %v4205 = vlaneseq
        %v4206 = vshrl.u32 %v4205, 7
        %v4207 = vsub.s32 2, %v4206
        %v4208 = vrot.slane %v3942, %v4207
        %v4209 = vlaneseq
        %v4210 = vshrl.u32 %v4209, 7
        %v4211 = vsub.s32 2, %v4210
        %v4212 = vrot.slane %v3944, %v4211
        %v4213 = vlaneseq
        %v4214 = vshrl.u32 %v4213, 7
        %v4215 = vsub.s32 2, %v4214
        %v4216 = vrot.slane %v3946, %v4215
        %v4217 = vlaneseq
        %v4218 = vshrl.u32 %v4217, 7
        %v4219 = vsub.s32 2, %v4218
        %v4220 = vrot.slane %v3948, %v4219
        %v4221 = vmul.f32 %v4155, %v4160
        %v4222 = vmul.f32 %v4155, %v4164
        %v4223 = vmul.f32 %v4155, %v4168
        %v4224 = vmul.f32 %v4155, %v4172
        %v4225 = vmul.f32 %v4155, %v4176
        %v4226 = vmul.f32 %v4155, %v4180
        %v4227 = vmul.f32 %v4155, %v4184
        %v4228 = vmul.f32 %v4155, %v4188
        %v4229 = vmul.f32 %v4155, %v4192
        %v4230 = vmul.f32 %v4155, %v4196
        %v4231 = vmul.f32 %v4155, %v4200
        %v4232 = vmul.f32 %v4155, %v4204
        %v4233 = vmul.f32 %v4155, %v4208
        %v4234 = vmul.f32 %v4155, %v4212
        %v4235 = vmul.f32 %v4155, %v4216
        %v4236 = vmul.f32 %v4155, %v4220
        %v4237 = vadd.f32 %v4137, %v4221
        %v4238 = vadd.f32 %v4138, %v4222
        %v4239 = vadd.f32 %v4139, %v4223
        %v4240 = vadd.f32 %v4140, %v4224
        %v4241 = vadd.f32 %v4141, %v4225
        %v4242 = vadd.f32 %v4142, %v4226
        %v4243 = vadd.f32 %v4143, %v4227
        %v4244 = vadd.f32 %v4144, %v4228
        %v4245 = vadd.f32 %v4145, %v4229
        %v4246 = vadd.f32 %v4146, %v4230
        %v4247 = vadd.f32 %v4147, %v4231
        %v4248 = vadd.f32 %v4148, %v4232
        %v4249 = vadd.f32 %v4149, %v4233
        %v4250 = vadd.f32 %v4150, %v4234
        %v4251 = vadd.f32 %v4151, %v4235
        %v4252 = vadd.f32 %v4152, %v4236
        %4253 = vset.pattern.permute.xlu0 9
        %4254 = vperm.xlu0 %4253, %v705
        %v4255 = vpop.permute.xlu0 %4254
        %v4257 = vlaneseq
        %v4258 = vshrl.u32 %v4257, 7
        %v4259 = vsub.s32 3, %v4258
        %v4260 = vrot.slane %v3918, %v4259
        %v4261 = vlaneseq
        %v4262 = vshrl.u32 %v4261, 7
        %v4263 = vsub.s32 3, %v4262
        %v4264 = vrot.slane %v3920, %v4263
        %v4265 = vlaneseq
        %v4266 = vshrl.u32 %v4265, 7
        %v4267 = vsub.s32 3, %v4266
        %v4268 = vrot.slane %v3922, %v4267
        %v4269 = vlaneseq
        %v4270 = vshrl.u32 %v4269, 7
        %v4271 = vsub.s32 3, %v4270
        %v4272 = vrot.slane %v3924, %v4271
        %v4273 = vlaneseq
        %v4274 = vshrl.u32 %v4273, 7
        %v4275 = vsub.s32 3, %v4274
        %v4276 = vrot.slane %v3926, %v4275
        %v4277 = vlaneseq
        %v4278 = vshrl.u32 %v4277, 7
        %v4279 = vsub.s32 3, %v4278
        %v4280 = vrot.slane %v3928, %v4279
        %v4281 = vlaneseq
        %v4282 = vshrl.u32 %v4281, 7
        %v4283 = vsub.s32 3, %v4282
        %v4284 = vrot.slane %v3930, %v4283
        %v4285 = vlaneseq
        %v4286 = vshrl.u32 %v4285, 7
        %v4287 = vsub.s32 3, %v4286
        %v4288 = vrot.slane %v3932, %v4287
        %v4289 = vlaneseq
        %v4290 = vshrl.u32 %v4289, 7
        %v4291 = vsub.s32 3, %v4290
        %v4292 = vrot.slane %v3934, %v4291
        %v4293 = vlaneseq
        %v4294 = vshrl.u32 %v4293, 7
        %v4295 = vsub.s32 3, %v4294
        %v4296 = vrot.slane %v3936, %v4295
        %v4297 = vlaneseq
        %v4298 = vshrl.u32 %v4297, 7
        %v4299 = vsub.s32 3, %v4298
        %v4300 = vrot.slane %v3938, %v4299
        %v4301 = vlaneseq
        %v4302 = vshrl.u32 %v4301, 7
        %v4303 = vsub.s32 3, %v4302
        %v4304 = vrot.slane %v3940, %v4303
        %v4305 = vlaneseq
        %v4306 = vshrl.u32 %v4305, 7
        %v4307 = vsub.s32 3, %v4306
        %v4308 = vrot.slane %v3942, %v4307
        %v4309 = vlaneseq
        %v4310 = vshrl.u32 %v4309, 7
        %v4311 = vsub.s32 3, %v4310
        %v4312 = vrot.slane %v3944, %v4311
        %v4313 = vlaneseq
        %v4314 = vshrl.u32 %v4313, 7
        %v4315 = vsub.s32 3, %v4314
        %v4316 = vrot.slane %v3946, %v4315
        %v4317 = vlaneseq
        %v4318 = vshrl.u32 %v4317, 7
        %v4319 = vsub.s32 3, %v4318
        %v4320 = vrot.slane %v3948, %v4319
        %v4321 = vmul.f32 %v4255, %v4260
        %v4322 = vmul.f32 %v4255, %v4264
        %v4323 = vmul.f32 %v4255, %v4268
        %v4324 = vmul.f32 %v4255, %v4272
        %v4325 = vmul.f32 %v4255, %v4276
        %v4326 = vmul.f32 %v4255, %v4280
        %v4327 = vmul.f32 %v4255, %v4284
        %v4328 = vmul.f32 %v4255, %v4288
        %v4329 = vmul.f32 %v4255, %v4292
        %v4330 = vmul.f32 %v4255, %v4296
        %v4331 = vmul.f32 %v4255, %v4300
        %v4332 = vmul.f32 %v4255, %v4304
        %v4333 = vmul.f32 %v4255, %v4308
        %v4334 = vmul.f32 %v4255, %v4312
        %v4335 = vmul.f32 %v4255, %v4316
        %v4336 = vmul.f32 %v4255, %v4320
        %v4337 = vadd.f32 %v4237, %v4321
        %v4338 = vadd.f32 %v4238, %v4322
        %v4339 = vadd.f32 %v4239, %v4323
        %v4340 = vadd.f32 %v4240, %v4324
        %v4341 = vadd.f32 %v4241, %v4325
        %v4342 = vadd.f32 %v4242, %v4326
        %v4343 = vadd.f32 %v4243, %v4327
        %v4344 = vadd.f32 %v4244, %v4328
        %v4345 = vadd.f32 %v4245, %v4329
        %v4346 = vadd.f32 %v4246, %v4330
        %v4347 = vadd.f32 %v4247, %v4331
        %v4348 = vadd.f32 %v4248, %v4332
        %v4349 = vadd.f32 %v4249, %v4333
        %v4350 = vadd.f32 %v4250, %v4334
        %v4351 = vadd.f32 %v4251, %v4335
        %v4352 = vadd.f32 %v4252, %v4336
        %v4353 = vxor.u32 %v4337, 2147483648
        %v4354 = vxor.u32 %v4338, 2147483648
        %v4355 = vxor.u32 %v4339, 2147483648
        %v4356 = vxor.u32 %v4340, 2147483648
        %v4357 = vxor.u32 %v4341, 2147483648
        %v4358 = vxor.u32 %v4342, 2147483648
        %v4359 = vxor.u32 %v4343, 2147483648
        %v4360 = vxor.u32 %v4344, 2147483648
        %v4361 = vxor.u32 %v4345, 2147483648
        %v4362 = vxor.u32 %v4346, 2147483648
        %v4363 = vxor.u32 %v4347, 2147483648
        %v4364 = vxor.u32 %v4348, 2147483648
        %v4365 = vxor.u32 %v4349, 2147483648
        %v4366 = vxor.u32 %v4350, 2147483648
        %v4367 = vxor.u32 %v4351, 2147483648
        %v4368 = vxor.u32 %v4352, 2147483648
        %v4369 = vmul.f32 %v4353, 1.442695
        %v4370 = vpow.pop %v4369
        %v4371 = vmul.f32 %v4354, 1.442695
        %v4372 = vpow.pop %v4371
        %v4373 = vmul.f32 %v4355, 1.442695
        %v4374 = vpow.pop %v4373
        %v4375 = vmul.f32 %v4356, 1.442695
        %v4376 = vpow.pop %v4375
        %v4377 = vmul.f32 %v4357, 1.442695
        %v4378 = vpow.pop %v4377
        %v4379 = vmul.f32 %v4358, 1.442695
        %v4380 = vpow.pop %v4379
        %v4381 = vmul.f32 %v4359, 1.442695
        %v4382 = vpow.pop %v4381
        %v4383 = vmul.f32 %v4360, 1.442695
        %v4384 = vpow.pop %v4383
        %v4385 = vmul.f32 %v4361, 1.442695
        %v4386 = vpow.pop %v4385
        %v4387 = vmul.f32 %v4362, 1.442695
        %v4388 = vpow.pop %v4387
        %v4389 = vmul.f32 %v4363, 1.442695
        %v4390 = vpow.pop %v4389
        %v4391 = vmul.f32 %v4364, 1.442695
        %v4392 = vpow.pop %v4391
        %v4393 = vmul.f32 %v4365, 1.442695
        %v4394 = vpow.pop %v4393
        %v4395 = vmul.f32 %v4366, 1.442695
        %v4396 = vpow.pop %v4395
        %v4397 = vmul.f32 %v4367, 1.442695
        %v4398 = vpow.pop %v4397
        %v4399 = vmul.f32 %v4368, 1.442695
        %v4400 = vpow.pop %v4399
        %v4401 = vadd.f32 %v4370, 1.0
        %v4402 = vadd.f32 %v4372, 1.0
        %v4403 = vadd.f32 %v4374, 1.0
        %v4404 = vadd.f32 %v4376, 1.0
        %v4405 = vadd.f32 %v4378, 1.0
        %v4406 = vadd.f32 %v4380, 1.0
        %v4407 = vadd.f32 %v4382, 1.0
        %v4408 = vadd.f32 %v4384, 1.0
        %v4409 = vadd.f32 %v4386, 1.0
        %v4410 = vadd.f32 %v4388, 1.0
        %v4411 = vadd.f32 %v4390, 1.0
        %v4412 = vadd.f32 %v4392, 1.0
        %v4413 = vadd.f32 %v4394, 1.0
        %v4414 = vadd.f32 %v4396, 1.0
        %v4415 = vadd.f32 %v4398, 1.0
        %v4416 = vadd.f32 %v4400, 1.0
        %v4417 = vrcp.pop %v4401
        %v4418 = vmul.f32 1.0, %v4417
        %v4419 = vrcp.pop %v4402
        %v4420 = vmul.f32 1.0, %v4419
        %v4421 = vrcp.pop %v4403
        %v4422 = vmul.f32 1.0, %v4421
        %v4423 = vrcp.pop %v4404
        %v4424 = vmul.f32 1.0, %v4423
        %v4425 = vrcp.pop %v4405
        %v4426 = vmul.f32 1.0, %v4425
        %v4427 = vrcp.pop %v4406
        %v4428 = vmul.f32 1.0, %v4427
        %v4429 = vrcp.pop %v4407
        %v4430 = vmul.f32 1.0, %v4429
        %v4431 = vrcp.pop %v4408
        %v4432 = vmul.f32 1.0, %v4431
        %v4433 = vrcp.pop %v4409
        %v4434 = vmul.f32 1.0, %v4433
        %v4435 = vrcp.pop %v4410
        %v4436 = vmul.f32 1.0, %v4435
        %v4437 = vrcp.pop %v4411
        %v4438 = vmul.f32 1.0, %v4437
        %v4439 = vrcp.pop %v4412
        %v4440 = vmul.f32 1.0, %v4439
        %v4441 = vrcp.pop %v4413
        %v4442 = vmul.f32 1.0, %v4441
        %v4443 = vrcp.pop %v4414
        %v4444 = vmul.f32 1.0, %v4443
        %v4445 = vrcp.pop %v4415
        %v4446 = vmul.f32 1.0, %v4445
        %v4447 = vrcp.pop %v4416
        %v4448 = vmul.f32 1.0, %v4447
        %4449 = vset.pattern.permute.xlu0 11
        %4450 = vperm.xlu0 %4449, %v705
        %v4451 = vpop.permute.xlu0 %4450
        %v4453 = vlaneseq
        %v4454 = vshrl.u32 %v4453, 7
        %v4455 = vsub.s32 0, %v4454
        %v4456 = vrot.slane %v4418, %v4455
        %v4457 = vlaneseq
        %v4458 = vshrl.u32 %v4457, 7
        %v4459 = vsub.s32 0, %v4458
        %v4460 = vrot.slane %v4420, %v4459
        %v4461 = vlaneseq
        %v4462 = vshrl.u32 %v4461, 7
        %v4463 = vsub.s32 0, %v4462
        %v4464 = vrot.slane %v4422, %v4463
        %v4465 = vlaneseq
        %v4466 = vshrl.u32 %v4465, 7
        %v4467 = vsub.s32 0, %v4466
        %v4468 = vrot.slane %v4424, %v4467
        %v4469 = vlaneseq
        %v4470 = vshrl.u32 %v4469, 7
        %v4471 = vsub.s32 0, %v4470
        %v4472 = vrot.slane %v4426, %v4471
        %v4473 = vlaneseq
        %v4474 = vshrl.u32 %v4473, 7
        %v4475 = vsub.s32 0, %v4474
        %v4476 = vrot.slane %v4428, %v4475
        %v4477 = vlaneseq
        %v4478 = vshrl.u32 %v4477, 7
        %v4479 = vsub.s32 0, %v4478
        %v4480 = vrot.slane %v4430, %v4479
        %v4481 = vlaneseq
        %v4482 = vshrl.u32 %v4481, 7
        %v4483 = vsub.s32 0, %v4482
        %v4484 = vrot.slane %v4432, %v4483
        %v4485 = vlaneseq
        %v4486 = vshrl.u32 %v4485, 7
        %v4487 = vsub.s32 0, %v4486
        %v4488 = vrot.slane %v4434, %v4487
        %v4489 = vlaneseq
        %v4490 = vshrl.u32 %v4489, 7
        %v4491 = vsub.s32 0, %v4490
        %v4492 = vrot.slane %v4436, %v4491
        %v4493 = vlaneseq
        %v4494 = vshrl.u32 %v4493, 7
        %v4495 = vsub.s32 0, %v4494
        %v4496 = vrot.slane %v4438, %v4495
        %v4497 = vlaneseq
        %v4498 = vshrl.u32 %v4497, 7
        %v4499 = vsub.s32 0, %v4498
        %v4500 = vrot.slane %v4440, %v4499
        %v4501 = vlaneseq
        %v4502 = vshrl.u32 %v4501, 7
        %v4503 = vsub.s32 0, %v4502
        %v4504 = vrot.slane %v4442, %v4503
        %v4505 = vlaneseq
        %v4506 = vshrl.u32 %v4505, 7
        %v4507 = vsub.s32 0, %v4506
        %v4508 = vrot.slane %v4444, %v4507
        %v4509 = vlaneseq
        %v4510 = vshrl.u32 %v4509, 7
        %v4511 = vsub.s32 0, %v4510
        %v4512 = vrot.slane %v4446, %v4511
        %v4513 = vlaneseq
        %v4514 = vshrl.u32 %v4513, 7
        %v4515 = vsub.s32 0, %v4514
        %v4516 = vrot.slane %v4448, %v4515
        %v4517 = vmul.f32 %v4451, %v4456
        %v4518 = vmul.f32 %v4451, %v4460
        %v4519 = vmul.f32 %v4451, %v4464
        %v4520 = vmul.f32 %v4451, %v4468
        %v4521 = vmul.f32 %v4451, %v4472
        %v4522 = vmul.f32 %v4451, %v4476
        %v4523 = vmul.f32 %v4451, %v4480
        %v4524 = vmul.f32 %v4451, %v4484
        %v4525 = vmul.f32 %v4451, %v4488
        %v4526 = vmul.f32 %v4451, %v4492
        %v4527 = vmul.f32 %v4451, %v4496
        %v4528 = vmul.f32 %v4451, %v4500
        %v4529 = vmul.f32 %v4451, %v4504
        %v4530 = vmul.f32 %v4451, %v4508
        %v4531 = vmul.f32 %v4451, %v4512
        %v4532 = vmul.f32 %v4451, %v4516
        %4533 = vset.pattern.permute.xlu0 15
        %4534 = vperm.xlu0 %4533, %v705
        %v4535 = vpop.permute.xlu0 %4534
        %v4537 = vadd.f32 %v4535, %v4517
        %v4538 = vadd.f32 %v4535, %v4518
        %v4539 = vadd.f32 %v4535, %v4519
        %v4540 = vadd.f32 %v4535, %v4520
        %v4541 = vadd.f32 %v4535, %v4521
        %v4542 = vadd.f32 %v4535, %v4522
        %v4543 = vadd.f32 %v4535, %v4523
        %v4544 = vadd.f32 %v4535, %v4524
        %v4545 = vadd.f32 %v4535, %v4525
        %v4546 = vadd.f32 %v4535, %v4526
        %v4547 = vadd.f32 %v4535, %v4527
        %v4548 = vadd.f32 %v4535, %v4528
        %v4549 = vadd.f32 %v4535, %v4529
        %v4550 = vadd.f32 %v4535, %v4530
        %v4551 = vadd.f32 %v4535, %v4531
        %v4552 = vadd.f32 %v4535, %v4532
        %4553 = vset.pattern.permute.xlu0 12
        %4554 = vperm.xlu0 %4553, %v705
        %v4555 = vpop.permute.xlu0 %4554
        %v4557 = vlaneseq
        %v4558 = vshrl.u32 %v4557, 7
        %v4559 = vsub.s32 1, %v4558
        %v4560 = vrot.slane %v4418, %v4559
        %v4561 = vlaneseq
        %v4562 = vshrl.u32 %v4561, 7
        %v4563 = vsub.s32 1, %v4562
        %v4564 = vrot.slane %v4420, %v4563
        %v4565 = vlaneseq
        %v4566 = vshrl.u32 %v4565, 7
        %v4567 = vsub.s32 1, %v4566
        %v4568 = vrot.slane %v4422, %v4567
        %v4569 = vlaneseq
        %v4570 = vshrl.u32 %v4569, 7
        %v4571 = vsub.s32 1, %v4570
        %v4572 = vrot.slane %v4424, %v4571
        %v4573 = vlaneseq
        %v4574 = vshrl.u32 %v4573, 7
        %v4575 = vsub.s32 1, %v4574
        %v4576 = vrot.slane %v4426, %v4575
        %v4577 = vlaneseq
        %v4578 = vshrl.u32 %v4577, 7
        %v4579 = vsub.s32 1, %v4578
        %v4580 = vrot.slane %v4428, %v4579
        %v4581 = vlaneseq
        %v4582 = vshrl.u32 %v4581, 7
        %v4583 = vsub.s32 1, %v4582
        %v4584 = vrot.slane %v4430, %v4583
        %v4585 = vlaneseq
        %v4586 = vshrl.u32 %v4585, 7
        %v4587 = vsub.s32 1, %v4586
        %v4588 = vrot.slane %v4432, %v4587
        %v4589 = vlaneseq
        %v4590 = vshrl.u32 %v4589, 7
        %v4591 = vsub.s32 1, %v4590
        %v4592 = vrot.slane %v4434, %v4591
        %v4593 = vlaneseq
        %v4594 = vshrl.u32 %v4593, 7
        %v4595 = vsub.s32 1, %v4594
        %v4596 = vrot.slane %v4436, %v4595
        %v4597 = vlaneseq
        %v4598 = vshrl.u32 %v4597, 7
        %v4599 = vsub.s32 1, %v4598
        %v4600 = vrot.slane %v4438, %v4599
        %v4601 = vlaneseq
        %v4602 = vshrl.u32 %v4601, 7
        %v4603 = vsub.s32 1, %v4602
        %v4604 = vrot.slane %v4440, %v4603
        %v4605 = vlaneseq
        %v4606 = vshrl.u32 %v4605, 7
        %v4607 = vsub.s32 1, %v4606
        %v4608 = vrot.slane %v4442, %v4607
        %v4609 = vlaneseq
        %v4610 = vshrl.u32 %v4609, 7
        %v4611 = vsub.s32 1, %v4610
        %v4612 = vrot.slane %v4444, %v4611
        %v4613 = vlaneseq
        %v4614 = vshrl.u32 %v4613, 7
        %v4615 = vsub.s32 1, %v4614
        %v4616 = vrot.slane %v4446, %v4615
        %v4617 = vlaneseq
        %v4618 = vshrl.u32 %v4617, 7
        %v4619 = vsub.s32 1, %v4618
        %v4620 = vrot.slane %v4448, %v4619
        %v4621 = vmul.f32 %v4555, %v4560
        %v4622 = vmul.f32 %v4555, %v4564
        %v4623 = vmul.f32 %v4555, %v4568
        %v4624 = vmul.f32 %v4555, %v4572
        %v4625 = vmul.f32 %v4555, %v4576
        %v4626 = vmul.f32 %v4555, %v4580
        %v4627 = vmul.f32 %v4555, %v4584
        %v4628 = vmul.f32 %v4555, %v4588
        %v4629 = vmul.f32 %v4555, %v4592
        %v4630 = vmul.f32 %v4555, %v4596
        %v4631 = vmul.f32 %v4555, %v4600
        %v4632 = vmul.f32 %v4555, %v4604
        %v4633 = vmul.f32 %v4555, %v4608
        %v4634 = vmul.f32 %v4555, %v4612
        %v4635 = vmul.f32 %v4555, %v4616
        %v4636 = vmul.f32 %v4555, %v4620
        %v4637 = vadd.f32 %v4537, %v4621
        %v4638 = vadd.f32 %v4538, %v4622
        %v4639 = vadd.f32 %v4539, %v4623
        %v4640 = vadd.f32 %v4540, %v4624
        %v4641 = vadd.f32 %v4541, %v4625
        %v4642 = vadd.f32 %v4542, %v4626
        %v4643 = vadd.f32 %v4543, %v4627
        %v4644 = vadd.f32 %v4544, %v4628
        %v4645 = vadd.f32 %v4545, %v4629
        %v4646 = vadd.f32 %v4546, %v4630
        %v4647 = vadd.f32 %v4547, %v4631
        %v4648 = vadd.f32 %v4548, %v4632
        %v4649 = vadd.f32 %v4549, %v4633
        %v4650 = vadd.f32 %v4550, %v4634
        %v4651 = vadd.f32 %v4551, %v4635
        %v4652 = vadd.f32 %v4552, %v4636
        %4653 = vset.pattern.permute.xlu0 13
        %4654 = vperm.xlu0 %4653, %v705
        %v4655 = vpop.permute.xlu0 %4654
        %v4657 = vlaneseq
        %v4658 = vshrl.u32 %v4657, 7
        %v4659 = vsub.s32 2, %v4658
        %v4660 = vrot.slane %v4418, %v4659
        %v4661 = vlaneseq
        %v4662 = vshrl.u32 %v4661, 7
        %v4663 = vsub.s32 2, %v4662
        %v4664 = vrot.slane %v4420, %v4663
        %v4665 = vlaneseq
        %v4666 = vshrl.u32 %v4665, 7
        %v4667 = vsub.s32 2, %v4666
        %v4668 = vrot.slane %v4422, %v4667
        %v4669 = vlaneseq
        %v4670 = vshrl.u32 %v4669, 7
        %v4671 = vsub.s32 2, %v4670
        %v4672 = vrot.slane %v4424, %v4671
        %v4673 = vlaneseq
        %v4674 = vshrl.u32 %v4673, 7
        %v4675 = vsub.s32 2, %v4674
        %v4676 = vrot.slane %v4426, %v4675
        %v4677 = vlaneseq
        %v4678 = vshrl.u32 %v4677, 7
        %v4679 = vsub.s32 2, %v4678
        %v4680 = vrot.slane %v4428, %v4679
        %v4681 = vlaneseq
        %v4682 = vshrl.u32 %v4681, 7
        %v4683 = vsub.s32 2, %v4682
        %v4684 = vrot.slane %v4430, %v4683
        %v4685 = vlaneseq
        %v4686 = vshrl.u32 %v4685, 7
        %v4687 = vsub.s32 2, %v4686
        %v4688 = vrot.slane %v4432, %v4687
        %v4689 = vlaneseq
        %v4690 = vshrl.u32 %v4689, 7
        %v4691 = vsub.s32 2, %v4690
        %v4692 = vrot.slane %v4434, %v4691
        %v4693 = vlaneseq
        %v4694 = vshrl.u32 %v4693, 7
        %v4695 = vsub.s32 2, %v4694
        %v4696 = vrot.slane %v4436, %v4695
        %v4697 = vlaneseq
        %v4698 = vshrl.u32 %v4697, 7
        %v4699 = vsub.s32 2, %v4698
        %v4700 = vrot.slane %v4438, %v4699
        %v4701 = vlaneseq
        %v4702 = vshrl.u32 %v4701, 7
        %v4703 = vsub.s32 2, %v4702
        %v4704 = vrot.slane %v4440, %v4703
        %v4705 = vlaneseq
        %v4706 = vshrl.u32 %v4705, 7
        %v4707 = vsub.s32 2, %v4706
        %v4708 = vrot.slane %v4442, %v4707
        %v4709 = vlaneseq
        %v4710 = vshrl.u32 %v4709, 7
        %v4711 = vsub.s32 2, %v4710
        %v4712 = vrot.slane %v4444, %v4711
        %v4713 = vlaneseq
        %v4714 = vshrl.u32 %v4713, 7
        %v4715 = vsub.s32 2, %v4714
        %v4716 = vrot.slane %v4446, %v4715
        %v4717 = vlaneseq
        %v4718 = vshrl.u32 %v4717, 7
        %v4719 = vsub.s32 2, %v4718
        %v4720 = vrot.slane %v4448, %v4719
        %v4721 = vmul.f32 %v4655, %v4660
        %v4722 = vmul.f32 %v4655, %v4664
        %v4723 = vmul.f32 %v4655, %v4668
        %v4724 = vmul.f32 %v4655, %v4672
        %v4725 = vmul.f32 %v4655, %v4676
        %v4726 = vmul.f32 %v4655, %v4680
        %v4727 = vmul.f32 %v4655, %v4684
        %v4728 = vmul.f32 %v4655, %v4688
        %v4729 = vmul.f32 %v4655, %v4692
        %v4730 = vmul.f32 %v4655, %v4696
        %v4731 = vmul.f32 %v4655, %v4700
        %v4732 = vmul.f32 %v4655, %v4704
        %v4733 = vmul.f32 %v4655, %v4708
        %v4734 = vmul.f32 %v4655, %v4712
        %v4735 = vmul.f32 %v4655, %v4716
        %v4736 = vmul.f32 %v4655, %v4720
        %v4737 = vadd.f32 %v4637, %v4721
        %v4738 = vadd.f32 %v4638, %v4722
        %v4739 = vadd.f32 %v4639, %v4723
        %v4740 = vadd.f32 %v4640, %v4724
        %v4741 = vadd.f32 %v4641, %v4725
        %v4742 = vadd.f32 %v4642, %v4726
        %v4743 = vadd.f32 %v4643, %v4727
        %v4744 = vadd.f32 %v4644, %v4728
        %v4745 = vadd.f32 %v4645, %v4729
        %v4746 = vadd.f32 %v4646, %v4730
        %v4747 = vadd.f32 %v4647, %v4731
        %v4748 = vadd.f32 %v4648, %v4732
        %v4749 = vadd.f32 %v4649, %v4733
        %v4750 = vadd.f32 %v4650, %v4734
        %v4751 = vadd.f32 %v4651, %v4735
        %v4752 = vadd.f32 %v4652, %v4736
        %4753 = vset.pattern.permute.xlu0 14
        %4754 = vperm.xlu0 %4753, %v705
        %v4755 = vpop.permute.xlu0 %4754
        %v4757 = vlaneseq
        %v4758 = vshrl.u32 %v4757, 7
        %v4759 = vsub.s32 3, %v4758
        %v4760 = vrot.slane %v4418, %v4759
        %v4761 = vlaneseq
        %v4762 = vshrl.u32 %v4761, 7
        %v4763 = vsub.s32 3, %v4762
        %v4764 = vrot.slane %v4420, %v4763
        %v4765 = vlaneseq
        %v4766 = vshrl.u32 %v4765, 7
        %v4767 = vsub.s32 3, %v4766
        %v4768 = vrot.slane %v4422, %v4767
        %v4769 = vlaneseq
        %v4770 = vshrl.u32 %v4769, 7
        %v4771 = vsub.s32 3, %v4770
        %v4772 = vrot.slane %v4424, %v4771
        %v4773 = vlaneseq
        %v4774 = vshrl.u32 %v4773, 7
        %v4775 = vsub.s32 3, %v4774
        %v4776 = vrot.slane %v4426, %v4775
        %v4777 = vlaneseq
        %v4778 = vshrl.u32 %v4777, 7
        %v4779 = vsub.s32 3, %v4778
        %v4780 = vrot.slane %v4428, %v4779
        %v4781 = vlaneseq
        %v4782 = vshrl.u32 %v4781, 7
        %v4783 = vsub.s32 3, %v4782
        %v4784 = vrot.slane %v4430, %v4783
        %v4785 = vlaneseq
        %v4786 = vshrl.u32 %v4785, 7
        %v4787 = vsub.s32 3, %v4786
        %v4788 = vrot.slane %v4432, %v4787
        %v4789 = vlaneseq
        %v4790 = vshrl.u32 %v4789, 7
        %v4791 = vsub.s32 3, %v4790
        %v4792 = vrot.slane %v4434, %v4791
        %v4793 = vlaneseq
        %v4794 = vshrl.u32 %v4793, 7
        %v4795 = vsub.s32 3, %v4794
        %v4796 = vrot.slane %v4436, %v4795
        %v4797 = vlaneseq
        %v4798 = vshrl.u32 %v4797, 7
        %v4799 = vsub.s32 3, %v4798
        %v4800 = vrot.slane %v4438, %v4799
        %v4801 = vlaneseq
        %v4802 = vshrl.u32 %v4801, 7
        %v4803 = vsub.s32 3, %v4802
        %v4804 = vrot.slane %v4440, %v4803
        %v4805 = vlaneseq
        %v4806 = vshrl.u32 %v4805, 7
        %v4807 = vsub.s32 3, %v4806
        %v4808 = vrot.slane %v4442, %v4807
        %v4809 = vlaneseq
        %v4810 = vshrl.u32 %v4809, 7
        %v4811 = vsub.s32 3, %v4810
        %v4812 = vrot.slane %v4444, %v4811
        %v4813 = vlaneseq
        %v4814 = vshrl.u32 %v4813, 7
        %v4815 = vsub.s32 3, %v4814
        %v4816 = vrot.slane %v4446, %v4815
        %v4817 = vlaneseq
        %v4818 = vshrl.u32 %v4817, 7
        %v4819 = vsub.s32 3, %v4818
        %v4820 = vrot.slane %v4448, %v4819
        %v4821 = vmul.f32 %v4755, %v4760
        %v4822 = vmul.f32 %v4755, %v4764
        %v4823 = vmul.f32 %v4755, %v4768
        %v4824 = vmul.f32 %v4755, %v4772
        %v4825 = vmul.f32 %v4755, %v4776
        %v4826 = vmul.f32 %v4755, %v4780
        %v4827 = vmul.f32 %v4755, %v4784
        %v4828 = vmul.f32 %v4755, %v4788
        %v4829 = vmul.f32 %v4755, %v4792
        %v4830 = vmul.f32 %v4755, %v4796
        %v4831 = vmul.f32 %v4755, %v4800
        %v4832 = vmul.f32 %v4755, %v4804
        %v4833 = vmul.f32 %v4755, %v4808
        %v4834 = vmul.f32 %v4755, %v4812
        %v4835 = vmul.f32 %v4755, %v4816
        %v4836 = vmul.f32 %v4755, %v4820
        %v4837 = vadd.f32 %v4737, %v4821
        %v4838 = vadd.f32 %v4738, %v4822
        %v4839 = vadd.f32 %v4739, %v4823
        %v4840 = vadd.f32 %v4740, %v4824
        %v4841 = vadd.f32 %v4741, %v4825
        %v4842 = vadd.f32 %v4742, %v4826
        %v4843 = vadd.f32 %v4743, %v4827
        %v4844 = vadd.f32 %v4744, %v4828
        %v4845 = vadd.f32 %v4745, %v4829
        %v4846 = vadd.f32 %v4746, %v4830
        %v4847 = vadd.f32 %v4747, %v4831
        %v4848 = vadd.f32 %v4748, %v4832
        %v4849 = vadd.f32 %v4749, %v4833
        %v4850 = vadd.f32 %v4750, %v4834
        %v4851 = vadd.f32 %v4751, %v4835
        %v4852 = vadd.f32 %v4752, %v4836
        %vm4853 = vcmask 1043456
        %v4854 = vsel %vm4853, %v4837, -inf
        %v4855 = vrot.slane %v4854, 4
        %v4856 = vmax.f32 %v4854, %v4855
        %v4857 = vrot.slane %v4856, 2
        %v4858 = vmax.f32 %v4856, %v4857
        %v4859 = vrot.slane %v4858, 1
        %v4860 = vmax.f32 %v4858, %v4859
        %v4861 = vsel %vm4853, %v4838, -inf
        %v4862 = vrot.slane %v4861, 4
        %v4863 = vmax.f32 %v4861, %v4862
        %v4864 = vrot.slane %v4863, 2
        %v4865 = vmax.f32 %v4863, %v4864
        %v4866 = vrot.slane %v4865, 1
        %v4867 = vmax.f32 %v4865, %v4866
        %v4868 = vsel %vm4853, %v4839, -inf
        %v4869 = vrot.slane %v4868, 4
        %v4870 = vmax.f32 %v4868, %v4869
        %v4871 = vrot.slane %v4870, 2
        %v4872 = vmax.f32 %v4870, %v4871
        %v4873 = vrot.slane %v4872, 1
        %v4874 = vmax.f32 %v4872, %v4873
        %v4875 = vsel %vm4853, %v4840, -inf
        %v4876 = vrot.slane %v4875, 4
        %v4877 = vmax.f32 %v4875, %v4876
        %v4878 = vrot.slane %v4877, 2
        %v4879 = vmax.f32 %v4877, %v4878
        %v4880 = vrot.slane %v4879, 1
        %v4881 = vmax.f32 %v4879, %v4880
        %v4882 = vsel %vm4853, %v4841, -inf
        %v4883 = vrot.slane %v4882, 4
        %v4884 = vmax.f32 %v4882, %v4883
        %v4885 = vrot.slane %v4884, 2
        %v4886 = vmax.f32 %v4884, %v4885
        %v4887 = vrot.slane %v4886, 1
        %v4888 = vmax.f32 %v4886, %v4887
        %v4889 = vsel %vm4853, %v4842, -inf
        %v4890 = vrot.slane %v4889, 4
        %v4891 = vmax.f32 %v4889, %v4890
        %v4892 = vrot.slane %v4891, 2
        %v4893 = vmax.f32 %v4891, %v4892
        %v4894 = vrot.slane %v4893, 1
        %v4895 = vmax.f32 %v4893, %v4894
        %v4896 = vsel %vm4853, %v4843, -inf
        %v4897 = vrot.slane %v4896, 4
        %v4898 = vmax.f32 %v4896, %v4897
        %v4899 = vrot.slane %v4898, 2
        %v4900 = vmax.f32 %v4898, %v4899
        %v4901 = vrot.slane %v4900, 1
        %v4902 = vmax.f32 %v4900, %v4901
        %v4903 = vsel %vm4853, %v4844, -inf
        %v4904 = vrot.slane %v4903, 4
        %v4905 = vmax.f32 %v4903, %v4904
        %v4906 = vrot.slane %v4905, 2
        %v4907 = vmax.f32 %v4905, %v4906
        %v4908 = vrot.slane %v4907, 1
        %v4909 = vmax.f32 %v4907, %v4908
        %v4910 = vsel %vm4853, %v4845, -inf
        %v4911 = vrot.slane %v4910, 4
        %v4912 = vmax.f32 %v4910, %v4911
        %v4913 = vrot.slane %v4912, 2
        %v4914 = vmax.f32 %v4912, %v4913
        %v4915 = vrot.slane %v4914, 1
        %v4916 = vmax.f32 %v4914, %v4915
        %v4917 = vsel %vm4853, %v4846, -inf
        %v4918 = vrot.slane %v4917, 4
        %v4919 = vmax.f32 %v4917, %v4918
        %v4920 = vrot.slane %v4919, 2
        %v4921 = vmax.f32 %v4919, %v4920
        %v4922 = vrot.slane %v4921, 1
        %v4923 = vmax.f32 %v4921, %v4922
        %v4924 = vsel %vm4853, %v4847, -inf
        %v4925 = vrot.slane %v4924, 4
        %v4926 = vmax.f32 %v4924, %v4925
        %v4927 = vrot.slane %v4926, 2
        %v4928 = vmax.f32 %v4926, %v4927
        %v4929 = vrot.slane %v4928, 1
        %v4930 = vmax.f32 %v4928, %v4929
        %v4931 = vsel %vm4853, %v4848, -inf
        %v4932 = vrot.slane %v4931, 4
        %v4933 = vmax.f32 %v4931, %v4932
        %v4934 = vrot.slane %v4933, 2
        %v4935 = vmax.f32 %v4933, %v4934
        %v4936 = vrot.slane %v4935, 1
        %v4937 = vmax.f32 %v4935, %v4936
        %v4938 = vsel %vm4853, %v4849, -inf
        %v4939 = vrot.slane %v4938, 4
        %v4940 = vmax.f32 %v4938, %v4939
        %v4941 = vrot.slane %v4940, 2
        %v4942 = vmax.f32 %v4940, %v4941
        %v4943 = vrot.slane %v4942, 1
        %v4944 = vmax.f32 %v4942, %v4943
        %v4945 = vsel %vm4853, %v4850, -inf
        %v4946 = vrot.slane %v4945, 4
        %v4947 = vmax.f32 %v4945, %v4946
        %v4948 = vrot.slane %v4947, 2
        %v4949 = vmax.f32 %v4947, %v4948
        %v4950 = vrot.slane %v4949, 1
        %v4951 = vmax.f32 %v4949, %v4950
        %v4952 = vsel %vm4853, %v4851, -inf
        %v4953 = vrot.slane %v4952, 4
        %v4954 = vmax.f32 %v4952, %v4953
        %v4955 = vrot.slane %v4954, 2
        %v4956 = vmax.f32 %v4954, %v4955
        %v4957 = vrot.slane %v4956, 1
        %v4958 = vmax.f32 %v4956, %v4957
        %v4959 = vsel %vm4853, %v4852, -inf
        %v4960 = vrot.slane %v4959, 4
        %v4961 = vmax.f32 %v4959, %v4960
        %v4962 = vrot.slane %v4961, 2
        %v4963 = vmax.f32 %v4961, %v4962
        %v4964 = vrot.slane %v4963, 1
        %v4965 = vmax.f32 %v4963, %v4964
        %v4966 = vsub.f32 %v4837, %v4860
        %v4967 = vsub.f32 %v4838, %v4867
        %v4968 = vsub.f32 %v4839, %v4874
        %v4969 = vsub.f32 %v4840, %v4881
        %v4970 = vsub.f32 %v4841, %v4888
        %v4971 = vsub.f32 %v4842, %v4895
        %v4972 = vsub.f32 %v4843, %v4902
        %v4973 = vsub.f32 %v4844, %v4909
        %v4974 = vsub.f32 %v4845, %v4916
        %v4975 = vsub.f32 %v4846, %v4923
        %v4976 = vsub.f32 %v4847, %v4930
        %v4977 = vsub.f32 %v4848, %v4937
        %v4978 = vsub.f32 %v4849, %v4944
        %v4979 = vsub.f32 %v4850, %v4951
        %v4980 = vsub.f32 %v4851, %v4958
        %v4981 = vsub.f32 %v4852, %v4965
        %v4982 = vmul.f32 %v4966, 1.442695
        %v4983 = vpow.pop %v4982
        %v4984 = vmul.f32 %v4967, 1.442695
        %v4985 = vpow.pop %v4984
        %v4986 = vmul.f32 %v4968, 1.442695
        %v4987 = vpow.pop %v4986
        %v4988 = vmul.f32 %v4969, 1.442695
        %v4989 = vpow.pop %v4988
        %v4990 = vmul.f32 %v4970, 1.442695
        %v4991 = vpow.pop %v4990
        %v4992 = vmul.f32 %v4971, 1.442695
        %v4993 = vpow.pop %v4992
        %v4994 = vmul.f32 %v4972, 1.442695
        %v4995 = vpow.pop %v4994
        %v4996 = vmul.f32 %v4973, 1.442695
        %v4997 = vpow.pop %v4996
        %v4998 = vmul.f32 %v4974, 1.442695
        %v4999 = vpow.pop %v4998
        %v5000 = vmul.f32 %v4975, 1.442695
        %v5001 = vpow.pop %v5000
        %v5002 = vmul.f32 %v4976, 1.442695
        %v5003 = vpow.pop %v5002
        %v5004 = vmul.f32 %v4977, 1.442695
        %v5005 = vpow.pop %v5004
        %v5006 = vmul.f32 %v4978, 1.442695
        %v5007 = vpow.pop %v5006
        %v5008 = vmul.f32 %v4979, 1.442695
        %v5009 = vpow.pop %v5008
        %v5010 = vmul.f32 %v4980, 1.442695
        %v5011 = vpow.pop %v5010
        %v5012 = vmul.f32 %v4981, 1.442695
        %v5013 = vpow.pop %v5012
        %v5014 = vsel %vm4853, %v4983, 0.0
        %v5015 = vrot.slane %v5014, 4
        %v5016 = vadd.f32 %v5014, %v5015
        %v5017 = vrot.slane %v5016, 2
        %v5018 = vadd.f32 %v5016, %v5017
        %v5019 = vrot.slane %v5018, 1
        %v5020 = vadd.f32 %v5018, %v5019
        %v5021 = vsel %vm4853, %v4985, 0.0
        %v5022 = vrot.slane %v5021, 4
        %v5023 = vadd.f32 %v5021, %v5022
        %v5024 = vrot.slane %v5023, 2
        %v5025 = vadd.f32 %v5023, %v5024
        %v5026 = vrot.slane %v5025, 1
        %v5027 = vadd.f32 %v5025, %v5026
        %v5028 = vsel %vm4853, %v4987, 0.0
        %v5029 = vrot.slane %v5028, 4
        %v5030 = vadd.f32 %v5028, %v5029
        %v5031 = vrot.slane %v5030, 2
        %v5032 = vadd.f32 %v5030, %v5031
        %v5033 = vrot.slane %v5032, 1
        %v5034 = vadd.f32 %v5032, %v5033
        %v5035 = vsel %vm4853, %v4989, 0.0
        %v5036 = vrot.slane %v5035, 4
        %v5037 = vadd.f32 %v5035, %v5036
        %v5038 = vrot.slane %v5037, 2
        %v5039 = vadd.f32 %v5037, %v5038
        %v5040 = vrot.slane %v5039, 1
        %v5041 = vadd.f32 %v5039, %v5040
        %v5042 = vsel %vm4853, %v4991, 0.0
        %v5043 = vrot.slane %v5042, 4
        %v5044 = vadd.f32 %v5042, %v5043
        %v5045 = vrot.slane %v5044, 2
        %v5046 = vadd.f32 %v5044, %v5045
        %v5047 = vrot.slane %v5046, 1
        %v5048 = vadd.f32 %v5046, %v5047
        %v5049 = vsel %vm4853, %v4993, 0.0
        %v5050 = vrot.slane %v5049, 4
        %v5051 = vadd.f32 %v5049, %v5050
        %v5052 = vrot.slane %v5051, 2
        %v5053 = vadd.f32 %v5051, %v5052
        %v5054 = vrot.slane %v5053, 1
        %v5055 = vadd.f32 %v5053, %v5054
        %v5056 = vsel %vm4853, %v4995, 0.0
        %v5057 = vrot.slane %v5056, 4
        %v5058 = vadd.f32 %v5056, %v5057
        %v5059 = vrot.slane %v5058, 2
        %v5060 = vadd.f32 %v5058, %v5059
        %v5061 = vrot.slane %v5060, 1
        %v5062 = vadd.f32 %v5060, %v5061
        %v5063 = vsel %vm4853, %v4997, 0.0
        %v5064 = vrot.slane %v5063, 4
        %v5065 = vadd.f32 %v5063, %v5064
        %v5066 = vrot.slane %v5065, 2
        %v5067 = vadd.f32 %v5065, %v5066
        %v5068 = vrot.slane %v5067, 1
        %v5069 = vadd.f32 %v5067, %v5068
        %v5070 = vsel %vm4853, %v4999, 0.0
        %v5071 = vrot.slane %v5070, 4
        %v5072 = vadd.f32 %v5070, %v5071
        %v5073 = vrot.slane %v5072, 2
        %v5074 = vadd.f32 %v5072, %v5073
        %v5075 = vrot.slane %v5074, 1
        %v5076 = vadd.f32 %v5074, %v5075
        %v5077 = vsel %vm4853, %v5001, 0.0
        %v5078 = vrot.slane %v5077, 4
        %v5079 = vadd.f32 %v5077, %v5078
        %v5080 = vrot.slane %v5079, 2
        %v5081 = vadd.f32 %v5079, %v5080
        %v5082 = vrot.slane %v5081, 1
        %v5083 = vadd.f32 %v5081, %v5082
        %v5084 = vsel %vm4853, %v5003, 0.0
        %v5085 = vrot.slane %v5084, 4
        %v5086 = vadd.f32 %v5084, %v5085
        %v5087 = vrot.slane %v5086, 2
        %v5088 = vadd.f32 %v5086, %v5087
        %v5089 = vrot.slane %v5088, 1
        %v5090 = vadd.f32 %v5088, %v5089
        %v5091 = vsel %vm4853, %v5005, 0.0
        %v5092 = vrot.slane %v5091, 4
        %v5093 = vadd.f32 %v5091, %v5092
        %v5094 = vrot.slane %v5093, 2
        %v5095 = vadd.f32 %v5093, %v5094
        %v5096 = vrot.slane %v5095, 1
        %v5097 = vadd.f32 %v5095, %v5096
        %v5098 = vsel %vm4853, %v5007, 0.0
        %v5099 = vrot.slane %v5098, 4
        %v5100 = vadd.f32 %v5098, %v5099
        %v5101 = vrot.slane %v5100, 2
        %v5102 = vadd.f32 %v5100, %v5101
        %v5103 = vrot.slane %v5102, 1
        %v5104 = vadd.f32 %v5102, %v5103
        %v5105 = vsel %vm4853, %v5009, 0.0
        %v5106 = vrot.slane %v5105, 4
        %v5107 = vadd.f32 %v5105, %v5106
        %v5108 = vrot.slane %v5107, 2
        %v5109 = vadd.f32 %v5107, %v5108
        %v5110 = vrot.slane %v5109, 1
        %v5111 = vadd.f32 %v5109, %v5110
        %v5112 = vsel %vm4853, %v5011, 0.0
        %v5113 = vrot.slane %v5112, 4
        %v5114 = vadd.f32 %v5112, %v5113
        %v5115 = vrot.slane %v5114, 2
        %v5116 = vadd.f32 %v5114, %v5115
        %v5117 = vrot.slane %v5116, 1
        %v5118 = vadd.f32 %v5116, %v5117
        %v5119 = vsel %vm4853, %v5013, 0.0
        %v5120 = vrot.slane %v5119, 4
        %v5121 = vadd.f32 %v5119, %v5120
        %v5122 = vrot.slane %v5121, 2
        %v5123 = vadd.f32 %v5121, %v5122
        %v5124 = vrot.slane %v5123, 1
        %v5125 = vadd.f32 %v5123, %v5124
        %v5126 = vrcp.pop %v5020
        %v5127 = vmul.f32 %v4983, %v5126
        %v5128 = vrcp.pop %v5027
        %v5129 = vmul.f32 %v4985, %v5128
        %v5130 = vrcp.pop %v5034
        %v5131 = vmul.f32 %v4987, %v5130
        %v5132 = vrcp.pop %v5041
        %v5133 = vmul.f32 %v4989, %v5132
        %v5134 = vrcp.pop %v5048
        %v5135 = vmul.f32 %v4991, %v5134
        %v5136 = vrcp.pop %v5055
        %v5137 = vmul.f32 %v4993, %v5136
        %v5138 = vrcp.pop %v5062
        %v5139 = vmul.f32 %v4995, %v5138
        %v5140 = vrcp.pop %v5069
        %v5141 = vmul.f32 %v4997, %v5140
        %v5142 = vrcp.pop %v5076
        %v5143 = vmul.f32 %v4999, %v5142
        %v5144 = vrcp.pop %v5083
        %v5145 = vmul.f32 %v5001, %v5144
        %v5146 = vrcp.pop %v5090
        %v5147 = vmul.f32 %v5003, %v5146
        %v5148 = vrcp.pop %v5097
        %v5149 = vmul.f32 %v5005, %v5148
        %v5150 = vrcp.pop %v5104
        %v5151 = vmul.f32 %v5007, %v5150
        %v5152 = vrcp.pop %v5111
        %v5153 = vmul.f32 %v5009, %v5152
        %v5154 = vrcp.pop %v5118
        %v5155 = vmul.f32 %v5011, %v5154
        %v5156 = vrcp.pop %v5125
        %v5157 = vmul.f32 %v5013, %v5156
        %5158 = vset.pattern.permute.xlu0 16
        %5159 = vperm.xlu0 %5158, %v705
        %v5160 = vpop.permute.xlu0 %5159
        %v5162 = vmul.f32 %v5127, %v5160
        %v5163 = vmul.f32 %v5129, %v5160
        %v5164 = vmul.f32 %v5131, %v5160
        %v5165 = vmul.f32 %v5133, %v5160
        %v5166 = vmul.f32 %v5135, %v5160
        %v5167 = vmul.f32 %v5137, %v5160
        %v5168 = vmul.f32 %v5139, %v5160
        %v5169 = vmul.f32 %v5141, %v5160
        %v5170 = vmul.f32 %v5143, %v5160
        %v5171 = vmul.f32 %v5145, %v5160
        %v5172 = vmul.f32 %v5147, %v5160
        %v5173 = vmul.f32 %v5149, %v5160
        %v5174 = vmul.f32 %v5151, %v5160
        %v5175 = vmul.f32 %v5153, %v5160
        %v5176 = vmul.f32 %v5155, %v5160
        %v5177 = vmul.f32 %v5157, %v5160
        %v5194 = vcombine.low %v5162, %v5163
        %v5195 = vcombine.low %v5164, %v5165
        %v5196 = vcombine.low %v5166, %v5167
        %v5197 = vcombine.low %v5168, %v5169
        %v5198 = vcombine.low %v5170, %v5171
        %v5199 = vcombine.low %v5172, %v5173
        %v5200 = vcombine.low %v5174, %v5175
        %v5201 = vcombine.low %v5176, %v5177
        %5210 = vst [vmem:[%s166] sm:$0xff] %v5194
        %5211 = vst [vmem:[%s166 + $0x8] sm:$0xff] %v5195
        %5212 = vst [vmem:[%s166 + $0x10] sm:$0xff] %v5196
        %5213 = vst [vmem:[%s166 + $0x18] sm:$0xff] %v5197
        %5214 = vst [vmem:[%s166 + $0x20] sm:$0xff] %v5198
        %5215 = vst [vmem:[%s166 + $0x28] sm:$0xff] %v5199
        %5216 = vst [vmem:[%s166 + $0x30] sm:$0xff] %v5200
        %5217 = vst [vmem:[%s166 + $0x38] sm:$0xff] %v5201
        %s5218 = sand.u32 %s93, 1
        %s5219 = scalar_lea.sflag [#allocation3], %s5218
        %s5220 = sand.u32 %s93, 1
        %s5221 = smul.addr %s5220, 64
        %s5222 = scalar_lea.vmem [#allocation2], %s5221
        // Predicated region
        $region33: #{tpu_custom_call.1} parent=31 // pred_check
          %p5223 = pneg %p103
        $region34: #{tpu_custom_call.1} parent=31 // pred_check_branch
          %5225 = sbr.rel (%p5223) target = $region36
        $region35: #{tpu_custom_call.1} parent=31 // pred_region
          %s5226 = smul.u32 16, %s17
          %s5228 = ssub.s32 1024, 1024
          %5229 = vsyncadd %s5219, %s5228
          %s5230 = smul.addr %s5226, 64
          %s5231 = scalar_lea.hbm %s3, %s5230
          %s5233 = sshll.u32 %s5222, 4
          %s5234 = int_to_ptr.vmem [resolvable:$true] %s5233
          %5236 = dma.vmem_to_hbm [thread:$0]  %s5234, 1024, %s5231, %s5219
        $region36: #{tpu_custom_call.1} parent=31 // pred_fallthru
          _
      $region32: #{tpu_custom_call.1} parent=5 // pred_fallthru
        _
      %p5237 = scmp.le.s32.totalorder 2, %s12
      // Predicated region
      $region37: #{tpu_custom_call.1} parent=5 // pred_check
        %p5238 = pneg %p5237
      $region38: #{tpu_custom_call.1} parent=5 // pred_check_branch
        %5240 = sbr.rel (%p5238) target = $region40
      $region39: #{tpu_custom_call.1} parent=5 // pred_region
        %s5241 = ssub.s32 %s12, 2
        // Predicated region
        $region41: #{tpu_custom_call.1} parent=39 // pred_check
          %p5242 = pneg %p109
        $region42: #{tpu_custom_call.1} parent=39 // pred_check_branch
          %5244 = sbr.rel (%p5242) target = $region44
        $region43: #{tpu_custom_call.1} parent=39 // pred_region
          %s5245 = sand.u32 %s94, 1
          %s5246 = scalar_lea.sflag [#allocation3], %s5245
          %s5247 = sand.u32 %s94, 1
          %s5248 = smul.addr %s5247, 64
          %s5249 = scalar_lea.vmem [#allocation2], %s5248
          %5250 = dma.done %s5246, 1024
        $region44: #{tpu_custom_call.1} parent=39 // pred_fallthru
          _
      $region40: #{tpu_custom_call.1} parent=5 // pred_fallthru
        _
    $region6: #{tpu_custom_call.1} parent=1 // loop_footer
      %s16 = sadd.s32 1, %s12
    $region7: #{tpu_custom_call.1} parent=1 // loop_footer_branch
      %11 = sbr.rel target = $region3
    $region8: #{tpu_custom_call.1} parent=1 // loop_exit
      _
    %5251 = vsyncpa [#allocation3], 1
    %s5252 = scalar_lea.sflag [#allocation3], 1
    %5253 = vsyncpa %s5252, 1

</llo_original>
